<compile_context>
chip_gen: v7x
topology: tpu7x:2x2x1
jax: 0.10.0
libtpu: 0.0.40
codegen_flags: <defaults>
</compile_context>

<pallas_src>
import jax
import jax.numpy as jnp
from jax import lax
from jax.experimental import pallas as pl
from jax.experimental.pallas import tpu as pltpu

EPS = 1e-5
KT = 9                     # temporal kernel size
PAD = (KT - 1) // 2        # temporal padding = 4


# --------------------------------------------------------------------------- #
# Pallas kernel: full Model2 forward for one block of Nb samples               #
# --------------------------------------------------------------------------- #
def _stgcn_kernel(x_ref, xs_ref, w1_ref, bd_ref, h1_ref, scat_ref, wt_ref,
                  h2_ref, wr_ref, hr_ref, pmt_ref, wft_ref, bf_ref, out_ref):
    f32 = jnp.float32
    bf16 = jnp.bfloat16
    K = bd_ref.shape[0]
    Cp = wt_ref.shape[1]                    # padded channel count (multiple of 8)
    L = xs_ref.shape[2]                     # Nb * Tp * V (tcn output lanes)

    X = x_ref[0]                            # (Cp, Nb*T*V) bf16, lane-dense

    # ---- gcn: stacked 1x1 conv, one wide matmul (BN1 scale folded into w1) ----
    Y = jnp.dot(w1_ref[...], X, preferred_element_type=f32)       # (K*Cp, Nb*T*V)
    Yb = Y.astype(bf16)

    # ---- graph aggregation: right-multiply by kron(I_{Nb*T}, A_k), sum over k.
    #      k-block slices start at multiples of Cp (8-aligned sublanes).
    Zagg = jnp.dot(Yb[0:Cp, :], bd_ref[0], preferred_element_type=f32)
    for k in range(1, K):
        Zagg = Zagg + jnp.dot(Yb[k * Cp:(k + 1) * Cp, :], bd_ref[k],
                              preferred_element_type=f32)
    # conv bias (propagated through A) + BN1 shift are pre-folded into h1_ref.
    Z = jnp.maximum(Zagg + h1_ref[...], 0.0)                      # (Cp, Nb*T*V) f32
    Zb = Z.astype(bf16)

    # ---- tcn: 9-tap stride-2 conv = 1 selection matmul (im2col) + 9 tap matmuls ----
    Zw = jnp.dot(Zb, scat_ref[...], preferred_element_type=f32)   # (Cp, KT*L)
    Zwb = Zw.astype(bf16)
    acc = jnp.dot(wt_ref[0], Zwb[:, 0:L], preferred_element_type=f32)
    for dt in range(1, KT):
        acc = acc + jnp.dot(wt_ref[dt], Zwb[:, dt * L:(dt + 1) * L],
                            preferred_element_type=f32)
    acc = acc + h2_ref[...]                 # conv bias + BN2 (folded), f32 epilogue
    # TODO(synk): Dropout omitted (p=0 default / inference => identity).

    # ---- residual: 1x1 stride-2 conv + BN (scale/shift folded into wr/hr) ----
    res = jnp.dot(wr_ref[...], xs_ref[0], preferred_element_type=f32) + hr_ref[...]

    out_act = jnp.maximum(acc + res, 0.0)   # st_gcn output ReLU, (Cp, L) f32

    # ---- global avg-pool over (T',V) per sample (small matmul), then fcn 1x1 ----
    pooledT = lax.dot_general(pmt_ref[...], out_act,
                              (((1,), (1,)), ((), ())),
                              preferred_element_type=f32)         # (Nb, Cp)
    logits = jnp.dot(pooledT, wft_ref[...], preferred_element_type=f32) + bf_ref[...]
    out_ref[0] = logits                     # (Nb, NCp) lane-dense, unmasked store


# --------------------------------------------------------------------------- #
# Wrapper: BN folding, operator precomputation, layout plumbing, pallas_call   #
# --------------------------------------------------------------------------- #
def _fold_bn(g, be, m, v):
    s = g / jnp.sqrt(v + EPS)
    return s, be - m * s


def _tap_selection(Nb, T, V, Tp):
    """(Nb*T*V, KT*Nb*Tp*V) 0/1 matrix. Column (dt, nb, tp, v) selects input
    frame t = 2*tp + dt - PAD of sample nb (all-zero column => zero padding)."""
    f32 = jnp.float32
    eye_v = jnp.eye(V, dtype=f32)
    eye_n = jnp.eye(Nb, dtype=f32)
    t_ar = jnp.arange(T)[:, None]
    tp_ar = jnp.arange(Tp)[None, :]
    blocks = []
    for dt in range(KT):
        ts = (t_ar == (2 * tp_ar + dt - PAD)).astype(f32)          # (T, Tp)
        blocks.append(jnp.kron(eye_n, jnp.kron(ts, eye_v)))
    return jnp.concatenate(blocks, axis=1)


def model2_forward_pallas(x_ntvc, p, Nb=2):
    """x_ntvc: (N, T, V, C) raw Model2 input; returns (N, num_class) logits."""
    f32, bf16 = jnp.float32, jnp.bfloat16
    N, T, V, C = x_ntvc.shape
    A = p["A"].astype(f32)
    K = A.shape[0]
    Tp = (T - 1) // 2 + 1
    num_class = p["wf"].shape[0]
    Cp = ((C + 7) // 8) * 8                                        # padded channels
    NCp = ((num_class + 127) // 128) * 128                         # lane-dense logits
    # Nb samples share one grid step (256 lanes when T*V=128).
    Nb = max(1, min(Nb, N))
    G = (N + Nb - 1) // Nb
    N_pad = G * Nb
    L_in = Nb * T * V
    L_out = Nb * Tp * V

    # ---- fold all inference-mode BatchNorms (at original C), then zero-pad ----
    s1, h1 = _fold_bn(p["g1"], p["be1"], p["m1"], p["v1"])
    s2, h2 = _fold_bn(p["g2"], p["be2"], p["m2"], p["v2"])
    sr, hr = _fold_bn(p["gr"], p["ber"], p["mr"], p["vr"])

    w1 = p["w1"].reshape(K, C, C) * s1[None, :, None]              # BN1 scale folded
    W1 = jnp.zeros((K, Cp, Cp), f32).at[:, :C, :C].set(w1).reshape(K * Cp, Cp)
    b1 = p["b1"].reshape(K, C)
    colsum = A.sum(axis=1)                                         # (K, V): sum_v A[k,v,w]
    h1_cv = s1[:, None] * jnp.einsum("kc,kv->cv", b1, colsum) + h1[:, None]
    H1 = jnp.zeros((Cp, V), f32).at[:C, :].set(h1_cv)
    H1 = jnp.tile(H1, (1, Nb * T))                                 # (Cp, Nb*T*V)

    BD = jnp.stack([jnp.kron(jnp.eye(Nb * T, dtype=f32), A[k]) for k in range(K)])
    Scat = _tap_selection(Nb, T, V, Tp)                            # (Nb*T*V, KT*L_out)

    wt = jnp.transpose(p["wt"], (2, 0, 1)) * s2[None, :, None]     # (KT, C, C)
    WT = jnp.zeros((KT, Cp, Cp), f32).at[:, :C, :C].set(wt)
    H2 = jnp.zeros((Cp, 1), f32).at[:C, 0].set(p["bt"] * s2 + h2)
    WR = jnp.zeros((Cp, Cp), f32).at[:C, :C].set(sr[:, None] * p["wr"])
    HR = jnp.zeros((Cp, 1), f32).at[:C, 0].set(p["br"] * sr + hr)

    PMT = jnp.kron(jnp.eye(Nb, dtype=f32),
                   jnp.full((1, Tp * V), 1.0 / (Tp * V), f32))     # (Nb, L_out)
    WFT = jnp.zeros((Cp, NCp), f32).at[:C, :num_class].set(p["wf"].T)
    BF = jnp.zeros((1, NCp), f32).at[0, :num_class].set(p["bf"])

    # ---- input layout plumbing: (N,T,V,C) -> (G, Cp, Nb*T*V), zero-padded ----
    x = jnp.transpose(x_ntvc, (0, 3, 1, 2)).astype(f32).reshape(N, C, T * V)
    x = jnp.pad(x, ((0, N_pad - N), (0, Cp - C), (0, 0)))
    xg = jnp.transpose(x.reshape(G, Nb, Cp, T * V), (0, 2, 1, 3)).reshape(G, Cp, L_in)
    xs = x.reshape(N_pad, Cp, T, V)[:, :, ::2, :].reshape(N_pad, Cp, Tp * V)
    xsg = jnp.transpose(xs.reshape(G, Nb, Cp, Tp * V), (0, 2, 1, 3)).reshape(G, Cp, L_out)

    args = [xg.astype(bf16), xsg.astype(bf16), W1.astype(bf16), BD.astype(bf16),
            H1, Scat.astype(bf16), WT.astype(bf16), H2, WR.astype(bf16), HR,
            PMT, WFT, BF]

    def rep(a):                    # full-array block, resident across grid steps
        nd = a.ndim
        return pl.BlockSpec(a.shape, lambda i, nd=nd: (0,) * nd)

    in_specs = [pl.BlockSpec((1, Cp, L_in), lambda i: (i, 0, 0)),
                pl.BlockSpec((1, Cp, L_out), lambda i: (i, 0, 0))]
    in_specs += [rep(a) for a in args[2:]]

    out = pl.pallas_call(
        _stgcn_kernel,
        out_shape=jax.ShapeDtypeStruct((G, Nb, NCp), f32),
        grid=(G,),
        in_specs=in_specs,
        out_specs=pl.BlockSpec((1, Nb, NCp), lambda i: (i, 0, 0)),
        compiler_params=pltpu.CompilerParams(dimension_semantics=("parallel",)),
    )(*args)
    return out.reshape(N_pad, NCp)[:N, :num_class]


# --------------------------------------------------------------------------- #
# Deterministic parameter construction                                         #
# --------------------------------------------------------------------------- #
def make_params(key, C=60, K=3, V=16, num_class=10):
    ks = jax.random.split(key, 24)
    nrm = lambda i, shape, s=0.05: jax.random.normal(ks[i], shape, jnp.float32) * s
    p = {}
    p["A"]  = jax.random.uniform(ks[0], (K, V, V), jnp.float32) / V   # edge_importance == ones
    p["w1"] = nrm(1, (K * C, C)); p["b1"] = nrm(2, (K * C,))
    p["g1"] = 1.0 + nrm(3, (C,), 0.1); p["be1"] = nrm(4, (C,), 0.1)
    p["m1"] = nrm(5, (C,), 0.1); p["v1"] = jax.random.uniform(ks[6], (C,), jnp.float32, 0.5, 1.5)
    p["wt"] = nrm(7, (C, C, KT)); p["bt"] = nrm(8, (C,))
    p["g2"] = 1.0 + nrm(9, (C,), 0.1); p["be2"] = nrm(10, (C,), 0.1)
    p["m2"] = nrm(11, (C,), 0.1); p["v2"] = jax.random.uniform(ks[12], (C,), jnp.float32, 0.5, 1.5)
    p["wr"] = nrm(13, (C, C)); p["br"] = nrm(14, (C,))
    p["gr"] = 1.0 + nrm(15, (C,), 0.1); p["ber"] = nrm(16, (C,), 0.1)
    p["mr"] = nrm(17, (C,), 0.1); p["vr"] = jax.random.uniform(ks[18], (C,), jnp.float32, 0.5, 1.5)
    p["wf"] = nrm(19, (num_class, C)); p["bf"] = nrm(20, (num_class,))
    return p


# --------------------------------------------------------------------------- #
# Pure-JAX reference (mirrors the PyTorch graph) for validation                 #
# --------------------------------------------------------------------------- #
def model2_forward_ref(x_ntvc, p):
    x = jnp.transpose(x_ntvc, (0, 3, 1, 2)).astype(jnp.float32)       # (N, C, T, V); M = 1
    N, C, T, V = x.shape
    A = p["A"]; K = A.shape[0]
    Tp = (T - 1) // 2 + 1
    hp = jax.lax.Precision.HIGHEST

    def bn(u, g, be, m, v):
        return (u - m[None, :, None, None]) / jnp.sqrt(v + EPS)[None, :, None, None] \
               * g[None, :, None, None] + be[None, :, None, None]

    # residual branch
    xs = x[:, :, ::2, :]
    res = jnp.einsum("oc,nctv->notv", p["wr"], xs, precision=hp) + p["br"][None, :, None, None]
    res = bn(res, p["gr"], p["ber"], p["mr"], p["vr"])
    # gcn
    y = jnp.einsum("oc,nctv->notv", p["w1"], x, precision=hp) + p["b1"][None, :, None, None]
    y = y.reshape(N, K, C, T, V)
    z = jnp.einsum("nkctv,kvw->nctw", y, A, precision=hp)
    # tcn
    z = jax.nn.relu(bn(z, p["g1"], p["be1"], p["m1"], p["v1"]))
    zp = jnp.pad(z, ((0, 0), (0, 0), (PAD, PAD), (0, 0)))
    tout = jnp.zeros((N, C, Tp, V), jnp.float32)
    for dt in range(KT):
        tout = tout + jnp.einsum("oc,nctv->notv", p["wt"][:, :, dt],
                                 zp[:, :, dt:dt + 2 * Tp:2, :], precision=hp)
    tout = bn(tout + p["bt"][None, :, None, None], p["g2"], p["be2"], p["m2"], p["v2"])
    out = jax.nn.relu(tout + res)
    pooled = out.mean(axis=(2, 3))                                    # avg_pool2d + mean(M=1)
    return pooled @ p["wf"].T + p["bf"]                               # fcn 1x1 conv


# --------------------------------------------------------------------------- #
if __name__ == "__main__":
    N, T, V, C, K, num_class = 2, 8, 16, 60, 3, 10                    # C=60 fixed by the module
    key = jax.random.PRNGKey(0)
    kx, kparam = jax.random.split(key)
    params = make_params(kparam, C=C, K=K, V=V, num_class=num_class)
    x = jax.random.normal(kx, (N, T, V, C), jnp.float32)              # Model2 input (N, T, V, C)

    out = model2_forward_pallas(x, params, Nb=2)
    out = jax.block_until_ready(out)

    ref = model2_forward_ref(x, params)
    assert out.shape == (N, num_class)
    if not jnp.allclose(out, ref, rtol=2e-2, atol=2e-2):
        raise AssertionError(
            f"mismatch vs reference, max abs err = {float(jnp.max(jnp.abs(out - ref)))}")
    print("KERNEL_OK")
</pallas_src>

<mosaic_0001>
module attributes {stable_mosaic.version = 11 : i64} {
  func.func @_stgcn_kernel(%arg0: i32, %arg1: memref<1x64x256xbf16, #tpu.memory_space<vmem>>, %arg2: memref<1x64x128xbf16, #tpu.memory_space<vmem>>, %arg3: memref<192x64xbf16, #tpu.memory_space<vmem>>, %arg4: memref<3x256x256xbf16, #tpu.memory_space<vmem>>, %arg5: memref<64x256xf32, #tpu.memory_space<vmem>>, %arg6: memref<256x1152xbf16, #tpu.memory_space<vmem>>, %arg7: memref<9x64x64xbf16, #tpu.memory_space<vmem>>, %arg8: memref<64x1xf32, #tpu.memory_space<vmem>>, %arg9: memref<64x64xbf16, #tpu.memory_space<vmem>>, %arg10: memref<64x1xf32, #tpu.memory_space<vmem>>, %arg11: memref<2x128xf32, #tpu.memory_space<vmem>>, %arg12: memref<64x128xf32, #tpu.memory_space<vmem>>, %arg13: memref<1x128xf32, #tpu.memory_space<vmem>>, %arg14: memref<1x2x128xf32, #tpu.memory_space<vmem>>) attributes {dimension_semantics = [#tpu.dimension_semantics<parallel>], iteration_bounds = array<i64: 1>, scalar_prefetch = 0 : i64, scratch_operands = 0 : i64, tpu.core_type = #tpu.core_type<tc>, window_params = [{transform_indices = @transform_0, window_bounds = array<i64: 1, 64, 256>}, {transform_indices = @transform_1, window_bounds = array<i64: 1, 64, 128>}, {pipeline_mode = #tpu.pipeline_mode<synchronous>, transform_indices = @transform_2, window_bounds = array<i64: 192, 64>}, {pipeline_mode = #tpu.pipeline_mode<synchronous>, transform_indices = @transform_3, window_bounds = array<i64: 3, 256, 256>}, {pipeline_mode = #tpu.pipeline_mode<synchronous>, transform_indices = @transform_4, window_bounds = array<i64: 64, 256>}, {pipeline_mode = #tpu.pipeline_mode<synchronous>, transform_indices = @transform_5, window_bounds = array<i64: 256, 1152>}, {pipeline_mode = #tpu.pipeline_mode<synchronous>, transform_indices = @transform_6, window_bounds = array<i64: 9, 64, 64>}, {pipeline_mode = #tpu.pipeline_mode<synchronous>, transform_indices = @transform_7, window_bounds = array<i64: 64, 1>}, {pipeline_mode = #tpu.pipeline_mode<synchronous>, transform_indices = @transform_8, window_bounds = array<i64: 64, 64>}, {pipeline_mode = #tpu.pipeline_mode<synchronous>, transform_indices = @transform_9, window_bounds = array<i64: 64, 1>}, {pipeline_mode = #tpu.pipeline_mode<synchronous>, transform_indices = @transform_10, window_bounds = array<i64: 2, 128>}, {pipeline_mode = #tpu.pipeline_mode<synchronous>, transform_indices = @transform_11, window_bounds = array<i64: 64, 128>}, {pipeline_mode = #tpu.pipeline_mode<synchronous>, transform_indices = @transform_12, window_bounds = array<i64: 1, 128>}, {transform_indices = @transform_13, window_bounds = array<i64: 1, 2, 128>}]} {
    %c0 = arith.constant 0 : index
    %c0_0 = arith.constant 0 : index
    %c0_1 = arith.constant 0 : index
    %0 = vector.load %arg1[%c0, %c0_0, %c0_1] : memref<1x64x256xbf16, #tpu.memory_space<vmem>>, vector<1x64x256xbf16>
    %1 = vector.shape_cast %0 : vector<1x64x256xbf16> to vector<64x256xbf16>
    %c0_2 = arith.constant 0 : index
    %c0_3 = arith.constant 0 : index
    %2 = vector.load %arg3[%c0_2, %c0_3] : memref<192x64xbf16, #tpu.memory_space<vmem>>, vector<192x64xbf16>
    %cst = arith.constant dense<0.000000e+00> : vector<192x256xf32>
    %3 = tpu.matmul %2, %1, %cst {dimension_numbers = #tpu.dot_dimension_numbers<[1], [0], [0], [1], [0, 0, 1, 1], [], []>} : vector<192x64xbf16>, vector<64x256xbf16>, vector<192x256xf32> -> vector<192x256xf32>
    %4 = arith.truncf %3 : vector<192x256xf32> to vector<192x256xbf16>
    %5 = vector.extract_strided_slice %4 {offsets = [0, 0], sizes = [64, 256], strides = [1, 1]} : vector<192x256xbf16> to vector<64x256xbf16>
    %c0_4 = arith.constant 0 : index
    %c0_5 = arith.constant 0 : index
    %c0_6 = arith.constant 0 : index
    %6 = vector.load %arg4[%c0_4, %c0_5, %c0_6] : memref<3x256x256xbf16, #tpu.memory_space<vmem>>, vector<1x256x256xbf16>
    %7 = vector.shape_cast %6 : vector<1x256x256xbf16> to vector<256x256xbf16>
    %cst_7 = arith.constant dense<0.000000e+00> : vector<64x256xf32>
    %8 = tpu.matmul %5, %7, %cst_7 {dimension_numbers = #tpu.dot_dimension_numbers<[1], [0], [0], [1], [0, 0, 1, 1], [], []>} : vector<64x256xbf16>, vector<256x256xbf16>, vector<64x256xf32> -> vector<64x256xf32>
    %9 = vector.extract_strided_slice %4 {offsets = [64, 0], sizes = [64, 256], strides = [1, 1]} : vector<192x256xbf16> to vector<64x256xbf16>
    %c1 = arith.constant 1 : index
    %c0_8 = arith.constant 0 : index
    %c0_9 = arith.constant 0 : index
    %10 = vector.load %arg4[%c1, %c0_8, %c0_9] : memref<3x256x256xbf16, #tpu.memory_space<vmem>>, vector<1x256x256xbf16>
    %11 = vector.shape_cast %10 : vector<1x256x256xbf16> to vector<256x256xbf16>
    %cst_10 = arith.constant dense<0.000000e+00> : vector<64x256xf32>
    %12 = tpu.matmul %9, %11, %cst_10 {dimension_numbers = #tpu.dot_dimension_numbers<[1], [0], [0], [1], [0, 0, 1, 1], [], []>} : vector<64x256xbf16>, vector<256x256xbf16>, vector<64x256xf32> -> vector<64x256xf32>
    %13 = arith.addf %8, %12 : vector<64x256xf32>
    %14 = vector.extract_strided_slice %4 {offsets = [128, 0], sizes = [64, 256], strides = [1, 1]} : vector<192x256xbf16> to vector<64x256xbf16>
    %c2 = arith.constant 2 : index
    %c0_11 = arith.constant 0 : index
    %c0_12 = arith.constant 0 : index
    %15 = vector.load %arg4[%c2, %c0_11, %c0_12] : memref<3x256x256xbf16, #tpu.memory_space<vmem>>, vector<1x256x256xbf16>
    %16 = vector.shape_cast %15 : vector<1x256x256xbf16> to vector<256x256xbf16>
    %cst_13 = arith.constant dense<0.000000e+00> : vector<64x256xf32>
    %17 = tpu.matmul %14, %16, %cst_13 {dimension_numbers = #tpu.dot_dimension_numbers<[1], [0], [0], [1], [0, 0, 1, 1], [], []>} : vector<64x256xbf16>, vector<256x256xbf16>, vector<64x256xf32> -> vector<64x256xf32>
    %18 = arith.addf %13, %17 : vector<64x256xf32>
    %c0_14 = arith.constant 0 : index
    %c0_15 = arith.constant 0 : index
    %19 = vector.load %arg5[%c0_14, %c0_15] : memref<64x256xf32, #tpu.memory_space<vmem>>, vector<64x256xf32>
    %20 = arith.addf %18, %19 : vector<64x256xf32>
    %cst_16 = arith.constant 0.000000e+00 : f32
    %21 = vector.broadcast %cst_16 : f32 to vector<64x256xf32>
    %22 = arith.maximumf %20, %21 : vector<64x256xf32>
    %23 = arith.truncf %22 : vector<64x256xf32> to vector<64x256xbf16>
    %c0_17 = arith.constant 0 : index
    %c0_18 = arith.constant 0 : index
    %24 = vector.load %arg6[%c0_17, %c0_18] : memref<256x1152xbf16, #tpu.memory_space<vmem>>, vector<256x1152xbf16>
    %cst_19 = arith.constant dense<0.000000e+00> : vector<64x1152xf32>
    %25 = tpu.matmul %23, %24, %cst_19 {dimension_numbers = #tpu.dot_dimension_numbers<[1], [0], [0], [1], [0, 0, 1, 1], [], []>} : vector<64x256xbf16>, vector<256x1152xbf16>, vector<64x1152xf32> -> vector<64x1152xf32>
    %26 = arith.truncf %25 : vector<64x1152xf32> to vector<64x1152xbf16>
    %c0_20 = arith.constant 0 : index
    %c0_21 = arith.constant 0 : index
    %c0_22 = arith.constant 0 : index
    %27 = vector.load %arg7[%c0_20, %c0_21, %c0_22] : memref<9x64x64xbf16, #tpu.memory_space<vmem>>, vector<1x64x64xbf16>
    %28 = vector.shape_cast %27 : vector<1x64x64xbf16> to vector<64x64xbf16>
    %29 = vector.extract_strided_slice %26 {offsets = [0, 0], sizes = [64, 128], strides = [1, 1]} : vector<64x1152xbf16> to vector<64x128xbf16>
    %cst_23 = arith.constant dense<0.000000e+00> : vector<64x128xf32>
    %30 = tpu.matmul %28, %29, %cst_23 {dimension_numbers = #tpu.dot_dimension_numbers<[1], [0], [0], [1], [0, 0, 1, 1], [], []>} : vector<64x64xbf16>, vector<64x128xbf16>, vector<64x128xf32> -> vector<64x128xf32>
    %c1_24 = arith.constant 1 : index
    %c0_25 = arith.constant 0 : index
    %c0_26 = arith.constant 0 : index
    %31 = vector.load %arg7[%c1_24, %c0_25, %c0_26] : memref<9x64x64xbf16, #tpu.memory_space<vmem>>, vector<1x64x64xbf16>
    %32 = vector.shape_cast %31 : vector<1x64x64xbf16> to vector<64x64xbf16>
    %33 = vector.extract_strided_slice %26 {offsets = [0, 128], sizes = [64, 128], strides = [1, 1]} : vector<64x1152xbf16> to vector<64x128xbf16>
    %cst_27 = arith.constant dense<0.000000e+00> : vector<64x128xf32>
    %34 = tpu.matmul %32, %33, %cst_27 {dimension_numbers = #tpu.dot_dimension_numbers<[1], [0], [0], [1], [0, 0, 1, 1], [], []>} : vector<64x64xbf16>, vector<64x128xbf16>, vector<64x128xf32> -> vector<64x128xf32>
    %35 = arith.addf %30, %34 : vector<64x128xf32>
    %c2_28 = arith.constant 2 : index
    %c0_29 = arith.constant 0 : index
    %c0_30 = arith.constant 0 : index
    %36 = vector.load %arg7[%c2_28, %c0_29, %c0_30] : memref<9x64x64xbf16, #tpu.memory_space<vmem>>, vector<1x64x64xbf16>
    %37 = vector.shape_cast %36 : vector<1x64x64xbf16> to vector<64x64xbf16>
    %38 = vector.extract_strided_slice %26 {offsets = [0, 256], sizes = [64, 128], strides = [1, 1]} : vector<64x1152xbf16> to vector<64x128xbf16>
    %cst_31 = arith.constant dense<0.000000e+00> : vector<64x128xf32>
    %39 = tpu.matmul %37, %38, %cst_31 {dimension_numbers = #tpu.dot_dimension_numbers<[1], [0], [0], [1], [0, 0, 1, 1], [], []>} : vector<64x64xbf16>, vector<64x128xbf16>, vector<64x128xf32> -> vector<64x128xf32>
    %40 = arith.addf %35, %39 : vector<64x128xf32>
    %c3 = arith.constant 3 : index
    %c0_32 = arith.constant 0 : index
    %c0_33 = arith.constant 0 : index
    %41 = vector.load %arg7[%c3, %c0_32, %c0_33] : memref<9x64x64xbf16, #tpu.memory_space<vmem>>, vector<1x64x64xbf16>
    %42 = vector.shape_cast %41 : vector<1x64x64xbf16> to vector<64x64xbf16>
    %43 = vector.extract_strided_slice %26 {offsets = [0, 384], sizes = [64, 128], strides = [1, 1]} : vector<64x1152xbf16> to vector<64x128xbf16>
    %cst_34 = arith.constant dense<0.000000e+00> : vector<64x128xf32>
    %44 = tpu.matmul %42, %43, %cst_34 {dimension_numbers = #tpu.dot_dimension_numbers<[1], [0], [0], [1], [0, 0, 1, 1], [], []>} : vector<64x64xbf16>, vector<64x128xbf16>, vector<64x128xf32> -> vector<64x128xf32>
    %45 = arith.addf %40, %44 : vector<64x128xf32>
    %c4 = arith.constant 4 : index
    %c0_35 = arith.constant 0 : index
    %c0_36 = arith.constant 0 : index
    %46 = vector.load %arg7[%c4, %c0_35, %c0_36] : memref<9x64x64xbf16, #tpu.memory_space<vmem>>, vector<1x64x64xbf16>
    %47 = vector.shape_cast %46 : vector<1x64x64xbf16> to vector<64x64xbf16>
    %48 = vector.extract_strided_slice %26 {offsets = [0, 512], sizes = [64, 128], strides = [1, 1]} : vector<64x1152xbf16> to vector<64x128xbf16>
    %cst_37 = arith.constant dense<0.000000e+00> : vector<64x128xf32>
    %49 = tpu.matmul %47, %48, %cst_37 {dimension_numbers = #tpu.dot_dimension_numbers<[1], [0], [0], [1], [0, 0, 1, 1], [], []>} : vector<64x64xbf16>, vector<64x128xbf16>, vector<64x128xf32> -> vector<64x128xf32>
    %50 = arith.addf %45, %49 : vector<64x128xf32>
    %c5 = arith.constant 5 : index
    %c0_38 = arith.constant 0 : index
    %c0_39 = arith.constant 0 : index
    %51 = vector.load %arg7[%c5, %c0_38, %c0_39] : memref<9x64x64xbf16, #tpu.memory_space<vmem>>, vector<1x64x64xbf16>
    %52 = vector.shape_cast %51 : vector<1x64x64xbf16> to vector<64x64xbf16>
    %53 = vector.extract_strided_slice %26 {offsets = [0, 640], sizes = [64, 128], strides = [1, 1]} : vector<64x1152xbf16> to vector<64x128xbf16>
    %cst_40 = arith.constant dense<0.000000e+00> : vector<64x128xf32>
    %54 = tpu.matmul %52, %53, %cst_40 {dimension_numbers = #tpu.dot_dimension_numbers<[1], [0], [0], [1], [0, 0, 1, 1], [], []>} : vector<64x64xbf16>, vector<64x128xbf16>, vector<64x128xf32> -> vector<64x128xf32>
    %55 = arith.addf %50, %54 : vector<64x128xf32>
    %c6 = arith.constant 6 : index
    %c0_41 = arith.constant 0 : index
    %c0_42 = arith.constant 0 : index
    %56 = vector.load %arg7[%c6, %c0_41, %c0_42] : memref<9x64x64xbf16, #tpu.memory_space<vmem>>, vector<1x64x64xbf16>
    %57 = vector.shape_cast %56 : vector<1x64x64xbf16> to vector<64x64xbf16>
    %58 = vector.extract_strided_slice %26 {offsets = [0, 768], sizes = [64, 128], strides = [1, 1]} : vector<64x1152xbf16> to vector<64x128xbf16>
    %cst_43 = arith.constant dense<0.000000e+00> : vector<64x128xf32>
    %59 = tpu.matmul %57, %58, %cst_43 {dimension_numbers = #tpu.dot_dimension_numbers<[1], [0], [0], [1], [0, 0, 1, 1], [], []>} : vector<64x64xbf16>, vector<64x128xbf16>, vector<64x128xf32> -> vector<64x128xf32>
    %60 = arith.addf %55, %59 : vector<64x128xf32>
    %c7 = arith.constant 7 : index
    %c0_44 = arith.constant 0 : index
    %c0_45 = arith.constant 0 : index
    %61 = vector.load %arg7[%c7, %c0_44, %c0_45] : memref<9x64x64xbf16, #tpu.memory_space<vmem>>, vector<1x64x64xbf16>
    %62 = vector.shape_cast %61 : vector<1x64x64xbf16> to vector<64x64xbf16>
    %63 = vector.extract_strided_slice %26 {offsets = [0, 896], sizes = [64, 128], strides = [1, 1]} : vector<64x1152xbf16> to vector<64x128xbf16>
    %cst_46 = arith.constant dense<0.000000e+00> : vector<64x128xf32>
    %64 = tpu.matmul %62, %63, %cst_46 {dimension_numbers = #tpu.dot_dimension_numbers<[1], [0], [0], [1], [0, 0, 1, 1], [], []>} : vector<64x64xbf16>, vector<64x128xbf16>, vector<64x128xf32> -> vector<64x128xf32>
    %65 = arith.addf %60, %64 : vector<64x128xf32>
    %c8 = arith.constant 8 : index
    %c0_47 = arith.constant 0 : index
    %c0_48 = arith.constant 0 : index
    %66 = vector.load %arg7[%c8, %c0_47, %c0_48] : memref<9x64x64xbf16, #tpu.memory_space<vmem>>, vector<1x64x64xbf16>
    %67 = vector.shape_cast %66 : vector<1x64x64xbf16> to vector<64x64xbf16>
    %68 = vector.extract_strided_slice %26 {offsets = [0, 1024], sizes = [64, 128], strides = [1, 1]} : vector<64x1152xbf16> to vector<64x128xbf16>
    %cst_49 = arith.constant dense<0.000000e+00> : vector<64x128xf32>
    %69 = tpu.matmul %67, %68, %cst_49 {dimension_numbers = #tpu.dot_dimension_numbers<[1], [0], [0], [1], [0, 0, 1, 1], [], []>} : vector<64x64xbf16>, vector<64x128xbf16>, vector<64x128xf32> -> vector<64x128xf32>
    %70 = arith.addf %65, %69 : vector<64x128xf32>
    %c0_50 = arith.constant 0 : index
    %c0_51 = arith.constant 0 : index
    %71 = vector.load %arg8[%c0_50, %c0_51] : memref<64x1xf32, #tpu.memory_space<vmem>>, vector<64x1xf32>
    %72 = vector.broadcast %71 : vector<64x1xf32> to vector<64x128xf32>
    %73 = arith.addf %70, %72 : vector<64x128xf32>
    %c0_52 = arith.constant 0 : index
    %c0_53 = arith.constant 0 : index
    %74 = vector.load %arg9[%c0_52, %c0_53] : memref<64x64xbf16, #tpu.memory_space<vmem>>, vector<64x64xbf16>
    %c0_54 = arith.constant 0 : index
    %c0_55 = arith.constant 0 : index
    %c0_56 = arith.constant 0 : index
    %75 = vector.load %arg2[%c0_54, %c0_55, %c0_56] : memref<1x64x128xbf16, #tpu.memory_space<vmem>>, vector<1x64x128xbf16>
    %76 = vector.shape_cast %75 : vector<1x64x128xbf16> to vector<64x128xbf16>
    %cst_57 = arith.constant dense<0.000000e+00> : vector<64x128xf32>
    %77 = tpu.matmul %74, %76, %cst_57 {dimension_numbers = #tpu.dot_dimension_numbers<[1], [0], [0], [1], [0, 0, 1, 1], [], []>} : vector<64x64xbf16>, vector<64x128xbf16>, vector<64x128xf32> -> vector<64x128xf32>
    %c0_58 = arith.constant 0 : index
    %c0_59 = arith.constant 0 : index
    %78 = vector.load %arg10[%c0_58, %c0_59] : memref<64x1xf32, #tpu.memory_space<vmem>>, vector<64x1xf32>
    %79 = vector.broadcast %78 : vector<64x1xf32> to vector<64x128xf32>
    %80 = arith.addf %77, %79 : vector<64x128xf32>
    %81 = arith.addf %73, %80 : vector<64x128xf32>
    %cst_60 = arith.constant 0.000000e+00 : f32
    %82 = vector.broadcast %cst_60 : f32 to vector<64x128xf32>
    %83 = arith.maximumf %81, %82 : vector<64x128xf32>
    %c0_61 = arith.constant 0 : index
    %c0_62 = arith.constant 0 : index
    %84 = vector.load %arg11[%c0_61, %c0_62] : memref<2x128xf32, #tpu.memory_space<vmem>>, vector<2x128xf32>
    %cst_63 = arith.constant dense<0.000000e+00> : vector<2x64xf32>
    %85 = tpu.matmul %84, %83, %cst_63 {dimension_numbers = #tpu.dot_dimension_numbers<[1], [1], [0], [0], [0, 0, 1, 0], [], []>} : vector<2x128xf32>, vector<64x128xf32>, vector<2x64xf32> -> vector<2x64xf32>
    %c0_64 = arith.constant 0 : index
    %c0_65 = arith.constant 0 : index
    %86 = vector.load %arg12[%c0_64, %c0_65] : memref<64x128xf32, #tpu.memory_space<vmem>>, vector<64x128xf32>
    %cst_66 = arith.constant dense<0.000000e+00> : vector<2x128xf32>
    %87 = tpu.matmul %85, %86, %cst_66 {dimension_numbers = #tpu.dot_dimension_numbers<[1], [0], [0], [1], [0, 0, 1, 1], [], []>} : vector<2x64xf32>, vector<64x128xf32>, vector<2x128xf32> -> vector<2x128xf32>
    %c0_67 = arith.constant 0 : index
    %c0_68 = arith.constant 0 : index
    %88 = vector.load %arg13[%c0_67, %c0_68] : memref<1x128xf32, #tpu.memory_space<vmem>>, vector<1x128xf32>
    %89 = vector.broadcast %88 : vector<1x128xf32> to vector<2x128xf32>
    %90 = arith.addf %87, %89 : vector<2x128xf32>
    %c0_69 = arith.constant 0 : index
    %c0_70 = arith.constant 0 : index
    %c0_71 = arith.constant 0 : index
    %91 = vector.load %arg14[%c0_69, %c0_70, %c0_71] : memref<1x2x128xf32, #tpu.memory_space<vmem>>, vector<1x2x128xf32>
    %92 = vector.shape_cast %91 : vector<1x2x128xf32> to vector<2x128xf32>
    %93 = vector.shape_cast %90 : vector<2x128xf32> to vector<1x2x128xf32>
    tpu.vector_store %arg14[%c0_69, %c0_70, %c0_71], %93 {strides = array<i32>} : memref<1x2x128xf32, #tpu.memory_space<vmem>>, vector<1x2x128xf32>,
    return
  }
  func.func @transform_0(%arg0: i32) -> (i32, i32, i32) {
    %c0_i32 = arith.constant 0 : i32
    %c0_i32_0 = arith.constant 0 : i32
    %c0_i32_1 = arith.constant 0 : i32
    return %arg0, %c0_i32, %c0_i32_0 : i32, i32, i32
  }
  func.func @transform_1(%arg0: i32) -> (i32, i32, i32) {
    %c0_i32 = arith.constant 0 : i32
    %c0_i32_0 = arith.constant 0 : i32
    %c0_i32_1 = arith.constant 0 : i32
    return %arg0, %c0_i32, %c0_i32_0 : i32, i32, i32
  }
  func.func @transform_2(%arg0: i32) -> (i32, i32) {
    %c0_i32 = arith.constant 0 : i32
    %c0_i32_0 = arith.constant 0 : i32
    %c0_i32_1 = arith.constant 0 : i32
    return %c0_i32, %c0_i32_0 : i32, i32
  }
  func.func @transform_3(%arg0: i32) -> (i32, i32, i32) {
    %c0_i32 = arith.constant 0 : i32
    %c0_i32_0 = arith.constant 0 : i32
    %c0_i32_1 = arith.constant 0 : i32
    %c0_i32_2 = arith.constant 0 : i32
    return %c0_i32, %c0_i32_0, %c0_i32_1 : i32, i32, i32
  }
  func.func @transform_4(%arg0: i32) -> (i32, i32) {
    %c0_i32 = arith.constant 0 : i32
    %c0_i32_0 = arith.constant 0 : i32
    %c0_i32_1 = arith.constant 0 : i32
    return %c0_i32, %c0_i32_0 : i32, i32
  }
  func.func @transform_5(%arg0: i32) -> (i32, i32) {
    %c0_i32 = arith.constant 0 : i32
    %c0_i32_0 = arith.constant 0 : i32
    %c0_i32_1 = arith.constant 0 : i32
    return %c0_i32, %c0_i32_0 : i32, i32
  }
  func.func @transform_6(%arg0: i32) -> (i32, i32, i32) {
    %c0_i32 = arith.constant 0 : i32
    %c0_i32_0 = arith.constant 0 : i32
    %c0_i32_1 = arith.constant 0 : i32
    %c0_i32_2 = arith.constant 0 : i32
    return %c0_i32, %c0_i32_0, %c0_i32_1 : i32, i32, i32
  }
  func.func @transform_7(%arg0: i32) -> (i32, i32) {
    %c0_i32 = arith.constant 0 : i32
    %c0_i32_0 = arith.constant 0 : i32
    %c0_i32_1 = arith.constant 0 : i32
    return %c0_i32, %c0_i32_0 : i32, i32
  }
  func.func @transform_8(%arg0: i32) -> (i32, i32) {
    %c0_i32 = arith.constant 0 : i32
    %c0_i32_0 = arith.constant 0 : i32
    %c0_i32_1 = arith.constant 0 : i32
    return %c0_i32, %c0_i32_0 : i32, i32
  }
  func.func @transform_9(%arg0: i32) -> (i32, i32) {
    %c0_i32 = arith.constant 0 : i32
    %c0_i32_0 = arith.constant 0 : i32
    %c0_i32_1 = arith.constant 0 : i32
    return %c0_i32, %c0_i32_0 : i32, i32
  }
  func.func @transform_10(%arg0: i32) -> (i32, i32) {
    %c0_i32 = arith.constant 0 : i32
    %c0_i32_0 = arith.constant 0 : i32
    %c0_i32_1 = arith.constant 0 : i32
    return %c0_i32, %c0_i32_0 : i32, i32
  }
  func.func @transform_11(%arg0: i32) -> (i32, i32) {
    %c0_i32 = arith.constant 0 : i32
    %c0_i32_0 = arith.constant 0 : i32
    %c0_i32_1 = arith.constant 0 : i32
    return %c0_i32, %c0_i32_0 : i32, i32
  }
  func.func @transform_12(%arg0: i32) -> (i32, i32) {
    %c0_i32 = arith.constant 0 : i32
    %c0_i32_0 = arith.constant 0 : i32
    %c0_i32_1 = arith.constant 0 : i32
    return %c0_i32, %c0_i32_0 : i32, i32
  }
  func.func @transform_13(%arg0: i32) -> (i32, i32, i32) {
    %c0_i32 = arith.constant 0 : i32
    %c0_i32_0 = arith.constant 0 : i32
    %c0_i32_1 = arith.constant 0 : i32
    return %arg0, %c0_i32, %c0_i32_0 : i32, i32, i32
  }
}

</mosaic_0001>

<llo_original>
// kernel: tpu_custom_call.1
$region0: #{tpu_custom_call.1}
  #allocation0 [shape = 'u32[]', space=smem, size = 0x4, offset = 0x4, fixed_abs, tag = 'smem constant byte address 0x4 - core index']
  #allocation1 [shape = 'u32[144,128]{1,0:T(1,128)}', space=vmem, size = 0x12000, scoped, tag = 'internal scratch']
  %s0 = inlined_call_operand.hbm [shape: bf16[1,64,256], index: 0, kind: input, shape index: {}]
  %s1 = inlined_call_operand.hbm [shape: bf16[1,64,128], index: 1, kind: input, shape index: {}]
  %s2 = inlined_call_operand.vmem [shape: bf16[192,64], index: 2, kind: input, shape index: {}]
  %s3 = inlined_call_operand.hbm [shape: bf16[3,256,256], index: 3, kind: input, shape index: {}]
  %s4 = inlined_call_operand.hbm [shape: f32[64,256], index: 4, kind: input, shape index: {}]
  %s5 = inlined_call_operand.hbm [shape: bf16[256,1152], index: 5, kind: input, shape index: {}]
  %s6 = inlined_call_operand.vmem [shape: bf16[9,64,64], index: 6, kind: input, shape index: {}]
  %s7 = inlined_call_operand.vmem [shape: f32[64,1], index: 7, kind: input, shape index: {}]
  %s8 = inlined_call_operand.vmem [shape: bf16[64,64], index: 8, kind: input, shape index: {}]
  %s9 = inlined_call_operand.vmem [shape: f32[64,1], index: 9, kind: input, shape index: {}]
  %s10 = inlined_call_operand.vmem [shape: f32[2,128], index: 10, kind: input, shape index: {}]
  %s11 = inlined_call_operand.hbm [shape: f32[64,128], index: 11, kind: input, shape index: {}]
  %s12 = inlined_call_operand.vmem [shape: f32[1,128], index: 12, kind: input, shape index: {}]
  %s13 = inlined_call_operand.hbm [shape: f32[1,2,128], index: 13, kind: output, shape index: {}]
  %s14 = sld [smem:[#allocation0]]
  $region86: #{tpu_custom_call.1} parent=0
    _
  %s16 = ssub.s32 1, %s14
  %s17 = scalar_select 0, %s16, %s14
  $region1: #{tpu_custom_call.1} parent=0
    #allocation2 [shape = 'u8[32768]{0}', space=vmem, size = 0x8000, scoped, tag = 'input window, operand 0, single buffered']
    #allocation3 [shape = 's32[1]{0}', space=sflag, size = 0x4, scoped, tag = 'scoped memory for tpu_custom_call.1']
    #allocation4 [shape = 's32[1]{0}', space=sflag, size = 0x4, scoped, tag = 'scoped memory for tpu_custom_call.1']
    #allocation5 [shape = 'u8[16384]{0}', space=vmem, size = 0x4000, scoped, tag = 'input window, operand 1, single buffered']
    #allocation6 [shape = 's32[1]{0}', space=sflag, size = 0x4, scoped, tag = 'scoped memory for tpu_custom_call.1']
    #allocation7 [shape = 'u8[393216]{0}', space=vmem, size = 0x60000, scoped, tag = 'input window, operand 3, single buffered']
    #allocation8 [shape = 'u8[65536]{0}', space=vmem, size = 0x10000, scoped, tag = 'input window, operand 4, single buffered']
    #allocation9 [shape = 's32[1]{0}', space=sflag, size = 0x4, scoped, tag = 'scoped memory for tpu_custom_call.1']
    #allocation10 [shape = 'u8[589824]{0}', space=vmem, size = 0x90000, scoped, tag = 'input window, operand 5, single buffered']
    #allocation11 [shape = 'u8[32768]{0}', space=vmem, size = 0x8000, scoped, tag = 'input window, operand 11, single buffered']
    #allocation12 [shape = 's32[1]{0}', space=sflag, size = 0x4, scoped, tag = 'scoped memory for tpu_custom_call.1']
    #allocation13 [shape = 'u8[1024]{0}', space=vmem, size = 0x400, scoped, tag = 'output window, operand 0, single buffered']
    %18 = vsyncpa [#allocation3], 0
    %19 = vsyncpa [#allocation6], 0
    %20 = vsyncpa [#allocation9], 0
    %21 = vsyncpa [#allocation12], 0
    %22 = vsyncpa [#allocation4], 0
    // Predicated region
    $region2: #{tpu_custom_call.1} parent=1 // pred_check
      _
    $region3: #{tpu_custom_call.1} parent=1 // pred_check_branch
      %24 = sbr.rel (0) target = $region5
    $region4: #{tpu_custom_call.1} parent=1 // pred_region
      %s26 = ssub.s32 1024, 1024
      %27 = vsyncadd [#allocation3], %s26
      %s28 = sshll.u32 [#allocation2], 4
      %s29 = int_to_ptr.vmem [resolvable:$true] %s28
      %34 = dma.hbm_to_vmem [thread:$0]  %s0, 1024, %s29, [#allocation3], 128, 128, 8
    $region5: #{tpu_custom_call.1} parent=1 // pred_fallthru
      _
    // Predicated region
    $region6: #{tpu_custom_call.1} parent=1 // pred_check
      _
    $region7: #{tpu_custom_call.1} parent=1 // pred_check_branch
      %36 = sbr.rel (0) target = $region9
    $region8: #{tpu_custom_call.1} parent=1 // pred_region
      %s38 = ssub.s32 512, 512
      %39 = vsyncadd [#allocation6], %s38
      %s40 = sshll.u32 [#allocation5], 4
      %s41 = int_to_ptr.vmem [resolvable:$true] %s40
      %46 = dma.hbm_to_vmem [thread:$0]  %s1, 512, %s41, [#allocation6], 64, 64, 4
    $region9: #{tpu_custom_call.1} parent=1 // pred_fallthru
      _
    // Predicated region
    $region10: #{tpu_custom_call.1} parent=1 // pred_check
      _
    $region11: #{tpu_custom_call.1} parent=1 // pred_check_branch
      %48 = sbr.rel (0) target = $region13
    $region12: #{tpu_custom_call.1} parent=1 // pred_region
      _
    $region13: #{tpu_custom_call.1} parent=1 // pred_fallthru
      _
    // Predicated region
    $region14: #{tpu_custom_call.1} parent=1 // pred_check
      _
    $region15: #{tpu_custom_call.1} parent=1 // pred_check_branch
      %50 = sbr.rel (0) target = $region17
    $region16: #{tpu_custom_call.1} parent=1 // pred_region
      %s52 = ssub.s32 12288, 12288
      %53 = vsyncadd [#allocation6], %s52
      %s54 = sshll.u32 [#allocation7], 4
      %s55 = int_to_ptr.vmem [resolvable:$true] %s54
      %60 = dma.hbm_to_vmem [thread:$0]  %s3, 12288, %s55, [#allocation6], 128, 128, 8
    $region17: #{tpu_custom_call.1} parent=1 // pred_fallthru
      _
    // Predicated region
    $region18: #{tpu_custom_call.1} parent=1 // pred_check
      _
    $region19: #{tpu_custom_call.1} parent=1 // pred_check_branch
      %62 = sbr.rel (0) target = $region21
    $region20: #{tpu_custom_call.1} parent=1 // pred_region
      %s64 = ssub.s32 2048, 2048
      %65 = vsyncadd [#allocation9], %s64
      %s66 = sshll.u32 [#allocation8], 4
      %s67 = int_to_ptr.vmem [resolvable:$true] %s66
      %72 = dma.hbm_to_vmem [thread:$0]  %s4, 2048, %s67, [#allocation9], 256, 256, 16
    $region21: #{tpu_custom_call.1} parent=1 // pred_fallthru
      _
    // Predicated region
    $region22: #{tpu_custom_call.1} parent=1 // pred_check
      _
    $region23: #{tpu_custom_call.1} parent=1 // pred_check_branch
      %74 = sbr.rel (0) target = $region25
    $region24: #{tpu_custom_call.1} parent=1 // pred_region
      %s76 = ssub.s32 18432, 18432
      %77 = vsyncadd [#allocation9], %s76
      %s78 = sshll.u32 [#allocation10], 4
      %s79 = int_to_ptr.vmem [resolvable:$true] %s78
      %84 = dma.hbm_to_vmem [thread:$0]  %s5, 18432, %s79, [#allocation9], 576, 576, 36
    $region25: #{tpu_custom_call.1} parent=1 // pred_fallthru
      _
    // Predicated region
    $region26: #{tpu_custom_call.1} parent=1 // pred_check
      _
    $region27: #{tpu_custom_call.1} parent=1 // pred_check_branch
      %86 = sbr.rel (0) target = $region29
    $region28: #{tpu_custom_call.1} parent=1 // pred_region
      _
    $region29: #{tpu_custom_call.1} parent=1 // pred_fallthru
      _
    // Predicated region
    $region30: #{tpu_custom_call.1} parent=1 // pred_check
      _
    $region31: #{tpu_custom_call.1} parent=1 // pred_check_branch
      %88 = sbr.rel (0) target = $region33
    $region32: #{tpu_custom_call.1} parent=1 // pred_region
      _
    $region33: #{tpu_custom_call.1} parent=1 // pred_fallthru
      _
    // Predicated region
    $region34: #{tpu_custom_call.1} parent=1 // pred_check
      _
    $region35: #{tpu_custom_call.1} parent=1 // pred_check_branch
      %90 = sbr.rel (0) target = $region37
    $region36: #{tpu_custom_call.1} parent=1 // pred_region
      _
    $region37: #{tpu_custom_call.1} parent=1 // pred_fallthru
      _
    // Predicated region
    $region38: #{tpu_custom_call.1} parent=1 // pred_check
      _
    $region39: #{tpu_custom_call.1} parent=1 // pred_check_branch
      %92 = sbr.rel (0) target = $region41
    $region40: #{tpu_custom_call.1} parent=1 // pred_region
      _
    $region41: #{tpu_custom_call.1} parent=1 // pred_fallthru
      _
    // Predicated region
    $region42: #{tpu_custom_call.1} parent=1 // pred_check
      _
    $region43: #{tpu_custom_call.1} parent=1 // pred_check_branch
      %94 = sbr.rel (0) target = $region45
    $region44: #{tpu_custom_call.1} parent=1 // pred_region
      _
    $region45: #{tpu_custom_call.1} parent=1 // pred_fallthru
      _
    // Predicated region
    $region46: #{tpu_custom_call.1} parent=1 // pred_check
      _
    $region47: #{tpu_custom_call.1} parent=1 // pred_check_branch
      %96 = sbr.rel (0) target = $region49
    $region48: #{tpu_custom_call.1} parent=1 // pred_region
      %s98 = ssub.s32 1024, 1024
      %99 = vsyncadd [#allocation12], %s98
      %s100 = sshll.u32 [#allocation11], 4
      %s101 = int_to_ptr.vmem [resolvable:$true] %s100
      %106 = dma.hbm_to_vmem [thread:$0]  %s11, 1024, %s101, [#allocation12], 128, 128, 8
    $region49: #{tpu_custom_call.1} parent=1 // pred_fallthru
      _
    // Predicated region
    $region50: #{tpu_custom_call.1} parent=1 // pred_check
      _
    $region51: #{tpu_custom_call.1} parent=1 // pred_check_branch
      %108 = sbr.rel (0) target = $region53
    $region52: #{tpu_custom_call.1} parent=1 // pred_region
      _
    $region53: #{tpu_custom_call.1} parent=1 // pred_fallthru
      _
    // Predicated region
    $region54: #{tpu_custom_call.1} parent=1 // pred_check
      _
    $region55: #{tpu_custom_call.1} parent=1 // pred_check_branch
      %110 = sbr.rel (0) target = $region57
    $region56: #{tpu_custom_call.1} parent=1 // pred_region
      %111 = dma.done [#allocation3], 1024
    $region57: #{tpu_custom_call.1} parent=1 // pred_fallthru
      _
    // Predicated region
    $region58: #{tpu_custom_call.1} parent=1 // pred_check
      _
    $region59: #{tpu_custom_call.1} parent=1 // pred_check_branch
      %113 = sbr.rel (0) target = $region61
    $region60: #{tpu_custom_call.1} parent=1 // pred_region
      %114 = dma.done [#allocation6], 512
    $region61: #{tpu_custom_call.1} parent=1 // pred_fallthru
      _
    // Predicated region
    $region62: #{tpu_custom_call.1} parent=1 // pred_check
      _
    $region63: #{tpu_custom_call.1} parent=1 // pred_check_branch
      %116 = sbr.rel (0) target = $region65
    $region64: #{tpu_custom_call.1} parent=1 // pred_region
      %117 = dma.done [#allocation6], 12288
    $region65: #{tpu_custom_call.1} parent=1 // pred_fallthru
      _
    // Predicated region
    $region66: #{tpu_custom_call.1} parent=1 // pred_check
      _
    $region67: #{tpu_custom_call.1} parent=1 // pred_check_branch
      %119 = sbr.rel (0) target = $region69
    $region68: #{tpu_custom_call.1} parent=1 // pred_region
      %120 = dma.done [#allocation9], 2048
    $region69: #{tpu_custom_call.1} parent=1 // pred_fallthru
      _
    // Predicated region
    $region70: #{tpu_custom_call.1} parent=1 // pred_check
      _
    $region71: #{tpu_custom_call.1} parent=1 // pred_check_branch
      %122 = sbr.rel (0) target = $region73
    $region72: #{tpu_custom_call.1} parent=1 // pred_region
      %123 = dma.done [#allocation9], 18432
    $region73: #{tpu_custom_call.1} parent=1 // pred_fallthru
      _
    // Predicated region
    $region74: #{tpu_custom_call.1} parent=1 // pred_check
      _
    $region75: #{tpu_custom_call.1} parent=1 // pred_check_branch
      %125 = sbr.rel (0) target = $region77
    $region76: #{tpu_custom_call.1} parent=1 // pred_region
      %126 = dma.done [#allocation12], 1024
    $region77: #{tpu_custom_call.1} parent=1 // pred_fallthru
      _
    %v128 = vld [vmem:[#allocation2] sm:$0xff]
    %v129 = vld [vmem:[#allocation2 + $0x8] sm:$0xff]
    %v130 = vld [vmem:[#allocation2 + $0x10] sm:$0xff]
    %v131 = vld [vmem:[#allocation2 + $0x18] sm:$0xff]
    %v132 = vld [vmem:[#allocation2 + $0x20] sm:$0xff]
    %v133 = vld [vmem:[#allocation2 + $0x28] sm:$0xff]
    %v134 = vld [vmem:[#allocation2 + $0x30] sm:$0xff]
    %v135 = vld [vmem:[#allocation2 + $0x38] sm:$0xff]
    %v136 = vld [vmem:[%s2] sm:$0xf]
    %v137 = vld [vmem:[%s2 + $0x4] sm:$0xf]
    %v138 = vld [vmem:[%s2 + $0x8] sm:$0xf]
    %v139 = vld [vmem:[%s2 + $0xc] sm:$0xf]
    %v140 = vld [vmem:[%s2 + $0x10] sm:$0xf]
    %v141 = vld [vmem:[%s2 + $0x14] sm:$0xf]
    %v142 = vld [vmem:[%s2 + $0x18] sm:$0xf]
    %v143 = vld [vmem:[%s2 + $0x1c] sm:$0xf]
    %v144 = vld [vmem:[%s2 + $0x20] sm:$0xf]
    %v145 = vld [vmem:[%s2 + $0x24] sm:$0xf]
    %v146 = vld [vmem:[%s2 + $0x28] sm:$0xf]
    %v147 = vld [vmem:[%s2 + $0x2c] sm:$0xf]
    %v148 = vld [vmem:[%s2 + $0x30] sm:$0xf]
    %v149 = vld [vmem:[%s2 + $0x34] sm:$0xf]
    %v150 = vld [vmem:[%s2 + $0x38] sm:$0xf]
    %v151 = vld [vmem:[%s2 + $0x3c] sm:$0xf]
    %v152 = vld [vmem:[%s2 + $0x40] sm:$0xf]
    %v153 = vld [vmem:[%s2 + $0x44] sm:$0xf]
    %v154 = vld [vmem:[%s2 + $0x48] sm:$0xf]
    %v155 = vld [vmem:[%s2 + $0x4c] sm:$0xf]
    %v156 = vld [vmem:[%s2 + $0x50] sm:$0xf]
    %v157 = vld [vmem:[%s2 + $0x54] sm:$0xf]
    %v158 = vld [vmem:[%s2 + $0x58] sm:$0xf]
    %v159 = vld [vmem:[%s2 + $0x5c] sm:$0xf]
    %v184 = vunpack.c.l.b16 %v136
    %v185 = vunpack.c.l.b16 %v137
    %v186 = vunpack.c.l.b16 %v138
    %v187 = vunpack.c.l.b16 %v139
    %v188 = vunpack.c.l.b16 %v140
    %v189 = vunpack.c.l.b16 %v141
    %v190 = vunpack.c.l.b16 %v142
    %v191 = vunpack.c.l.b16 %v143
    %v192 = vunpack.c.l.b16 %v144
    %v193 = vunpack.c.l.b16 %v145
    %v194 = vunpack.c.l.b16 %v146
    %v195 = vunpack.c.l.b16 %v147
    %v196 = vunpack.c.l.b16 %v148
    %v197 = vunpack.c.l.b16 %v149
    %v198 = vunpack.c.l.b16 %v150
    %v199 = vunpack.c.l.b16 %v151
    %v200 = vunpack.c.l.b16 %v152
    %v201 = vunpack.c.l.b16 %v153
    %v202 = vunpack.c.l.b16 %v154
    %v203 = vunpack.c.l.b16 %v155
    %v204 = vunpack.c.l.b16 %v156
    %v205 = vunpack.c.l.b16 %v157
    %v206 = vunpack.c.l.b16 %v158
    %v207 = vunpack.c.l.b16 %v159
    %v208 = vpack.c.b16 %v185, %v184
    %v209 = vpack.c.b16 %v187, %v186
    %v210 = vpack.c.b16 %v189, %v188
    %v211 = vpack.c.b16 %v191, %v190
    %v212 = vpack.c.b16 %v193, %v192
    %v213 = vpack.c.b16 %v195, %v194
    %v214 = vpack.c.b16 %v197, %v196
    %v215 = vpack.c.b16 %v199, %v198
    %v216 = vpack.c.b16 %v201, %v200
    %v217 = vpack.c.b16 %v203, %v202
    %v218 = vpack.c.b16 %v205, %v204
    %v219 = vpack.c.b16 %v207, %v206
    %v228 = vunpack.c.l.b16 %v128
    %v229 = vunpack.c.h.b16 %v128
    %v230 = vunpack.c.l.b16 %v129
    %v231 = vunpack.c.h.b16 %v129
    %v232 = vunpack.c.l.b16 %v130
    %v233 = vunpack.c.h.b16 %v130
    %v234 = vunpack.c.l.b16 %v131
    %v235 = vunpack.c.h.b16 %v131
    %v236 = vunpack.c.l.b16 %v132
    %v237 = vunpack.c.h.b16 %v132
    %v238 = vunpack.c.l.b16 %v133
    %v239 = vunpack.c.h.b16 %v133
    %v240 = vunpack.c.l.b16 %v134
    %v241 = vunpack.c.h.b16 %v134
    %v242 = vunpack.c.l.b16 %v135
    %v243 = vunpack.c.h.b16 %v135
    %v244 = vpack.c.b16 %v230, %v228
    %v245 = vpack.c.b16 %v231, %v229
    %v246 = vpack.c.b16 %v234, %v232
    %v247 = vpack.c.b16 %v235, %v233
    %v248 = vpack.c.b16 %v238, %v236
    %v249 = vpack.c.b16 %v239, %v237
    %v250 = vpack.c.b16 %v242, %v240
    %v251 = vpack.c.b16 %v243, %v241
    %vm260 = vcmask 523264
    %v262 = vsel %vm260, %v208, 0
    %v265 = vsel %vm260, %v209, 0
    %v268 = vsel %vm260, %v210, 0
    %v271 = vsel %vm260, %v211, 0
    %v274 = vsel %vm260, %v212, 0
    %v277 = vsel %vm260, %v213, 0
    %v280 = vsel %vm260, %v214, 0
    %v283 = vsel %vm260, %v215, 0
    %v286 = vsel %vm260, %v216, 0
    %v289 = vsel %vm260, %v217, 0
    %v292 = vsel %vm260, %v218, 0
    %v295 = vsel %vm260, %v219, 0
    %297 = vmatprep.subr.bf16.mxu0 %v245
    %298 = vmatpush1.bf16.msra.mxu0 %v244
    %299 = vmatprep.subr.bf16.mxu0 %v247
    %300 = vmatpush1.bf16.msra.mxu0 %v246
    %301 = vmatprep.subr.bf16.mxu0 %v249
    %302 = vmatpush1.bf16.msra.mxu0 %v248
    %303 = vmatprep.subr.bf16.mxu0 %v251
    %304 = vmatpush1.bf16.msra.mxu0 %v250
    %305 = vmatprep.subr.bf16.mxu0 0
    %306 = vmatpush1.bf16.msra.mxu0 0
    %307 = vmatprep.subr.bf16.mxu0 0
    %308 = vmatpush1.bf16.msra.mxu0 0
    %309 = vmatprep.subr.bf16.mxu0 0
    %310 = vmatpush1.bf16.msra.mxu0 0
    %311 = vmatprep.subr.bf16.mxu0 0
    %312 = vmatpush1.bf16.msra.mxu0 0
    %313 = vmatprep.subr.bf16.mxu0 0
    %314 = vmatpush1.bf16.msra.mxu0 0
    %315 = vmatprep.subr.bf16.mxu0 0
    %316 = vmatpush1.bf16.msra.mxu0 0
    %317 = vmatprep.subr.bf16.mxu0 0
    %318 = vmatpush1.bf16.msra.mxu0 0
    %319 = vmatprep.subr.bf16.mxu0 0
    %320 = vmatpush1.bf16.msra.mxu0 0
    %321 = vmatprep.subr.bf16.mxu0 0
    %322 = vmatpush1.bf16.msra.mxu0 0
    %323 = vmatprep.subr.bf16.mxu0 0
    %324 = vmatpush1.bf16.msra.mxu0 0
    %325 = vmatprep.subr.bf16.mxu0 0
    %326 = vmatpush1.bf16.msra.mxu0 0
    %327 = vmatprep.subr.bf16.mxu0 0
    %328 = vmatpush1.bf16.msra.mxu0 0
    %329 = vmatprep.mubr.bf16.mxu0 0
    %330 = vmatmul.mubr.bf16.gmra.mrb[0].mxu0 %v262
    %v331 = vpop.f32.mrb[0].mxu0
    %v332 = vadd.f32 0.0, %v331
    %v333 = vpop.f32.mrb[0].mxu0
    %v334 = vadd.f32 0.0, %v333
    %v335 = vpop.f32.mrb[0].mxu0
    %v336 = vadd.f32 0.0, %v335
    %v337 = vpop.f32.mrb[0].mxu0
    %v338 = vadd.f32 0.0, %v337
    %339 = vmatprep.mubr.bf16.mxu0 0
    %340 = vmatmul.mubr.bf16.gmra.mrb[0].mxu0 %v265
    %v341 = vpop.f32.mrb[0].mxu0
    %v342 = vadd.f32 0.0, %v341
    %v343 = vpop.f32.mrb[0].mxu0
    %v344 = vadd.f32 0.0, %v343
    %v345 = vpop.f32.mrb[0].mxu0
    %v346 = vadd.f32 0.0, %v345
    %v347 = vpop.f32.mrb[0].mxu0
    %v348 = vadd.f32 0.0, %v347
    %349 = vmatprep.mubr.bf16.mxu0 0
    %350 = vmatmul.mubr.bf16.gmra.mrb[0].mxu0 %v268
    %v351 = vpop.f32.mrb[0].mxu0
    %v352 = vadd.f32 0.0, %v351
    %v353 = vpop.f32.mrb[0].mxu0
    %v354 = vadd.f32 0.0, %v353
    %v355 = vpop.f32.mrb[0].mxu0
    %v356 = vadd.f32 0.0, %v355
    %v357 = vpop.f32.mrb[0].mxu0
    %v358 = vadd.f32 0.0, %v357
    %359 = vmatprep.mubr.bf16.mxu0 0
    %360 = vmatmul.mubr.bf16.gmra.mrb[0].mxu0 %v271
    %v361 = vpop.f32.mrb[0].mxu0
    %v362 = vadd.f32 0.0, %v361
    %v363 = vpop.f32.mrb[0].mxu0
    %v364 = vadd.f32 0.0, %v363
    %v365 = vpop.f32.mrb[0].mxu0
    %v366 = vadd.f32 0.0, %v365
    %v367 = vpop.f32.mrb[0].mxu0
    %v368 = vadd.f32 0.0, %v367
    %369 = vmatprep.mubr.bf16.mxu0 0
    %370 = vmatmul.mubr.bf16.gmra.mrb[0].mxu0 %v274
    %v371 = vpop.f32.mrb[0].mxu0
    %v372 = vadd.f32 0.0, %v371
    %v373 = vpop.f32.mrb[0].mxu0
    %v374 = vadd.f32 0.0, %v373
    %v375 = vpop.f32.mrb[0].mxu0
    %v376 = vadd.f32 0.0, %v375
    %v377 = vpop.f32.mrb[0].mxu0
    %v378 = vadd.f32 0.0, %v377
    %379 = vmatprep.mubr.bf16.mxu0 0
    %380 = vmatmul.mubr.bf16.gmra.mrb[0].mxu0 %v277
    %v381 = vpop.f32.mrb[0].mxu0
    %v382 = vadd.f32 0.0, %v381
    %v383 = vpop.f32.mrb[0].mxu0
    %v384 = vadd.f32 0.0, %v383
    %v385 = vpop.f32.mrb[0].mxu0
    %v386 = vadd.f32 0.0, %v385
    %v387 = vpop.f32.mrb[0].mxu0
    %v388 = vadd.f32 0.0, %v387
    %389 = vmatprep.mubr.bf16.mxu0 0
    %390 = vmatmul.mubr.bf16.gmra.mrb[0].mxu0 %v280
    %v391 = vpop.f32.mrb[0].mxu0
    %v392 = vadd.f32 0.0, %v391
    %v393 = vpop.f32.mrb[0].mxu0
    %v394 = vadd.f32 0.0, %v393
    %v395 = vpop.f32.mrb[0].mxu0
    %v396 = vadd.f32 0.0, %v395
    %v397 = vpop.f32.mrb[0].mxu0
    %v398 = vadd.f32 0.0, %v397
    %399 = vmatprep.mubr.bf16.mxu0 0
    %400 = vmatmul.mubr.bf16.gmra.mrb[0].mxu0 %v283
    %v401 = vpop.f32.mrb[0].mxu0
    %v402 = vadd.f32 0.0, %v401
    %v403 = vpop.f32.mrb[0].mxu0
    %v404 = vadd.f32 0.0, %v403
    %v405 = vpop.f32.mrb[0].mxu0
    %v406 = vadd.f32 0.0, %v405
    %v407 = vpop.f32.mrb[0].mxu0
    %v408 = vadd.f32 0.0, %v407
    %409 = vmatprep.mubr.bf16.mxu0 0
    %410 = vmatmul.mubr.bf16.gmra.mrb[0].mxu0 %v286
    %v411 = vpop.f32.mrb[0].mxu0
    %v412 = vadd.f32 0.0, %v411
    %v413 = vpop.f32.mrb[0].mxu0
    %v414 = vadd.f32 0.0, %v413
    %v415 = vpop.f32.mrb[0].mxu0
    %v416 = vadd.f32 0.0, %v415
    %v417 = vpop.f32.mrb[0].mxu0
    %v418 = vadd.f32 0.0, %v417
    %419 = vmatprep.mubr.bf16.mxu0 0
    %420 = vmatmul.mubr.bf16.gmra.mrb[0].mxu0 %v289
    %v421 = vpop.f32.mrb[0].mxu0
    %v422 = vadd.f32 0.0, %v421
    %v423 = vpop.f32.mrb[0].mxu0
    %v424 = vadd.f32 0.0, %v423
    %v425 = vpop.f32.mrb[0].mxu0
    %v426 = vadd.f32 0.0, %v425
    %v427 = vpop.f32.mrb[0].mxu0
    %v428 = vadd.f32 0.0, %v427
    %429 = vmatprep.mubr.bf16.mxu0 0
    %430 = vmatmul.mubr.bf16.gmra.mrb[0].mxu0 %v292
    %v431 = vpop.f32.mrb[0].mxu0
    %v432 = vadd.f32 0.0, %v431
    %v433 = vpop.f32.mrb[0].mxu0
    %v434 = vadd.f32 0.0, %v433
    %v435 = vpop.f32.mrb[0].mxu0
    %v436 = vadd.f32 0.0, %v435
    %v437 = vpop.f32.mrb[0].mxu0
    %v438 = vadd.f32 0.0, %v437
    %439 = vmatprep.mubr.bf16.mxu0 0
    %440 = vmatmul.mubr.bf16.gmra.mrb[0].mxu0 %v295
    %v441 = vpop.f32.mrb[0].mxu0
    %v442 = vadd.f32 0.0, %v441
    %v443 = vpop.f32.mrb[0].mxu0
    %v444 = vadd.f32 0.0, %v443
    %v445 = vpop.f32.mrb[0].mxu0
    %v446 = vadd.f32 0.0, %v445
    %v447 = vpop.f32.mrb[0].mxu0
    %v448 = vadd.f32 0.0, %v447
    %449 = vdwg.mxu0
    %v450 = vpack.c.bf16 %v336, %v332
    %v451 = vpack.c.bf16 %v338, %v334
    %v452 = vpack.c.bf16 %v346, %v342
    %v453 = vpack.c.bf16 %v348, %v344
    %v454 = vpack.c.bf16 %v356, %v352
    %v455 = vpack.c.bf16 %v358, %v354
    %v456 = vpack.c.bf16 %v366, %v362
    %v457 = vpack.c.bf16 %v368, %v364
    %v458 = vpack.c.bf16 %v376, %v372
    %v459 = vpack.c.bf16 %v378, %v374
    %v460 = vpack.c.bf16 %v386, %v382
    %v461 = vpack.c.bf16 %v388, %v384
    %v462 = vpack.c.bf16 %v396, %v392
    %v463 = vpack.c.bf16 %v398, %v394
    %v464 = vpack.c.bf16 %v406, %v402
    %v465 = vpack.c.bf16 %v408, %v404
    %v466 = vpack.c.bf16 %v416, %v412
    %v467 = vpack.c.bf16 %v418, %v414
    %v468 = vpack.c.bf16 %v426, %v422
    %v469 = vpack.c.bf16 %v428, %v424
    %v470 = vpack.c.bf16 %v436, %v432
    %v471 = vpack.c.bf16 %v438, %v434
    %v472 = vpack.c.bf16 %v446, %v442
    %v473 = vpack.c.bf16 %v448, %v444
    %v474 = vld [vmem:[#allocation7] sm:$0xff]
    %v475 = vld [vmem:[#allocation7 + $0x8] sm:$0xff]
    %v476 = vld [vmem:[#allocation7 + $0x10] sm:$0xff]
    %v477 = vld [vmem:[#allocation7 + $0x18] sm:$0xff]
    %v478 = vld [vmem:[#allocation7 + $0x20] sm:$0xff]
    %v479 = vld [vmem:[#allocation7 + $0x28] sm:$0xff]
    %v480 = vld [vmem:[#allocation7 + $0x30] sm:$0xff]
    %v481 = vld [vmem:[#allocation7 + $0x38] sm:$0xff]
    %v482 = vld [vmem:[#allocation7 + $0x40] sm:$0xff]
    %v483 = vld [vmem:[#allocation7 + $0x48] sm:$0xff]
    %v484 = vld [vmem:[#allocation7 + $0x50] sm:$0xff]
    %v485 = vld [vmem:[#allocation7 + $0x58] sm:$0xff]
    %v486 = vld [vmem:[#allocation7 + $0x60] sm:$0xff]
    %v487 = vld [vmem:[#allocation7 + $0x68] sm:$0xff]
    %v488 = vld [vmem:[#allocation7 + $0x70] sm:$0xff]
    %v489 = vld [vmem:[#allocation7 + $0x78] sm:$0xff]
    %v490 = vld [vmem:[#allocation7 + $0x80] sm:$0xff]
    %v491 = vld [vmem:[#allocation7 + $0x88] sm:$0xff]
    %v492 = vld [vmem:[#allocation7 + $0x90] sm:$0xff]
    %v493 = vld [vmem:[#allocation7 + $0x98] sm:$0xff]
    %v494 = vld [vmem:[#allocation7 + $0xa0] sm:$0xff]
    %v495 = vld [vmem:[#allocation7 + $0xa8] sm:$0xff]
    %v496 = vld [vmem:[#allocation7 + $0xb0] sm:$0xff]
    %v497 = vld [vmem:[#allocation7 + $0xb8] sm:$0xff]
    %v498 = vld [vmem:[#allocation7 + $0xc0] sm:$0xff]
    %v499 = vld [vmem:[#allocation7 + $0xc8] sm:$0xff]
    %v500 = vld [vmem:[#allocation7 + $0xd0] sm:$0xff]
    %v501 = vld [vmem:[#allocation7 + $0xd8] sm:$0xff]
    %v502 = vld [vmem:[#allocation7 + $0xe0] sm:$0xff]
    %v503 = vld [vmem:[#allocation7 + $0xe8] sm:$0xff]
    %v504 = vld [vmem:[#allocation7 + $0xf0] sm:$0xff]
    %v505 = vld [vmem:[#allocation7 + $0xf8] sm:$0xff]
    %s506 = scalar_lea.vmem [#allocation7], 256
    %v507 = vld [vmem:[%s506] sm:$0xff]
    %v508 = vld [vmem:[%s506 + $0x8] sm:$0xff]
    %v509 = vld [vmem:[%s506 + $0x10] sm:$0xff]
    %v510 = vld [vmem:[%s506 + $0x18] sm:$0xff]
    %v511 = vld [vmem:[%s506 + $0x20] sm:$0xff]
    %v512 = vld [vmem:[%s506 + $0x28] sm:$0xff]
    %v513 = vld [vmem:[%s506 + $0x30] sm:$0xff]
    %v514 = vld [vmem:[%s506 + $0x38] sm:$0xff]
    %v515 = vld [vmem:[%s506 + $0x40] sm:$0xff]
    %v516 = vld [vmem:[%s506 + $0x48] sm:$0xff]
    %v517 = vld [vmem:[%s506 + $0x50] sm:$0xff]
    %v518 = vld [vmem:[%s506 + $0x58] sm:$0xff]
    %v519 = vld [vmem:[%s506 + $0x60] sm:$0xff]
    %v520 = vld [vmem:[%s506 + $0x68] sm:$0xff]
    %v521 = vld [vmem:[%s506 + $0x70] sm:$0xff]
    %v522 = vld [vmem:[%s506 + $0x78] sm:$0xff]
    %v523 = vld [vmem:[%s506 + $0x80] sm:$0xff]
    %v524 = vld [vmem:[%s506 + $0x88] sm:$0xff]
    %v525 = vld [vmem:[%s506 + $0x90] sm:$0xff]
    %v526 = vld [vmem:[%s506 + $0x98] sm:$0xff]
    %v527 = vld [vmem:[%s506 + $0xa0] sm:$0xff]
    %v528 = vld [vmem:[%s506 + $0xa8] sm:$0xff]
    %v529 = vld [vmem:[%s506 + $0xb0] sm:$0xff]
    %v530 = vld [vmem:[%s506 + $0xb8] sm:$0xff]
    %v531 = vld [vmem:[%s506 + $0xc0] sm:$0xff]
    %v532 = vld [vmem:[%s506 + $0xc8] sm:$0xff]
    %v533 = vld [vmem:[%s506 + $0xd0] sm:$0xff]
    %v534 = vld [vmem:[%s506 + $0xd8] sm:$0xff]
    %v535 = vld [vmem:[%s506 + $0xe0] sm:$0xff]
    %v536 = vld [vmem:[%s506 + $0xe8] sm:$0xff]
    %v537 = vld [vmem:[%s506 + $0xf0] sm:$0xff]
    %v538 = vld [vmem:[%s506 + $0xf8] sm:$0xff]
    %v571 = vunpack.c.l.b16 %v507
    %v572 = vunpack.c.h.b16 %v507
    %v573 = vunpack.c.l.b16 %v508
    %v574 = vunpack.c.h.b16 %v508
    %v575 = vunpack.c.l.b16 %v509
    %v576 = vunpack.c.h.b16 %v509
    %v577 = vunpack.c.l.b16 %v510
    %v578 = vunpack.c.h.b16 %v510
    %v579 = vunpack.c.l.b16 %v511
    %v580 = vunpack.c.h.b16 %v511
    %v581 = vunpack.c.l.b16 %v512
    %v582 = vunpack.c.h.b16 %v512
    %v583 = vunpack.c.l.b16 %v513
    %v584 = vunpack.c.h.b16 %v513
    %v585 = vunpack.c.l.b16 %v514
    %v586 = vunpack.c.h.b16 %v514
    %v587 = vunpack.c.l.b16 %v515
    %v588 = vunpack.c.h.b16 %v515
    %v589 = vunpack.c.l.b16 %v516
    %v590 = vunpack.c.h.b16 %v516
    %v591 = vunpack.c.l.b16 %v517
    %v592 = vunpack.c.h.b16 %v517
    %v593 = vunpack.c.l.b16 %v518
    %v594 = vunpack.c.h.b16 %v518
    %v595 = vunpack.c.l.b16 %v519
    %v596 = vunpack.c.h.b16 %v519
    %v597 = vunpack.c.l.b16 %v520
    %v598 = vunpack.c.h.b16 %v520
    %v599 = vunpack.c.l.b16 %v521
    %v600 = vunpack.c.h.b16 %v521
    %v601 = vunpack.c.l.b16 %v522
    %v602 = vunpack.c.h.b16 %v522
    %v603 = vunpack.c.l.b16 %v523
    %v604 = vunpack.c.h.b16 %v523
    %v605 = vunpack.c.l.b16 %v524
    %v606 = vunpack.c.h.b16 %v524
    %v607 = vunpack.c.l.b16 %v525
    %v608 = vunpack.c.h.b16 %v525
    %v609 = vunpack.c.l.b16 %v526
    %v610 = vunpack.c.h.b16 %v526
    %v611 = vunpack.c.l.b16 %v527
    %v612 = vunpack.c.h.b16 %v527
    %v613 = vunpack.c.l.b16 %v528
    %v614 = vunpack.c.h.b16 %v528
    %v615 = vunpack.c.l.b16 %v529
    %v616 = vunpack.c.h.b16 %v529
    %v617 = vunpack.c.l.b16 %v530
    %v618 = vunpack.c.h.b16 %v530
    %v619 = vunpack.c.l.b16 %v531
    %v620 = vunpack.c.h.b16 %v531
    %v621 = vunpack.c.l.b16 %v532
    %v622 = vunpack.c.h.b16 %v532
    %v623 = vunpack.c.l.b16 %v533
    %v624 = vunpack.c.h.b16 %v533
    %v625 = vunpack.c.l.b16 %v534
    %v626 = vunpack.c.h.b16 %v534
    %v627 = vunpack.c.l.b16 %v535
    %v628 = vunpack.c.h.b16 %v535
    %v629 = vunpack.c.l.b16 %v536
    %v630 = vunpack.c.h.b16 %v536
    %v631 = vunpack.c.l.b16 %v537
    %v632 = vunpack.c.h.b16 %v537
    %v633 = vunpack.c.l.b16 %v538
    %v634 = vunpack.c.h.b16 %v538
    %v635 = vpack.c.b16 %v573, %v571
    %v636 = vpack.c.b16 %v574, %v572
    %v637 = vpack.c.b16 %v577, %v575
    %v638 = vpack.c.b16 %v578, %v576
    %v639 = vpack.c.b16 %v581, %v579
    %v640 = vpack.c.b16 %v582, %v580
    %v641 = vpack.c.b16 %v585, %v583
    %v642 = vpack.c.b16 %v586, %v584
    %v643 = vpack.c.b16 %v589, %v587
    %v644 = vpack.c.b16 %v590, %v588
    %v645 = vpack.c.b16 %v593, %v591
    %v646 = vpack.c.b16 %v594, %v592
    %v647 = vpack.c.b16 %v597, %v595
    %v648 = vpack.c.b16 %v598, %v596
    %v649 = vpack.c.b16 %v601, %v599
    %v650 = vpack.c.b16 %v602, %v600
    %v651 = vpack.c.b16 %v605, %v603
    %v652 = vpack.c.b16 %v606, %v604
    %v653 = vpack.c.b16 %v609, %v607
    %v654 = vpack.c.b16 %v610, %v608
    %v655 = vpack.c.b16 %v613, %v611
    %v656 = vpack.c.b16 %v614, %v612
    %v657 = vpack.c.b16 %v617, %v615
    %v658 = vpack.c.b16 %v618, %v616
    %v659 = vpack.c.b16 %v621, %v619
    %v660 = vpack.c.b16 %v622, %v620
    %v661 = vpack.c.b16 %v625, %v623
    %v662 = vpack.c.b16 %v626, %v624
    %v663 = vpack.c.b16 %v629, %v627
    %v664 = vpack.c.b16 %v630, %v628
    %v665 = vpack.c.b16 %v633, %v631
    %v666 = vpack.c.b16 %v634, %v632
    %699 = vmatprep.subr.bf16.mxu0 %v636
    %700 = vmatpush1.bf16.msra.mxu0 %v635
    %701 = vmatprep.subr.bf16.mxu0 %v638
    %702 = vmatpush1.bf16.msra.mxu0 %v637
    %703 = vmatprep.subr.bf16.mxu0 %v640
    %704 = vmatpush1.bf16.msra.mxu0 %v639
    %705 = vmatprep.subr.bf16.mxu0 %v642
    %706 = vmatpush1.bf16.msra.mxu0 %v641
    %707 = vmatprep.subr.bf16.mxu0 %v644
    %708 = vmatpush1.bf16.msra.mxu0 %v643
    %709 = vmatprep.subr.bf16.mxu0 %v646
    %710 = vmatpush1.bf16.msra.mxu0 %v645
    %711 = vmatprep.subr.bf16.mxu0 %v648
    %712 = vmatpush1.bf16.msra.mxu0 %v647
    %713 = vmatprep.subr.bf16.mxu0 %v650
    %714 = vmatpush1.bf16.msra.mxu0 %v649
    %715 = vmatprep.subr.bf16.mxu0 %v652
    %716 = vmatpush1.bf16.msra.mxu0 %v651
    %717 = vmatprep.subr.bf16.mxu0 %v654
    %718 = vmatpush1.bf16.msra.mxu0 %v653
    %719 = vmatprep.subr.bf16.mxu0 %v656
    %720 = vmatpush1.bf16.msra.mxu0 %v655
    %721 = vmatprep.subr.bf16.mxu0 %v658
    %722 = vmatpush1.bf16.msra.mxu0 %v657
    %723 = vmatprep.subr.bf16.mxu0 %v660
    %724 = vmatpush1.bf16.msra.mxu0 %v659
    %725 = vmatprep.subr.bf16.mxu0 %v662
    %726 = vmatpush1.bf16.msra.mxu0 %v661
    %727 = vmatprep.subr.bf16.mxu0 %v664
    %728 = vmatpush1.bf16.msra.mxu0 %v663
    %729 = vmatprep.subr.bf16.mxu0 %v666
    %730 = vmatpush1.bf16.msra.mxu0 %v665
    %731 = vmatprep.mubr.bf16.mxu0 %v459
    %732 = vmatmul.mubr.bf16.gmra.mrb[0].mxu0 %v458
    %v733 = vpop.f32.mrb[0].mxu0
    %v734 = vadd.f32 0.0, %v733
    %v735 = vpop.f32.mrb[0].mxu0
    %v736 = vadd.f32 0.0, %v735
    %v737 = vpop.f32.mrb[0].mxu0
    %v738 = vadd.f32 0.0, %v737
    %v739 = vpop.f32.mrb[0].mxu0
    %v740 = vadd.f32 0.0, %v739
    %741 = vmatprep.mubr.bf16.mxu0 %v461
    %742 = vmatmul.mubr.bf16.gmra.mrb[0].mxu0 %v460
    %v743 = vpop.f32.mrb[0].mxu0
    %v744 = vadd.f32 0.0, %v743
    %v745 = vpop.f32.mrb[0].mxu0
    %v746 = vadd.f32 0.0, %v745
    %v747 = vpop.f32.mrb[0].mxu0
    %v748 = vadd.f32 0.0, %v747
    %v749 = vpop.f32.mrb[0].mxu0
    %v750 = vadd.f32 0.0, %v749
    %751 = vmatprep.mubr.bf16.mxu0 %v463
    %752 = vmatmul.mubr.bf16.gmra.mrb[0].mxu0 %v462
    %v753 = vpop.f32.mrb[0].mxu0
    %v754 = vadd.f32 0.0, %v753
    %v755 = vpop.f32.mrb[0].mxu0
    %v756 = vadd.f32 0.0, %v755
    %v757 = vpop.f32.mrb[0].mxu0
    %v758 = vadd.f32 0.0, %v757
    %v759 = vpop.f32.mrb[0].mxu0
    %v760 = vadd.f32 0.0, %v759
    %761 = vmatprep.mubr.bf16.mxu0 %v465
    %762 = vmatmul.mubr.bf16.gmra.mrb[0].mxu0 %v464
    %v763 = vpop.f32.mrb[0].mxu0
    %v764 = vadd.f32 0.0, %v763
    %v765 = vpop.f32.mrb[0].mxu0
    %v766 = vadd.f32 0.0, %v765
    %v767 = vpop.f32.mrb[0].mxu0
    %v768 = vadd.f32 0.0, %v767
    %v769 = vpop.f32.mrb[0].mxu0
    %v770 = vadd.f32 0.0, %v769
    %771 = vdwg.mxu0
    %v804 = vunpack.c.l.b16 %v474
    %v805 = vunpack.c.h.b16 %v474
    %v806 = vunpack.c.l.b16 %v475
    %v807 = vunpack.c.h.b16 %v475
    %v808 = vunpack.c.l.b16 %v476
    %v809 = vunpack.c.h.b16 %v476
    %v810 = vunpack.c.l.b16 %v477
    %v811 = vunpack.c.h.b16 %v477
    %v812 = vunpack.c.l.b16 %v478
    %v813 = vunpack.c.h.b16 %v478
    %v814 = vunpack.c.l.b16 %v479
    %v815 = vunpack.c.h.b16 %v479
    %v816 = vunpack.c.l.b16 %v480
    %v817 = vunpack.c.h.b16 %v480
    %v818 = vunpack.c.l.b16 %v481
    %v819 = vunpack.c.h.b16 %v481
    %v820 = vunpack.c.l.b16 %v482
    %v821 = vunpack.c.h.b16 %v482
    %v822 = vunpack.c.l.b16 %v483
    %v823 = vunpack.c.h.b16 %v483
    %v824 = vunpack.c.l.b16 %v484
    %v825 = vunpack.c.h.b16 %v484
    %v826 = vunpack.c.l.b16 %v485
    %v827 = vunpack.c.h.b16 %v485
    %v828 = vunpack.c.l.b16 %v486
    %v829 = vunpack.c.h.b16 %v486
    %v830 = vunpack.c.l.b16 %v487
    %v831 = vunpack.c.h.b16 %v487
    %v832 = vunpack.c.l.b16 %v488
    %v833 = vunpack.c.h.b16 %v488
    %v834 = vunpack.c.l.b16 %v489
    %v835 = vunpack.c.h.b16 %v489
    %v836 = vunpack.c.l.b16 %v490
    %v837 = vunpack.c.h.b16 %v490
    %v838 = vunpack.c.l.b16 %v491
    %v839 = vunpack.c.h.b16 %v491
    %v840 = vunpack.c.l.b16 %v492
    %v841 = vunpack.c.h.b16 %v492
    %v842 = vunpack.c.l.b16 %v493
    %v843 = vunpack.c.h.b16 %v493
    %v844 = vunpack.c.l.b16 %v494
    %v845 = vunpack.c.h.b16 %v494
    %v846 = vunpack.c.l.b16 %v495
    %v847 = vunpack.c.h.b16 %v495
    %v848 = vunpack.c.l.b16 %v496
    %v849 = vunpack.c.h.b16 %v496
    %v850 = vunpack.c.l.b16 %v497
    %v851 = vunpack.c.h.b16 %v497
    %v852 = vunpack.c.l.b16 %v498
    %v853 = vunpack.c.h.b16 %v498
    %v854 = vunpack.c.l.b16 %v499
    %v855 = vunpack.c.h.b16 %v499
    %v856 = vunpack.c.l.b16 %v500
    %v857 = vunpack.c.h.b16 %v500
    %v858 = vunpack.c.l.b16 %v501
    %v859 = vunpack.c.h.b16 %v501
    %v860 = vunpack.c.l.b16 %v502
    %v861 = vunpack.c.h.b16 %v502
    %v862 = vunpack.c.l.b16 %v503
    %v863 = vunpack.c.h.b16 %v503
    %v864 = vunpack.c.l.b16 %v504
    %v865 = vunpack.c.h.b16 %v504
    %v866 = vunpack.c.l.b16 %v505
    %v867 = vunpack.c.h.b16 %v505
    %v868 = vpack.c.b16 %v806, %v804
    %v869 = vpack.c.b16 %v807, %v805
    %v870 = vpack.c.b16 %v810, %v808
    %v871 = vpack.c.b16 %v811, %v809
    %v872 = vpack.c.b16 %v814, %v812
    %v873 = vpack.c.b16 %v815, %v813
    %v874 = vpack.c.b16 %v818, %v816
    %v875 = vpack.c.b16 %v819, %v817
    %v876 = vpack.c.b16 %v822, %v820
    %v877 = vpack.c.b16 %v823, %v821
    %v878 = vpack.c.b16 %v826, %v824
    %v879 = vpack.c.b16 %v827, %v825
    %v880 = vpack.c.b16 %v830, %v828
    %v881 = vpack.c.b16 %v831, %v829
    %v882 = vpack.c.b16 %v834, %v832
    %v883 = vpack.c.b16 %v835, %v833
    %v884 = vpack.c.b16 %v838, %v836
    %v885 = vpack.c.b16 %v839, %v837
    %v886 = vpack.c.b16 %v842, %v840
    %v887 = vpack.c.b16 %v843, %v841
    %v888 = vpack.c.b16 %v846, %v844
    %v889 = vpack.c.b16 %v847, %v845
    %v890 = vpack.c.b16 %v850, %v848
    %v891 = vpack.c.b16 %v851, %v849
    %v892 = vpack.c.b16 %v854, %v852
    %v893 = vpack.c.b16 %v855, %v853
    %v894 = vpack.c.b16 %v858, %v856
    %v895 = vpack.c.b16 %v859, %v857
    %v896 = vpack.c.b16 %v862, %v860
    %v897 = vpack.c.b16 %v863, %v861
    %v898 = vpack.c.b16 %v866, %v864
    %v899 = vpack.c.b16 %v867, %v865
    %932 = vmatprep.subr.bf16.mxu0 %v869
    %933 = vmatpush1.bf16.msra.mxu0 %v868
    %934 = vmatprep.subr.bf16.mxu0 %v871
    %935 = vmatpush1.bf16.msra.mxu0 %v870
    %936 = vmatprep.subr.bf16.mxu0 %v873
    %937 = vmatpush1.bf16.msra.mxu0 %v872
    %938 = vmatprep.subr.bf16.mxu0 %v875
    %939 = vmatpush1.bf16.msra.mxu0 %v874
    %940 = vmatprep.subr.bf16.mxu0 %v877
    %941 = vmatpush1.bf16.msra.mxu0 %v876
    %942 = vmatprep.subr.bf16.mxu0 %v879
    %943 = vmatpush1.bf16.msra.mxu0 %v878
    %944 = vmatprep.subr.bf16.mxu0 %v881
    %945 = vmatpush1.bf16.msra.mxu0 %v880
    %946 = vmatprep.subr.bf16.mxu0 %v883
    %947 = vmatpush1.bf16.msra.mxu0 %v882
    %948 = vmatprep.subr.bf16.mxu0 %v885
    %949 = vmatpush1.bf16.msra.mxu0 %v884
    %950 = vmatprep.subr.bf16.mxu0 %v887
    %951 = vmatpush1.bf16.msra.mxu0 %v886
    %952 = vmatprep.subr.bf16.mxu0 %v889
    %953 = vmatpush1.bf16.msra.mxu0 %v888
    %954 = vmatprep.subr.bf16.mxu0 %v891
    %955 = vmatpush1.bf16.msra.mxu0 %v890
    %956 = vmatprep.subr.bf16.mxu0 %v893
    %957 = vmatpush1.bf16.msra.mxu0 %v892
    %958 = vmatprep.subr.bf16.mxu0 %v895
    %959 = vmatpush1.bf16.msra.mxu0 %v894
    %960 = vmatprep.subr.bf16.mxu0 %v897
    %961 = vmatpush1.bf16.msra.mxu0 %v896
    %962 = vmatprep.subr.bf16.mxu0 %v899
    %963 = vmatpush1.bf16.msra.mxu0 %v898
    %964 = vmatprep.mubr.bf16.mxu0 %v451
    %965 = vmatmul.mubr.bf16.gmra.mrb[0].mxu0 %v450
    %v966 = vpop.f32.mrb[0].mxu0
    %v967 = vadd.f32 %v734, %v966
    %v968 = vpop.f32.mrb[0].mxu0
    %v969 = vadd.f32 %v736, %v968
    %v970 = vpop.f32.mrb[0].mxu0
    %v971 = vadd.f32 %v738, %v970
    %v972 = vpop.f32.mrb[0].mxu0
    %v973 = vadd.f32 %v740, %v972
    %974 = vmatprep.mubr.bf16.mxu0 %v453
    %975 = vmatmul.mubr.bf16.gmra.mrb[0].mxu0 %v452
    %v976 = vpop.f32.mrb[0].mxu0
    %v977 = vadd.f32 %v744, %v976
    %v978 = vpop.f32.mrb[0].mxu0
    %v979 = vadd.f32 %v746, %v978
    %v980 = vpop.f32.mrb[0].mxu0
    %v981 = vadd.f32 %v748, %v980
    %v982 = vpop.f32.mrb[0].mxu0
    %v983 = vadd.f32 %v750, %v982
    %984 = vmatprep.mubr.bf16.mxu0 %v455
    %985 = vmatmul.mubr.bf16.gmra.mrb[0].mxu0 %v454
    %v986 = vpop.f32.mrb[0].mxu0
    %v987 = vadd.f32 %v754, %v986
    %v988 = vpop.f32.mrb[0].mxu0
    %v989 = vadd.f32 %v756, %v988
    %v990 = vpop.f32.mrb[0].mxu0
    %v991 = vadd.f32 %v758, %v990
    %v992 = vpop.f32.mrb[0].mxu0
    %v993 = vadd.f32 %v760, %v992
    %994 = vmatprep.mubr.bf16.mxu0 %v457
    %995 = vmatmul.mubr.bf16.gmra.mrb[0].mxu0 %v456
    %v996 = vpop.f32.mrb[0].mxu0
    %v997 = vadd.f32 %v764, %v996
    %v998 = vpop.f32.mrb[0].mxu0
    %v999 = vadd.f32 %v766, %v998
    %v1000 = vpop.f32.mrb[0].mxu0
    %v1001 = vadd.f32 %v768, %v1000
    %v1002 = vpop.f32.mrb[0].mxu0
    %v1003 = vadd.f32 %v770, %v1002
    %1004 = vdwg.mxu0
    %s1005 = scalar_lea.vmem [#allocation7], 512
    %v1006 = vld [vmem:[%s1005] sm:$0xff]
    %v1007 = vld [vmem:[%s1005 + $0x8] sm:$0xff]
    %v1008 = vld [vmem:[%s1005 + $0x10] sm:$0xff]
    %v1009 = vld [vmem:[%s1005 + $0x18] sm:$0xff]
    %v1010 = vld [vmem:[%s1005 + $0x20] sm:$0xff]
    %v1011 = vld [vmem:[%s1005 + $0x28] sm:$0xff]
    %v1012 = vld [vmem:[%s1005 + $0x30] sm:$0xff]
    %v1013 = vld [vmem:[%s1005 + $0x38] sm:$0xff]
    %v1014 = vld [vmem:[%s1005 + $0x40] sm:$0xff]
    %v1015 = vld [vmem:[%s1005 + $0x48] sm:$0xff]
    %v1016 = vld [vmem:[%s1005 + $0x50] sm:$0xff]
    %v1017 = vld [vmem:[%s1005 + $0x58] sm:$0xff]
    %v1018 = vld [vmem:[%s1005 + $0x60] sm:$0xff]
    %v1019 = vld [vmem:[%s1005 + $0x68] sm:$0xff]
    %v1020 = vld [vmem:[%s1005 + $0x70] sm:$0xff]
    %v1021 = vld [vmem:[%s1005 + $0x78] sm:$0xff]
    %v1022 = vld [vmem:[%s1005 + $0x80] sm:$0xff]
    %v1023 = vld [vmem:[%s1005 + $0x88] sm:$0xff]
    %v1024 = vld [vmem:[%s1005 + $0x90] sm:$0xff]
    %v1025 = vld [vmem:[%s1005 + $0x98] sm:$0xff]
    %v1026 = vld [vmem:[%s1005 + $0xa0] sm:$0xff]
    %v1027 = vld [vmem:[%s1005 + $0xa8] sm:$0xff]
    %v1028 = vld [vmem:[%s1005 + $0xb0] sm:$0xff]
    %v1029 = vld [vmem:[%s1005 + $0xb8] sm:$0xff]
    %v1030 = vld [vmem:[%s1005 + $0xc0] sm:$0xff]
    %v1031 = vld [vmem:[%s1005 + $0xc8] sm:$0xff]
    %v1032 = vld [vmem:[%s1005 + $0xd0] sm:$0xff]
    %v1033 = vld [vmem:[%s1005 + $0xd8] sm:$0xff]
    %v1034 = vld [vmem:[%s1005 + $0xe0] sm:$0xff]
    %v1035 = vld [vmem:[%s1005 + $0xe8] sm:$0xff]
    %v1036 = vld [vmem:[%s1005 + $0xf0] sm:$0xff]
    %v1037 = vld [vmem:[%s1005 + $0xf8] sm:$0xff]
    %v1070 = vunpack.c.l.b16 %v1006
    %v1071 = vunpack.c.h.b16 %v1006
    %v1072 = vunpack.c.l.b16 %v1007
    %v1073 = vunpack.c.h.b16 %v1007
    %v1074 = vunpack.c.l.b16 %v1008
    %v1075 = vunpack.c.h.b16 %v1008
    %v1076 = vunpack.c.l.b16 %v1009
    %v1077 = vunpack.c.h.b16 %v1009
    %v1078 = vunpack.c.l.b16 %v1010
    %v1079 = vunpack.c.h.b16 %v1010
    %v1080 = vunpack.c.l.b16 %v1011
    %v1081 = vunpack.c.h.b16 %v1011
    %v1082 = vunpack.c.l.b16 %v1012
    %v1083 = vunpack.c.h.b16 %v1012
    %v1084 = vunpack.c.l.b16 %v1013
    %v1085 = vunpack.c.h.b16 %v1013
    %v1086 = vunpack.c.l.b16 %v1014
    %v1087 = vunpack.c.h.b16 %v1014
    %v1088 = vunpack.c.l.b16 %v1015
    %v1089 = vunpack.c.h.b16 %v1015
    %v1090 = vunpack.c.l.b16 %v1016
    %v1091 = vunpack.c.h.b16 %v1016
    %v1092 = vunpack.c.l.b16 %v1017
    %v1093 = vunpack.c.h.b16 %v1017
    %v1094 = vunpack.c.l.b16 %v1018
    %v1095 = vunpack.c.h.b16 %v1018
    %v1096 = vunpack.c.l.b16 %v1019
    %v1097 = vunpack.c.h.b16 %v1019
    %v1098 = vunpack.c.l.b16 %v1020
    %v1099 = vunpack.c.h.b16 %v1020
    %v1100 = vunpack.c.l.b16 %v1021
    %v1101 = vunpack.c.h.b16 %v1021
    %v1102 = vunpack.c.l.b16 %v1022
    %v1103 = vunpack.c.h.b16 %v1022
    %v1104 = vunpack.c.l.b16 %v1023
    %v1105 = vunpack.c.h.b16 %v1023
    %v1106 = vunpack.c.l.b16 %v1024
    %v1107 = vunpack.c.h.b16 %v1024
    %v1108 = vunpack.c.l.b16 %v1025
    %v1109 = vunpack.c.h.b16 %v1025
    %v1110 = vunpack.c.l.b16 %v1026
    %v1111 = vunpack.c.h.b16 %v1026
    %v1112 = vunpack.c.l.b16 %v1027
    %v1113 = vunpack.c.h.b16 %v1027
    %v1114 = vunpack.c.l.b16 %v1028
    %v1115 = vunpack.c.h.b16 %v1028
    %v1116 = vunpack.c.l.b16 %v1029
    %v1117 = vunpack.c.h.b16 %v1029
    %v1118 = vunpack.c.l.b16 %v1030
    %v1119 = vunpack.c.h.b16 %v1030
    %v1120 = vunpack.c.l.b16 %v1031
    %v1121 = vunpack.c.h.b16 %v1031
    %v1122 = vunpack.c.l.b16 %v1032
    %v1123 = vunpack.c.h.b16 %v1032
    %v1124 = vunpack.c.l.b16 %v1033
    %v1125 = vunpack.c.h.b16 %v1033
    %v1126 = vunpack.c.l.b16 %v1034
    %v1127 = vunpack.c.h.b16 %v1034
    %v1128 = vunpack.c.l.b16 %v1035
    %v1129 = vunpack.c.h.b16 %v1035
    %v1130 = vunpack.c.l.b16 %v1036
    %v1131 = vunpack.c.h.b16 %v1036
    %v1132 = vunpack.c.l.b16 %v1037
    %v1133 = vunpack.c.h.b16 %v1037
    %v1134 = vpack.c.b16 %v1072, %v1070
    %v1135 = vpack.c.b16 %v1073, %v1071
    %v1136 = vpack.c.b16 %v1076, %v1074
    %v1137 = vpack.c.b16 %v1077, %v1075
    %v1138 = vpack.c.b16 %v1080, %v1078
    %v1139 = vpack.c.b16 %v1081, %v1079
    %v1140 = vpack.c.b16 %v1084, %v1082
    %v1141 = vpack.c.b16 %v1085, %v1083
    %v1142 = vpack.c.b16 %v1088, %v1086
    %v1143 = vpack.c.b16 %v1089, %v1087
    %v1144 = vpack.c.b16 %v1092, %v1090
    %v1145 = vpack.c.b16 %v1093, %v1091
    %v1146 = vpack.c.b16 %v1096, %v1094
    %v1147 = vpack.c.b16 %v1097, %v1095
    %v1148 = vpack.c.b16 %v1100, %v1098
    %v1149 = vpack.c.b16 %v1101, %v1099
    %v1150 = vpack.c.b16 %v1104, %v1102
    %v1151 = vpack.c.b16 %v1105, %v1103
    %v1152 = vpack.c.b16 %v1108, %v1106
    %v1153 = vpack.c.b16 %v1109, %v1107
    %v1154 = vpack.c.b16 %v1112, %v1110
    %v1155 = vpack.c.b16 %v1113, %v1111
    %v1156 = vpack.c.b16 %v1116, %v1114
    %v1157 = vpack.c.b16 %v1117, %v1115
    %v1158 = vpack.c.b16 %v1120, %v1118
    %v1159 = vpack.c.b16 %v1121, %v1119
    %v1160 = vpack.c.b16 %v1124, %v1122
    %v1161 = vpack.c.b16 %v1125, %v1123
    %v1162 = vpack.c.b16 %v1128, %v1126
    %v1163 = vpack.c.b16 %v1129, %v1127
    %v1164 = vpack.c.b16 %v1132, %v1130
    %v1165 = vpack.c.b16 %v1133, %v1131
    %1198 = vmatprep.subr.bf16.mxu0 %v1135
    %1199 = vmatpush1.bf16.msra.mxu0 %v1134
    %1200 = vmatprep.subr.bf16.mxu0 %v1137
    %1201 = vmatpush1.bf16.msra.mxu0 %v1136
    %1202 = vmatprep.subr.bf16.mxu0 %v1139
    %1203 = vmatpush1.bf16.msra.mxu0 %v1138
    %1204 = vmatprep.subr.bf16.mxu0 %v1141
    %1205 = vmatpush1.bf16.msra.mxu0 %v1140
    %1206 = vmatprep.subr.bf16.mxu0 %v1143
    %1207 = vmatpush1.bf16.msra.mxu0 %v1142
    %1208 = vmatprep.subr.bf16.mxu0 %v1145
    %1209 = vmatpush1.bf16.msra.mxu0 %v1144
    %1210 = vmatprep.subr.bf16.mxu0 %v1147
    %1211 = vmatpush1.bf16.msra.mxu0 %v1146
    %1212 = vmatprep.subr.bf16.mxu0 %v1149
    %1213 = vmatpush1.bf16.msra.mxu0 %v1148
    %1214 = vmatprep.subr.bf16.mxu0 %v1151
    %1215 = vmatpush1.bf16.msra.mxu0 %v1150
    %1216 = vmatprep.subr.bf16.mxu0 %v1153
    %1217 = vmatpush1.bf16.msra.mxu0 %v1152
    %1218 = vmatprep.subr.bf16.mxu0 %v1155
    %1219 = vmatpush1.bf16.msra.mxu0 %v1154
    %1220 = vmatprep.subr.bf16.mxu0 %v1157
    %1221 = vmatpush1.bf16.msra.mxu0 %v1156
    %1222 = vmatprep.subr.bf16.mxu0 %v1159
    %1223 = vmatpush1.bf16.msra.mxu0 %v1158
    %1224 = vmatprep.subr.bf16.mxu0 %v1161
    %1225 = vmatpush1.bf16.msra.mxu0 %v1160
    %1226 = vmatprep.subr.bf16.mxu0 %v1163
    %1227 = vmatpush1.bf16.msra.mxu0 %v1162
    %1228 = vmatprep.subr.bf16.mxu0 %v1165
    %1229 = vmatpush1.bf16.msra.mxu0 %v1164
    %1230 = vmatprep.mubr.bf16.mxu0 %v467
    %1231 = vmatmul.mubr.bf16.gmra.mrb[0].mxu0 %v466
    %v1232 = vpop.f32.mrb[0].mxu0
    %v1233 = vadd.f32 0.0, %v1232
    %v1234 = vpop.f32.mrb[0].mxu0
    %v1235 = vadd.f32 0.0, %v1234
    %v1236 = vpop.f32.mrb[0].mxu0
    %v1237 = vadd.f32 0.0, %v1236
    %v1238 = vpop.f32.mrb[0].mxu0
    %v1239 = vadd.f32 0.0, %v1238
    %1240 = vmatprep.mubr.bf16.mxu0 %v469
    %1241 = vmatmul.mubr.bf16.gmra.mrb[0].mxu0 %v468
    %v1242 = vpop.f32.mrb[0].mxu0
    %v1243 = vadd.f32 0.0, %v1242
    %v1244 = vpop.f32.mrb[0].mxu0
    %v1245 = vadd.f32 0.0, %v1244
    %v1246 = vpop.f32.mrb[0].mxu0
    %v1247 = vadd.f32 0.0, %v1246
    %v1248 = vpop.f32.mrb[0].mxu0
    %v1249 = vadd.f32 0.0, %v1248
    %1250 = vmatprep.mubr.bf16.mxu0 %v471
    %1251 = vmatmul.mubr.bf16.gmra.mrb[0].mxu0 %v470
    %v1252 = vpop.f32.mrb[0].mxu0
    %v1253 = vadd.f32 0.0, %v1252
    %v1254 = vpop.f32.mrb[0].mxu0
    %v1255 = vadd.f32 0.0, %v1254
    %v1256 = vpop.f32.mrb[0].mxu0
    %v1257 = vadd.f32 0.0, %v1256
    %v1258 = vpop.f32.mrb[0].mxu0
    %v1259 = vadd.f32 0.0, %v1258
    %1260 = vmatprep.mubr.bf16.mxu0 %v473
    %1261 = vmatmul.mubr.bf16.gmra.mrb[0].mxu0 %v472
    %v1262 = vpop.f32.mrb[0].mxu0
    %v1263 = vadd.f32 0.0, %v1262
    %v1264 = vpop.f32.mrb[0].mxu0
    %v1265 = vadd.f32 0.0, %v1264
    %v1266 = vpop.f32.mrb[0].mxu0
    %v1267 = vadd.f32 0.0, %v1266
    %v1268 = vpop.f32.mrb[0].mxu0
    %v1269 = vadd.f32 0.0, %v1268
    %1270 = vdwg.mxu0
    %v1271 = vadd.f32 %v967, %v1233
    %v1272 = vadd.f32 %v969, %v1235
    %v1273 = vadd.f32 %v971, %v1237
    %v1274 = vadd.f32 %v973, %v1239
    %v1275 = vadd.f32 %v977, %v1243
    %v1276 = vadd.f32 %v979, %v1245
    %v1277 = vadd.f32 %v981, %v1247
    %v1278 = vadd.f32 %v983, %v1249
    %v1279 = vadd.f32 %v987, %v1253
    %v1280 = vadd.f32 %v989, %v1255
    %v1281 = vadd.f32 %v991, %v1257
    %v1282 = vadd.f32 %v993, %v1259
    %v1283 = vadd.f32 %v997, %v1263
    %v1284 = vadd.f32 %v999, %v1265
    %v1285 = vadd.f32 %v1001, %v1267
    %v1286 = vadd.f32 %v1003, %v1269
    %v1287 = vld [vmem:[#allocation8] sm:$0xff]
    %v1288 = vld [vmem:[#allocation8 + $0x8] sm:$0xff]
    %v1289 = vld [vmem:[#allocation8 + $0x10] sm:$0xff]
    %v1290 = vld [vmem:[#allocation8 + $0x18] sm:$0xff]
    %v1291 = vld [vmem:[#allocation8 + $0x20] sm:$0xff]
    %v1292 = vld [vmem:[#allocation8 + $0x28] sm:$0xff]
    %v1293 = vld [vmem:[#allocation8 + $0x30] sm:$0xff]
    %v1294 = vld [vmem:[#allocation8 + $0x38] sm:$0xff]
    %v1295 = vld [vmem:[#allocation8 + $0x40] sm:$0xff]
    %v1296 = vld [vmem:[#allocation8 + $0x48] sm:$0xff]
    %v1297 = vld [vmem:[#allocation8 + $0x50] sm:$0xff]
    %v1298 = vld [vmem:[#allocation8 + $0x58] sm:$0xff]
    %v1299 = vld [vmem:[#allocation8 + $0x60] sm:$0xff]
    %v1300 = vld [vmem:[#allocation8 + $0x68] sm:$0xff]
    %v1301 = vld [vmem:[#allocation8 + $0x70] sm:$0xff]
    %v1302 = vld [vmem:[#allocation8 + $0x78] sm:$0xff]
    %v1303 = vadd.f32 %v1271, %v1287
    %v1304 = vadd.f32 %v1272, %v1288
    %v1305 = vadd.f32 %v1273, %v1289
    %v1306 = vadd.f32 %v1274, %v1290
    %v1307 = vadd.f32 %v1275, %v1291
    %v1308 = vadd.f32 %v1276, %v1292
    %v1309 = vadd.f32 %v1277, %v1293
    %v1310 = vadd.f32 %v1278, %v1294
    %v1311 = vadd.f32 %v1279, %v1295
    %v1312 = vadd.f32 %v1280, %v1296
    %v1313 = vadd.f32 %v1281, %v1297
    %v1314 = vadd.f32 %v1282, %v1298
    %v1315 = vadd.f32 %v1283, %v1299
    %v1316 = vadd.f32 %v1284, %v1300
    %v1317 = vadd.f32 %v1285, %v1301
    %v1318 = vadd.f32 %v1286, %v1302
    %v1319 = vmax.f32 %v1303, 0.0
    %v1320 = vmax.f32 %v1304, 0.0
    %v1321 = vmax.f32 %v1305, 0.0
    %v1322 = vmax.f32 %v1306, 0.0
    %v1323 = vmax.f32 %v1307, 0.0
    %v1324 = vmax.f32 %v1308, 0.0
    %v1325 = vmax.f32 %v1309, 0.0
    %v1326 = vmax.f32 %v1310, 0.0
    %v1327 = vmax.f32 %v1311, 0.0
    %v1328 = vmax.f32 %v1312, 0.0
    %v1329 = vmax.f32 %v1313, 0.0
    %v1330 = vmax.f32 %v1314, 0.0
    %v1331 = vmax.f32 %v1315, 0.0
    %v1332 = vmax.f32 %v1316, 0.0
    %v1333 = vmax.f32 %v1317, 0.0
    %v1334 = vmax.f32 %v1318, 0.0
    %v1335 = vpack.c.bf16 %v1321, %v1319
    %v1336 = vpack.c.bf16 %v1322, %v1320
    %v1337 = vpack.c.bf16 %v1325, %v1323
    %v1338 = vpack.c.bf16 %v1326, %v1324
    %v1339 = vpack.c.bf16 %v1329, %v1327
    %v1340 = vpack.c.bf16 %v1330, %v1328
    %v1341 = vpack.c.bf16 %v1333, %v1331
    %v1342 = vpack.c.bf16 %v1334, %v1332
    %v1343 = vld [vmem:[#allocation10] sm:$0xff]
    %v1344 = vld [vmem:[#allocation10 + $0x8] sm:$0xff]
    %v1345 = vld [vmem:[#allocation10 + $0x10] sm:$0xff]
    %v1346 = vld [vmem:[#allocation10 + $0x18] sm:$0xff]
    %v1347 = vld [vmem:[#allocation10 + $0x20] sm:$0xf]
    %v1348 = vld [vmem:[#allocation10 + $0x24] sm:$0xff]
    %v1349 = vld [vmem:[#allocation10 + $0x2c] sm:$0xff]
    %v1350 = vld [vmem:[#allocation10 + $0x34] sm:$0xff]
    %v1351 = vld [vmem:[#allocation10 + $0x3c] sm:$0xff]
    %v1352 = vld [vmem:[#allocation10 + $0x44] sm:$0xf]
    %v1353 = vld [vmem:[#allocation10 + $0x48] sm:$0xff]
    %v1354 = vld [vmem:[#allocation10 + $0x50] sm:$0xff]
    %v1355 = vld [vmem:[#allocation10 + $0x58] sm:$0xff]
    %v1356 = vld [vmem:[#allocation10 + $0x60] sm:$0xff]
    %v1357 = vld [vmem:[#allocation10 + $0x68] sm:$0xf]
    %v1358 = vld [vmem:[#allocation10 + $0x6c] sm:$0xff]
    %v1359 = vld [vmem:[#allocation10 + $0x74] sm:$0xff]
    %v1360 = vld [vmem:[#allocation10 + $0x7c] sm:$0xff]
    %v1361 = vld [vmem:[#allocation10 + $0x84] sm:$0xff]
    %v1362 = vld [vmem:[#allocation10 + $0x8c] sm:$0xf]
    %v1363 = vld [vmem:[#allocation10 + $0x90] sm:$0xff]
    %v1364 = vld [vmem:[#allocation10 + $0x98] sm:$0xff]
    %v1365 = vld [vmem:[#allocation10 + $0xa0] sm:$0xff]
    %v1366 = vld [vmem:[#allocation10 + $0xa8] sm:$0xff]
    %v1367 = vld [vmem:[#allocation10 + $0xb0] sm:$0xf]
    %v1368 = vld [vmem:[#allocation10 + $0xb4] sm:$0xff]
    %v1369 = vld [vmem:[#allocation10 + $0xbc] sm:$0xff]
    %v1370 = vld [vmem:[#allocation10 + $0xc4] sm:$0xff]
    %v1371 = vld [vmem:[#allocation10 + $0xcc] sm:$0xff]
    %v1372 = vld [vmem:[#allocation10 + $0xd4] sm:$0xf]
    %v1373 = vld [vmem:[#allocation10 + $0xd8] sm:$0xff]
    %v1374 = vld [vmem:[#allocation10 + $0xe0] sm:$0xff]
    %v1375 = vld [vmem:[#allocation10 + $0xe8] sm:$0xff]
    %v1376 = vld [vmem:[#allocation10 + $0xf0] sm:$0xff]
    %v1377 = vld [vmem:[#allocation10 + $0xf8] sm:$0xf]
    %v1378 = vld [vmem:[#allocation10 + $0xfc] sm:$0xff]
    %v1379 = vld [vmem:[#allocation10 + $0x104] sm:$0xff]
    %v1380 = vld [vmem:[#allocation10 + $0x10c] sm:$0xff]
    %v1381 = vld [vmem:[#allocation10 + $0x114] sm:$0xff]
    %v1382 = vld [vmem:[#allocation10 + $0x11c] sm:$0xf]
    %v1383 = vld [vmem:[#allocation10 + $0x120] sm:$0xff]
    %v1384 = vld [vmem:[#allocation10 + $0x128] sm:$0xff]
    %v1385 = vld [vmem:[#allocation10 + $0x130] sm:$0xff]
    %v1386 = vld [vmem:[#allocation10 + $0x138] sm:$0xff]
    %v1387 = vld [vmem:[#allocation10 + $0x140] sm:$0xf]
    %v1388 = vld [vmem:[#allocation10 + $0x144] sm:$0xff]
    %v1389 = vld [vmem:[#allocation10 + $0x14c] sm:$0xff]
    %v1390 = vld [vmem:[#allocation10 + $0x154] sm:$0xff]
    %v1391 = vld [vmem:[#allocation10 + $0x15c] sm:$0xff]
    %v1392 = vld [vmem:[#allocation10 + $0x164] sm:$0xf]
    %v1393 = vld [vmem:[#allocation10 + $0x168] sm:$0xff]
    %v1394 = vld [vmem:[#allocation10 + $0x170] sm:$0xff]
    %v1395 = vld [vmem:[#allocation10 + $0x178] sm:$0xff]
    %v1396 = vld [vmem:[#allocation10 + $0x180] sm:$0xff]
    %v1397 = vld [vmem:[#allocation10 + $0x188] sm:$0xf]
    %v1398 = vld [vmem:[#allocation10 + $0x18c] sm:$0xff]
    %v1399 = vld [vmem:[#allocation10 + $0x194] sm:$0xff]
    %v1400 = vld [vmem:[#allocation10 + $0x19c] sm:$0xff]
    %v1401 = vld [vmem:[#allocation10 + $0x1a4] sm:$0xff]
    %v1402 = vld [vmem:[#allocation10 + $0x1ac] sm:$0xf]
    %v1403 = vld [vmem:[#allocation10 + $0x1b0] sm:$0xff]
    %v1404 = vld [vmem:[#allocation10 + $0x1b8] sm:$0xff]
    %v1405 = vld [vmem:[#allocation10 + $0x1c0] sm:$0xff]
    %v1406 = vld [vmem:[#allocation10 + $0x1c8] sm:$0xff]
    %v1407 = vld [vmem:[#allocation10 + $0x1d0] sm:$0xf]
    %v1408 = vld [vmem:[#allocation10 + $0x1d4] sm:$0xff]
    %v1409 = vld [vmem:[#allocation10 + $0x1dc] sm:$0xff]
    %v1410 = vld [vmem:[#allocation10 + $0x1e4] sm:$0xff]
    %v1411 = vld [vmem:[#allocation10 + $0x1ec] sm:$0xff]
    %v1412 = vld [vmem:[#allocation10 + $0x1f4] sm:$0xf]
    %v1413 = vld [vmem:[#allocation10 + $0x1f8] sm:$0xff]
    %v1414 = vld [vmem:[#allocation10 + $0x200] sm:$0xff]
    %v1415 = vld [vmem:[#allocation10 + $0x208] sm:$0xff]
    %v1416 = vld [vmem:[#allocation10 + $0x210] sm:$0xff]
    %v1417 = vld [vmem:[#allocation10 + $0x218] sm:$0xf]
    %v1418 = vld [vmem:[#allocation10 + $0x21c] sm:$0xff]
    %v1419 = vld [vmem:[#allocation10 + $0x224] sm:$0xff]
    %v1420 = vld [vmem:[#allocation10 + $0x22c] sm:$0xff]
    %v1421 = vld [vmem:[#allocation10 + $0x234] sm:$0xff]
    %v1422 = vld [vmem:[#allocation10 + $0x23c] sm:$0xf]
    %v1423 = vld [vmem:[#allocation10 + $0x240] sm:$0xff]
    %v1424 = vld [vmem:[#allocation10 + $0x248] sm:$0xff]
    %v1425 = vld [vmem:[#allocation10 + $0x250] sm:$0xff]
    %v1426 = vld [vmem:[#allocation10 + $0x258] sm:$0xff]
    %v1427 = vld [vmem:[#allocation10 + $0x260] sm:$0xf]
    %v1428 = vld [vmem:[#allocation10 + $0x264] sm:$0xff]
    %v1429 = vld [vmem:[#allocation10 + $0x26c] sm:$0xff]
    %v1430 = vld [vmem:[#allocation10 + $0x274] sm:$0xff]
    %v1431 = vld [vmem:[#allocation10 + $0x27c] sm:$0xff]
    %v1432 = vld [vmem:[#allocation10 + $0x284] sm:$0xf]
    %v1433 = vld [vmem:[#allocation10 + $0x288] sm:$0xff]
    %v1434 = vld [vmem:[#allocation10 + $0x290] sm:$0xff]
    %v1435 = vld [vmem:[#allocation10 + $0x298] sm:$0xff]
    %v1436 = vld [vmem:[#allocation10 + $0x2a0] sm:$0xff]
    %v1437 = vld [vmem:[#allocation10 + $0x2a8] sm:$0xf]
    %v1438 = vld [vmem:[#allocation10 + $0x2ac] sm:$0xff]
    %v1439 = vld [vmem:[#allocation10 + $0x2b4] sm:$0xff]
    %v1440 = vld [vmem:[#allocation10 + $0x2bc] sm:$0xff]
    %v1441 = vld [vmem:[#allocation10 + $0x2c4] sm:$0xff]
    %v1442 = vld [vmem:[#allocation10 + $0x2cc] sm:$0xf]
    %v1443 = vld [vmem:[#allocation10 + $0x2d0] sm:$0xff]
    %v1444 = vld [vmem:[#allocation10 + $0x2d8] sm:$0xff]
    %v1445 = vld [vmem:[#allocation10 + $0x2e0] sm:$0xff]
    %v1446 = vld [vmem:[#allocation10 + $0x2e8] sm:$0xff]
    %v1447 = vld [vmem:[#allocation10 + $0x2f0] sm:$0xf]
    %v1448 = vld [vmem:[#allocation10 + $0x2f4] sm:$0xff]
    %v1449 = vld [vmem:[#allocation10 + $0x2fc] sm:$0xff]
    %v1450 = vld [vmem:[#allocation10 + $0x304] sm:$0xff]
    %v1451 = vld [vmem:[#allocation10 + $0x30c] sm:$0xff]
    %v1452 = vld [vmem:[#allocation10 + $0x314] sm:$0xf]
    %v1453 = vld [vmem:[#allocation10 + $0x318] sm:$0xff]
    %v1454 = vld [vmem:[#allocation10 + $0x320] sm:$0xff]
    %v1455 = vld [vmem:[#allocation10 + $0x328] sm:$0xff]
    %v1456 = vld [vmem:[#allocation10 + $0x330] sm:$0xff]
    %v1457 = vld [vmem:[#allocation10 + $0x338] sm:$0xf]
    %v1458 = vld [vmem:[#allocation10 + $0x33c] sm:$0xff]
    %v1459 = vld [vmem:[#allocation10 + $0x344] sm:$0xff]
    %v1460 = vld [vmem:[#allocation10 + $0x34c] sm:$0xff]
    %v1461 = vld [vmem:[#allocation10 + $0x354] sm:$0xff]
    %v1462 = vld [vmem:[#allocation10 + $0x35c] sm:$0xf]
    %v1463 = vld [vmem:[#allocation10 + $0x360] sm:$0xff]
    %v1464 = vld [vmem:[#allocation10 + $0x368] sm:$0xff]
    %v1465 = vld [vmem:[#allocation10 + $0x370] sm:$0xff]
    %v1466 = vld [vmem:[#allocation10 + $0x378] sm:$0xff]
    %v1467 = vld [vmem:[#allocation10 + $0x380] sm:$0xf]
    %v1468 = vld [vmem:[#allocation10 + $0x384] sm:$0xff]
    %v1469 = vld [vmem:[#allocation10 + $0x38c] sm:$0xff]
    %v1470 = vld [vmem:[#allocation10 + $0x394] sm:$0xff]
    %v1471 = vld [vmem:[#allocation10 + $0x39c] sm:$0xff]
    %v1472 = vld [vmem:[#allocation10 + $0x3a4] sm:$0xf]
    %v1473 = vld [vmem:[#allocation10 + $0x3a8] sm:$0xff]
    %v1474 = vld [vmem:[#allocation10 + $0x3b0] sm:$0xff]
    %v1475 = vld [vmem:[#allocation10 + $0x3b8] sm:$0xff]
    %v1476 = vld [vmem:[#allocation10 + $0x3c0] sm:$0xff]
    %v1477 = vld [vmem:[#allocation10 + $0x3c8] sm:$0xf]
    %v1478 = vld [vmem:[#allocation10 + $0x3cc] sm:$0xff]
    %v1479 = vld [vmem:[#allocation10 + $0x3d4] sm:$0xff]
    %v1480 = vld [vmem:[#allocation10 + $0x3dc] sm:$0xff]
    %v1481 = vld [vmem:[#allocation10 + $0x3e4] sm:$0xff]
    %v1482 = vld [vmem:[#allocation10 + $0x3ec] sm:$0xf]
    %v1483 = vld [vmem:[#allocation10 + $0x3f0] sm:$0xff]
    %v1484 = vld [vmem:[#allocation10 + $0x3f8] sm:$0xff]
    %v1485 = vld [vmem:[#allocation10 + $0x400] sm:$0xff]
    %v1486 = vld [vmem:[#allocation10 + $0x408] sm:$0xff]
    %v1487 = vld [vmem:[#allocation10 + $0x410] sm:$0xf]
    %v1488 = vld [vmem:[#allocation10 + $0x414] sm:$0xff]
    %v1489 = vld [vmem:[#allocation10 + $0x41c] sm:$0xff]
    %v1490 = vld [vmem:[#allocation10 + $0x424] sm:$0xff]
    %v1491 = vld [vmem:[#allocation10 + $0x42c] sm:$0xff]
    %v1492 = vld [vmem:[#allocation10 + $0x434] sm:$0xf]
    %v1493 = vld [vmem:[#allocation10 + $0x438] sm:$0xff]
    %v1494 = vld [vmem:[#allocation10 + $0x440] sm:$0xff]
    %v1495 = vld [vmem:[#allocation10 + $0x448] sm:$0xff]
    %v1496 = vld [vmem:[#allocation10 + $0x450] sm:$0xff]
    %v1497 = vld [vmem:[#allocation10 + $0x458] sm:$0xf]
    %v1498 = vld [vmem:[#allocation10 + $0x45c] sm:$0xff]
    %v1499 = vld [vmem:[#allocation10 + $0x464] sm:$0xff]
    %v1500 = vld [vmem:[#allocation10 + $0x46c] sm:$0xff]
    %v1501 = vld [vmem:[#allocation10 + $0x474] sm:$0xff]
    %v1502 = vld [vmem:[#allocation10 + $0x47c] sm:$0xf]
    %v1663 = vunpack.c.l.b16 %v1343
    %v1664 = vunpack.c.h.b16 %v1343
    %v1665 = vunpack.c.l.b16 %v1344
    %v1666 = vunpack.c.h.b16 %v1344
    %v1667 = vunpack.c.l.b16 %v1345
    %v1668 = vunpack.c.h.b16 %v1345
    %v1669 = vunpack.c.l.b16 %v1346
    %v1670 = vunpack.c.h.b16 %v1346
    %v1671 = vunpack.c.l.b16 %v1347
    %v1672 = vunpack.c.l.b16 %v1348
    %v1673 = vunpack.c.h.b16 %v1348
    %v1674 = vunpack.c.l.b16 %v1349
    %v1675 = vunpack.c.h.b16 %v1349
    %v1676 = vunpack.c.l.b16 %v1350
    %v1677 = vunpack.c.h.b16 %v1350
    %v1678 = vunpack.c.l.b16 %v1351
    %v1679 = vunpack.c.h.b16 %v1351
    %v1680 = vunpack.c.l.b16 %v1352
    %v1681 = vunpack.c.l.b16 %v1353
    %v1682 = vunpack.c.h.b16 %v1353
    %v1683 = vunpack.c.l.b16 %v1354
    %v1684 = vunpack.c.h.b16 %v1354
    %v1685 = vunpack.c.l.b16 %v1355
    %v1686 = vunpack.c.h.b16 %v1355
    %v1687 = vunpack.c.l.b16 %v1356
    %v1688 = vunpack.c.h.b16 %v1356
    %v1689 = vunpack.c.l.b16 %v1357
    %v1690 = vunpack.c.l.b16 %v1358
    %v1691 = vunpack.c.h.b16 %v1358
    %v1692 = vunpack.c.l.b16 %v1359
    %v1693 = vunpack.c.h.b16 %v1359
    %v1694 = vunpack.c.l.b16 %v1360
    %v1695 = vunpack.c.h.b16 %v1360
    %v1696 = vunpack.c.l.b16 %v1361
    %v1697 = vunpack.c.h.b16 %v1361
    %v1698 = vunpack.c.l.b16 %v1362
    %v1699 = vunpack.c.l.b16 %v1363
    %v1700 = vunpack.c.h.b16 %v1363
    %v1701 = vunpack.c.l.b16 %v1364
    %v1702 = vunpack.c.h.b16 %v1364
    %v1703 = vunpack.c.l.b16 %v1365
    %v1704 = vunpack.c.h.b16 %v1365
    %v1705 = vunpack.c.l.b16 %v1366
    %v1706 = vunpack.c.h.b16 %v1366
    %v1707 = vunpack.c.l.b16 %v1367
    %v1708 = vunpack.c.l.b16 %v1368
    %v1709 = vunpack.c.h.b16 %v1368
    %v1710 = vunpack.c.l.b16 %v1369
    %v1711 = vunpack.c.h.b16 %v1369
    %v1712 = vunpack.c.l.b16 %v1370
    %v1713 = vunpack.c.h.b16 %v1370
    %v1714 = vunpack.c.l.b16 %v1371
    %v1715 = vunpack.c.h.b16 %v1371
    %v1716 = vunpack.c.l.b16 %v1372
    %v1717 = vunpack.c.l.b16 %v1373
    %v1718 = vunpack.c.h.b16 %v1373
    %v1719 = vunpack.c.l.b16 %v1374
    %v1720 = vunpack.c.h.b16 %v1374
    %v1721 = vunpack.c.l.b16 %v1375
    %v1722 = vunpack.c.h.b16 %v1375
    %v1723 = vunpack.c.l.b16 %v1376
    %v1724 = vunpack.c.h.b16 %v1376
    %v1725 = vunpack.c.l.b16 %v1377
    %v1726 = vunpack.c.l.b16 %v1378
    %v1727 = vunpack.c.h.b16 %v1378
    %v1728 = vunpack.c.l.b16 %v1379
    %v1729 = vunpack.c.h.b16 %v1379
    %v1730 = vunpack.c.l.b16 %v1380
    %v1731 = vunpack.c.h.b16 %v1380
    %v1732 = vunpack.c.l.b16 %v1381
    %v1733 = vunpack.c.h.b16 %v1381
    %v1734 = vunpack.c.l.b16 %v1382
    %v1735 = vunpack.c.l.b16 %v1383
    %v1736 = vunpack.c.h.b16 %v1383
    %v1737 = vunpack.c.l.b16 %v1384
    %v1738 = vunpack.c.h.b16 %v1384
    %v1739 = vunpack.c.l.b16 %v1385
    %v1740 = vunpack.c.h.b16 %v1385
    %v1741 = vunpack.c.l.b16 %v1386
    %v1742 = vunpack.c.h.b16 %v1386
    %v1743 = vunpack.c.l.b16 %v1387
    %v1744 = vunpack.c.l.b16 %v1388
    %v1745 = vunpack.c.h.b16 %v1388
    %v1746 = vunpack.c.l.b16 %v1389
    %v1747 = vunpack.c.h.b16 %v1389
    %v1748 = vunpack.c.l.b16 %v1390
    %v1749 = vunpack.c.h.b16 %v1390
    %v1750 = vunpack.c.l.b16 %v1391
    %v1751 = vunpack.c.h.b16 %v1391
    %v1752 = vunpack.c.l.b16 %v1392
    %v1753 = vunpack.c.l.b16 %v1393
    %v1754 = vunpack.c.h.b16 %v1393
    %v1755 = vunpack.c.l.b16 %v1394
    %v1756 = vunpack.c.h.b16 %v1394
    %v1757 = vunpack.c.l.b16 %v1395
    %v1758 = vunpack.c.h.b16 %v1395
    %v1759 = vunpack.c.l.b16 %v1396
    %v1760 = vunpack.c.h.b16 %v1396
    %v1761 = vunpack.c.l.b16 %v1397
    %v1762 = vunpack.c.l.b16 %v1398
    %v1763 = vunpack.c.h.b16 %v1398
    %v1764 = vunpack.c.l.b16 %v1399
    %v1765 = vunpack.c.h.b16 %v1399
    %v1766 = vunpack.c.l.b16 %v1400
    %v1767 = vunpack.c.h.b16 %v1400
    %v1768 = vunpack.c.l.b16 %v1401
    %v1769 = vunpack.c.h.b16 %v1401
    %v1770 = vunpack.c.l.b16 %v1402
    %v1771 = vunpack.c.l.b16 %v1403
    %v1772 = vunpack.c.h.b16 %v1403
    %v1773 = vunpack.c.l.b16 %v1404
    %v1774 = vunpack.c.h.b16 %v1404
    %v1775 = vunpack.c.l.b16 %v1405
    %v1776 = vunpack.c.h.b16 %v1405
    %v1777 = vunpack.c.l.b16 %v1406
    %v1778 = vunpack.c.h.b16 %v1406
    %v1779 = vunpack.c.l.b16 %v1407
    %v1780 = vunpack.c.l.b16 %v1408
    %v1781 = vunpack.c.h.b16 %v1408
    %v1782 = vunpack.c.l.b16 %v1409
    %v1783 = vunpack.c.h.b16 %v1409
    %v1784 = vunpack.c.l.b16 %v1410
    %v1785 = vunpack.c.h.b16 %v1410
    %v1786 = vunpack.c.l.b16 %v1411
    %v1787 = vunpack.c.h.b16 %v1411
    %v1788 = vunpack.c.l.b16 %v1412
    %v1789 = vunpack.c.l.b16 %v1413
    %v1790 = vunpack.c.h.b16 %v1413
    %v1791 = vunpack.c.l.b16 %v1414
    %v1792 = vunpack.c.h.b16 %v1414
    %v1793 = vunpack.c.l.b16 %v1415
    %v1794 = vunpack.c.h.b16 %v1415
    %v1795 = vunpack.c.l.b16 %v1416
    %v1796 = vunpack.c.h.b16 %v1416
    %v1797 = vunpack.c.l.b16 %v1417
    %v1798 = vunpack.c.l.b16 %v1418
    %v1799 = vunpack.c.h.b16 %v1418
    %v1800 = vunpack.c.l.b16 %v1419
    %v1801 = vunpack.c.h.b16 %v1419
    %v1802 = vunpack.c.l.b16 %v1420
    %v1803 = vunpack.c.h.b16 %v1420
    %v1804 = vunpack.c.l.b16 %v1421
    %v1805 = vunpack.c.h.b16 %v1421
    %v1806 = vunpack.c.l.b16 %v1422
    %v1807 = vunpack.c.l.b16 %v1423
    %v1808 = vunpack.c.h.b16 %v1423
    %v1809 = vunpack.c.l.b16 %v1424
    %v1810 = vunpack.c.h.b16 %v1424
    %v1811 = vunpack.c.l.b16 %v1425
    %v1812 = vunpack.c.h.b16 %v1425
    %v1813 = vunpack.c.l.b16 %v1426
    %v1814 = vunpack.c.h.b16 %v1426
    %v1815 = vunpack.c.l.b16 %v1427
    %v1816 = vunpack.c.l.b16 %v1428
    %v1817 = vunpack.c.h.b16 %v1428
    %v1818 = vunpack.c.l.b16 %v1429
    %v1819 = vunpack.c.h.b16 %v1429
    %v1820 = vunpack.c.l.b16 %v1430
    %v1821 = vunpack.c.h.b16 %v1430
    %v1822 = vunpack.c.l.b16 %v1431
    %v1823 = vunpack.c.h.b16 %v1431
    %v1824 = vunpack.c.l.b16 %v1432
    %v1825 = vunpack.c.l.b16 %v1433
    %v1826 = vunpack.c.h.b16 %v1433
    %v1827 = vunpack.c.l.b16 %v1434
    %v1828 = vunpack.c.h.b16 %v1434
    %v1829 = vunpack.c.l.b16 %v1435
    %v1830 = vunpack.c.h.b16 %v1435
    %v1831 = vunpack.c.l.b16 %v1436
    %v1832 = vunpack.c.h.b16 %v1436
    %v1833 = vunpack.c.l.b16 %v1437
    %v1834 = vunpack.c.l.b16 %v1438
    %v1835 = vunpack.c.h.b16 %v1438
    %v1836 = vunpack.c.l.b16 %v1439
    %v1837 = vunpack.c.h.b16 %v1439
    %v1838 = vunpack.c.l.b16 %v1440
    %v1839 = vunpack.c.h.b16 %v1440
    %v1840 = vunpack.c.l.b16 %v1441
    %v1841 = vunpack.c.h.b16 %v1441
    %v1842 = vunpack.c.l.b16 %v1442
    %v1843 = vunpack.c.l.b16 %v1443
    %v1844 = vunpack.c.h.b16 %v1443
    %v1845 = vunpack.c.l.b16 %v1444
    %v1846 = vunpack.c.h.b16 %v1444
    %v1847 = vunpack.c.l.b16 %v1445
    %v1848 = vunpack.c.h.b16 %v1445
    %v1849 = vunpack.c.l.b16 %v1446
    %v1850 = vunpack.c.h.b16 %v1446
    %v1851 = vunpack.c.l.b16 %v1447
    %v1852 = vunpack.c.l.b16 %v1448
    %v1853 = vunpack.c.h.b16 %v1448
    %v1854 = vunpack.c.l.b16 %v1449
    %v1855 = vunpack.c.h.b16 %v1449
    %v1856 = vunpack.c.l.b16 %v1450
    %v1857 = vunpack.c.h.b16 %v1450
    %v1858 = vunpack.c.l.b16 %v1451
    %v1859 = vunpack.c.h.b16 %v1451
    %v1860 = vunpack.c.l.b16 %v1452
    %v1861 = vunpack.c.l.b16 %v1453
    %v1862 = vunpack.c.h.b16 %v1453
    %v1863 = vunpack.c.l.b16 %v1454
    %v1864 = vunpack.c.h.b16 %v1454
    %v1865 = vunpack.c.l.b16 %v1455
    %v1866 = vunpack.c.h.b16 %v1455
    %v1867 = vunpack.c.l.b16 %v1456
    %v1868 = vunpack.c.h.b16 %v1456
    %v1869 = vunpack.c.l.b16 %v1457
    %v1870 = vunpack.c.l.b16 %v1458
    %v1871 = vunpack.c.h.b16 %v1458
    %v1872 = vunpack.c.l.b16 %v1459
    %v1873 = vunpack.c.h.b16 %v1459
    %v1874 = vunpack.c.l.b16 %v1460
    %v1875 = vunpack.c.h.b16 %v1460
    %v1876 = vunpack.c.l.b16 %v1461
    %v1877 = vunpack.c.h.b16 %v1461
    %v1878 = vunpack.c.l.b16 %v1462
    %v1879 = vunpack.c.l.b16 %v1463
    %v1880 = vunpack.c.h.b16 %v1463
    %v1881 = vunpack.c.l.b16 %v1464
    %v1882 = vunpack.c.h.b16 %v1464
    %v1883 = vunpack.c.l.b16 %v1465
    %v1884 = vunpack.c.h.b16 %v1465
    %v1885 = vunpack.c.l.b16 %v1466
    %v1886 = vunpack.c.h.b16 %v1466
    %v1887 = vunpack.c.l.b16 %v1467
    %v1888 = vunpack.c.l.b16 %v1468
    %v1889 = vunpack.c.h.b16 %v1468
    %v1890 = vunpack.c.l.b16 %v1469
    %v1891 = vunpack.c.h.b16 %v1469
    %v1892 = vunpack.c.l.b16 %v1470
    %v1893 = vunpack.c.h.b16 %v1470
    %v1894 = vunpack.c.l.b16 %v1471
    %v1895 = vunpack.c.h.b16 %v1471
    %v1896 = vunpack.c.l.b16 %v1472
    %v1897 = vunpack.c.l.b16 %v1473
    %v1898 = vunpack.c.h.b16 %v1473
    %v1899 = vunpack.c.l.b16 %v1474
    %v1900 = vunpack.c.h.b16 %v1474
    %v1901 = vunpack.c.l.b16 %v1475
    %v1902 = vunpack.c.h.b16 %v1475
    %v1903 = vunpack.c.l.b16 %v1476
    %v1904 = vunpack.c.h.b16 %v1476
    %v1905 = vunpack.c.l.b16 %v1477
    %v1906 = vunpack.c.l.b16 %v1478
    %v1907 = vunpack.c.h.b16 %v1478
    %v1908 = vunpack.c.l.b16 %v1479
    %v1909 = vunpack.c.h.b16 %v1479
    %v1910 = vunpack.c.l.b16 %v1480
    %v1911 = vunpack.c.h.b16 %v1480
    %v1912 = vunpack.c.l.b16 %v1481
    %v1913 = vunpack.c.h.b16 %v1481
    %v1914 = vunpack.c.l.b16 %v1482
    %v1915 = vunpack.c.l.b16 %v1483
    %v1916 = vunpack.c.h.b16 %v1483
    %v1917 = vunpack.c.l.b16 %v1484
    %v1918 = vunpack.c.h.b16 %v1484
    %v1919 = vunpack.c.l.b16 %v1485
    %v1920 = vunpack.c.h.b16 %v1485
    %v1921 = vunpack.c.l.b16 %v1486
    %v1922 = vunpack.c.h.b16 %v1486
    %v1923 = vunpack.c.l.b16 %v1487
    %v1924 = vunpack.c.l.b16 %v1488
    %v1925 = vunpack.c.h.b16 %v1488
    %v1926 = vunpack.c.l.b16 %v1489
    %v1927 = vunpack.c.h.b16 %v1489
    %v1928 = vunpack.c.l.b16 %v1490
    %v1929 = vunpack.c.h.b16 %v1490
    %v1930 = vunpack.c.l.b16 %v1491
    %v1931 = vunpack.c.h.b16 %v1491
    %v1932 = vunpack.c.l.b16 %v1492
    %v1933 = vunpack.c.l.b16 %v1493
    %v1934 = vunpack.c.h.b16 %v1493
    %v1935 = vunpack.c.l.b16 %v1494
    %v1936 = vunpack.c.h.b16 %v1494
    %v1937 = vunpack.c.l.b16 %v1495
    %v1938 = vunpack.c.h.b16 %v1495
    %v1939 = vunpack.c.l.b16 %v1496
    %v1940 = vunpack.c.h.b16 %v1496
    %v1941 = vunpack.c.l.b16 %v1497
    %v1942 = vunpack.c.l.b16 %v1498
    %v1943 = vunpack.c.h.b16 %v1498
    %v1944 = vunpack.c.l.b16 %v1499
    %v1945 = vunpack.c.h.b16 %v1499
    %v1946 = vunpack.c.l.b16 %v1500
    %v1947 = vunpack.c.h.b16 %v1500
    %v1948 = vunpack.c.l.b16 %v1501
    %v1949 = vunpack.c.h.b16 %v1501
    %v1950 = vunpack.c.l.b16 %v1502
    %v1951 = vpack.c.b16 %v1672, %v1663
    %v1952 = vpack.c.b16 %v1673, %v1664
    %v1953 = vpack.c.b16 %v1674, %v1665
    %v1954 = vpack.c.b16 %v1675, %v1666
    %v1955 = vpack.c.b16 %v1676, %v1667
    %v1956 = vpack.c.b16 %v1677, %v1668
    %v1957 = vpack.c.b16 %v1678, %v1669
    %v1958 = vpack.c.b16 %v1679, %v1670
    %v1959 = vpack.c.b16 %v1680, %v1671
    %v1960 = vpack.c.b16 %v1690, %v1681
    %v1961 = vpack.c.b16 %v1691, %v1682
    %v1962 = vpack.c.b16 %v1692, %v1683
    %v1963 = vpack.c.b16 %v1693, %v1684
    %v1964 = vpack.c.b16 %v1694, %v1685
    %v1965 = vpack.c.b16 %v1695, %v1686
    %v1966 = vpack.c.b16 %v1696, %v1687
    %v1967 = vpack.c.b16 %v1697, %v1688
    %v1968 = vpack.c.b16 %v1698, %v1689
    %v1969 = vpack.c.b16 %v1708, %v1699
    %v1970 = vpack.c.b16 %v1709, %v1700
    %v1971 = vpack.c.b16 %v1710, %v1701
    %v1972 = vpack.c.b16 %v1711, %v1702
    %v1973 = vpack.c.b16 %v1712, %v1703
    %v1974 = vpack.c.b16 %v1713, %v1704
    %v1975 = vpack.c.b16 %v1714, %v1705
    %v1976 = vpack.c.b16 %v1715, %v1706
    %v1977 = vpack.c.b16 %v1716, %v1707
    %v1978 = vpack.c.b16 %v1726, %v1717
    %v1979 = vpack.c.b16 %v1727, %v1718
    %v1980 = vpack.c.b16 %v1728, %v1719
    %v1981 = vpack.c.b16 %v1729, %v1720
    %v1982 = vpack.c.b16 %v1730, %v1721
    %v1983 = vpack.c.b16 %v1731, %v1722
    %v1984 = vpack.c.b16 %v1732, %v1723
    %v1985 = vpack.c.b16 %v1733, %v1724
    %v1986 = vpack.c.b16 %v1734, %v1725
    %v1987 = vpack.c.b16 %v1744, %v1735
    %v1988 = vpack.c.b16 %v1745, %v1736
    %v1989 = vpack.c.b16 %v1746, %v1737
    %v1990 = vpack.c.b16 %v1747, %v1738
    %v1991 = vpack.c.b16 %v1748, %v1739
    %v1992 = vpack.c.b16 %v1749, %v1740
    %v1993 = vpack.c.b16 %v1750, %v1741
    %v1994 = vpack.c.b16 %v1751, %v1742
    %v1995 = vpack.c.b16 %v1752, %v1743
    %v1996 = vpack.c.b16 %v1762, %v1753
    %v1997 = vpack.c.b16 %v1763, %v1754
    %v1998 = vpack.c.b16 %v1764, %v1755
    %v1999 = vpack.c.b16 %v1765, %v1756
    %v2000 = vpack.c.b16 %v1766, %v1757
    %v2001 = vpack.c.b16 %v1767, %v1758
    %v2002 = vpack.c.b16 %v1768, %v1759
    %v2003 = vpack.c.b16 %v1769, %v1760
    %v2004 = vpack.c.b16 %v1770, %v1761
    %v2005 = vpack.c.b16 %v1780, %v1771
    %v2006 = vpack.c.b16 %v1781, %v1772
    %v2007 = vpack.c.b16 %v1782, %v1773
    %v2008 = vpack.c.b16 %v1783, %v1774
    %v2009 = vpack.c.b16 %v1784, %v1775
    %v2010 = vpack.c.b16 %v1785, %v1776
    %v2011 = vpack.c.b16 %v1786, %v1777
    %v2012 = vpack.c.b16 %v1787, %v1778
    %v2013 = vpack.c.b16 %v1788, %v1779
    %v2014 = vpack.c.b16 %v1798, %v1789
    %v2015 = vpack.c.b16 %v1799, %v1790
    %v2016 = vpack.c.b16 %v1800, %v1791
    %v2017 = vpack.c.b16 %v1801, %v1792
    %v2018 = vpack.c.b16 %v1802, %v1793
    %v2019 = vpack.c.b16 %v1803, %v1794
    %v2020 = vpack.c.b16 %v1804, %v1795
    %v2021 = vpack.c.b16 %v1805, %v1796
    %v2022 = vpack.c.b16 %v1806, %v1797
    %v2023 = vpack.c.b16 %v1816, %v1807
    %v2024 = vpack.c.b16 %v1817, %v1808
    %v2025 = vpack.c.b16 %v1818, %v1809
    %v2026 = vpack.c.b16 %v1819, %v1810
    %v2027 = vpack.c.b16 %v1820, %v1811
    %v2028 = vpack.c.b16 %v1821, %v1812
    %v2029 = vpack.c.b16 %v1822, %v1813
    %v2030 = vpack.c.b16 %v1823, %v1814
    %v2031 = vpack.c.b16 %v1824, %v1815
    %v2032 = vpack.c.b16 %v1834, %v1825
    %v2033 = vpack.c.b16 %v1835, %v1826
    %v2034 = vpack.c.b16 %v1836, %v1827
    %v2035 = vpack.c.b16 %v1837, %v1828
    %v2036 = vpack.c.b16 %v1838, %v1829
    %v2037 = vpack.c.b16 %v1839, %v1830
    %v2038 = vpack.c.b16 %v1840, %v1831
    %v2039 = vpack.c.b16 %v1841, %v1832
    %v2040 = vpack.c.b16 %v1842, %v1833
    %v2041 = vpack.c.b16 %v1852, %v1843
    %v2042 = vpack.c.b16 %v1853, %v1844
    %v2043 = vpack.c.b16 %v1854, %v1845
    %v2044 = vpack.c.b16 %v1855, %v1846
    %v2045 = vpack.c.b16 %v1856, %v1847
    %v2046 = vpack.c.b16 %v1857, %v1848
    %v2047 = vpack.c.b16 %v1858, %v1849
    %v2048 = vpack.c.b16 %v1859, %v1850
    %v2049 = vpack.c.b16 %v1860, %v1851
    %v2050 = vpack.c.b16 %v1870, %v1861
    %v2051 = vpack.c.b16 %v1871, %v1862
    %v2052 = vpack.c.b16 %v1872, %v1863
    %v2053 = vpack.c.b16 %v1873, %v1864
    %v2054 = vpack.c.b16 %v1874, %v1865
    %v2055 = vpack.c.b16 %v1875, %v1866
    %v2056 = vpack.c.b16 %v1876, %v1867
    %v2057 = vpack.c.b16 %v1877, %v1868
    %v2058 = vpack.c.b16 %v1878, %v1869
    %v2059 = vpack.c.b16 %v1888, %v1879
    %v2060 = vpack.c.b16 %v1889, %v1880
    %v2061 = vpack.c.b16 %v1890, %v1881
    %v2062 = vpack.c.b16 %v1891, %v1882
    %v2063 = vpack.c.b16 %v1892, %v1883
    %v2064 = vpack.c.b16 %v1893, %v1884
    %v2065 = vpack.c.b16 %v1894, %v1885
    %v2066 = vpack.c.b16 %v1895, %v1886
    %v2067 = vpack.c.b16 %v1896, %v1887
    %v2068 = vpack.c.b16 %v1906, %v1897
    %v2069 = vpack.c.b16 %v1907, %v1898
    %v2070 = vpack.c.b16 %v1908, %v1899
    %v2071 = vpack.c.b16 %v1909, %v1900
    %v2072 = vpack.c.b16 %v1910, %v1901
    %v2073 = vpack.c.b16 %v1911, %v1902
    %v2074 = vpack.c.b16 %v1912, %v1903
    %v2075 = vpack.c.b16 %v1913, %v1904
    %v2076 = vpack.c.b16 %v1914, %v1905
    %v2077 = vpack.c.b16 %v1924, %v1915
    %v2078 = vpack.c.b16 %v1925, %v1916
    %v2079 = vpack.c.b16 %v1926, %v1917
    %v2080 = vpack.c.b16 %v1927, %v1918
    %v2081 = vpack.c.b16 %v1928, %v1919
    %v2082 = vpack.c.b16 %v1929, %v1920
    %v2083 = vpack.c.b16 %v1930, %v1921
    %v2084 = vpack.c.b16 %v1931, %v1922
    %v2085 = vpack.c.b16 %v1932, %v1923
    %v2086 = vpack.c.b16 %v1942, %v1933
    %v2087 = vpack.c.b16 %v1943, %v1934
    %v2088 = vpack.c.b16 %v1944, %v1935
    %v2089 = vpack.c.b16 %v1945, %v1936
    %v2090 = vpack.c.b16 %v1946, %v1937
    %v2091 = vpack.c.b16 %v1947, %v1938
    %v2092 = vpack.c.b16 %v1948, %v1939
    %v2093 = vpack.c.b16 %v1949, %v1940
    %v2094 = vpack.c.b16 %v1950, %v1941
    %2239 = vmatprep.subr.bf16.mxu0 %v1952
    %2240 = vmatpush1.bf16.msra.mxu0 %v1951
    %2241 = vmatprep.subr.bf16.mxu0 %v1961
    %2242 = vmatpush1.bf16.msra.mxu0 %v1960
    %2243 = vmatprep.subr.bf16.mxu0 %v1970
    %2244 = vmatpush1.bf16.msra.mxu0 %v1969
    %2245 = vmatprep.subr.bf16.mxu0 %v1979
    %2246 = vmatpush1.bf16.msra.mxu0 %v1978
    %2247 = vmatprep.subr.bf16.mxu0 %v1988
    %2248 = vmatpush1.bf16.msra.mxu0 %v1987
    %2249 = vmatprep.subr.bf16.mxu0 %v1997
    %2250 = vmatpush1.bf16.msra.mxu0 %v1996
    %2251 = vmatprep.subr.bf16.mxu0 %v2006
    %2252 = vmatpush1.bf16.msra.mxu0 %v2005
    %2253 = vmatprep.subr.bf16.mxu0 %v2015
    %2254 = vmatpush1.bf16.msra.mxu0 %v2014
    %2255 = vmatprep.subr.bf16.mxu0 %v2024
    %2256 = vmatpush1.bf16.msra.mxu0 %v2023
    %2257 = vmatprep.subr.bf16.mxu0 %v2033
    %2258 = vmatpush1.bf16.msra.mxu0 %v2032
    %2259 = vmatprep.subr.bf16.mxu0 %v2042
    %2260 = vmatpush1.bf16.msra.mxu0 %v2041
    %2261 = vmatprep.subr.bf16.mxu0 %v2051
    %2262 = vmatpush1.bf16.msra.mxu0 %v2050
    %2263 = vmatprep.subr.bf16.mxu0 %v2060
    %2264 = vmatpush1.bf16.msra.mxu0 %v2059
    %2265 = vmatprep.subr.bf16.mxu0 %v2069
    %2266 = vmatpush1.bf16.msra.mxu0 %v2068
    %2267 = vmatprep.subr.bf16.mxu0 %v2078
    %2268 = vmatpush1.bf16.msra.mxu0 %v2077
    %2269 = vmatprep.subr.bf16.mxu0 %v2087
    %2270 = vmatpush1.bf16.msra.mxu0 %v2086
    %2271 = vmatprep.mubr.bf16.mxu0 %v1336
    %2272 = vmatmul.mubr.bf16.gmra.mrb[0].mxu0 %v1335
    %v2273 = vpop.f32.mrb[0].mxu0
    %v2274 = vadd.f32 0.0, %v2273
    %v2275 = vpop.f32.mrb[0].mxu0
    %v2276 = vadd.f32 0.0, %v2275
    %v2277 = vpop.f32.mrb[0].mxu0
    %v2278 = vadd.f32 0.0, %v2277
    %v2279 = vpop.f32.mrb[0].mxu0
    %v2280 = vadd.f32 0.0, %v2279
    %2281 = vmatprep.mubr.bf16.mxu0 %v1338
    %2282 = vmatmul.mubr.bf16.gmra.mrb[0].mxu0 %v1337
    %v2283 = vpop.f32.mrb[0].mxu0
    %v2284 = vadd.f32 0.0, %v2283
    %v2285 = vpop.f32.mrb[0].mxu0
    %v2286 = vadd.f32 0.0, %v2285
    %v2287 = vpop.f32.mrb[0].mxu0
    %v2288 = vadd.f32 0.0, %v2287
    %v2289 = vpop.f32.mrb[0].mxu0
    %v2290 = vadd.f32 0.0, %v2289
    %2291 = vmatprep.mubr.bf16.mxu0 %v1340
    %2292 = vmatmul.mubr.bf16.gmra.mrb[0].mxu0 %v1339
    %v2293 = vpop.f32.mrb[0].mxu0
    %v2294 = vadd.f32 0.0, %v2293
    %v2295 = vpop.f32.mrb[0].mxu0
    %v2296 = vadd.f32 0.0, %v2295
    %v2297 = vpop.f32.mrb[0].mxu0
    %v2298 = vadd.f32 0.0, %v2297
    %v2299 = vpop.f32.mrb[0].mxu0
    %v2300 = vadd.f32 0.0, %v2299
    %2301 = vmatprep.mubr.bf16.mxu0 %v1342
    %2302 = vmatmul.mubr.bf16.gmra.mrb[0].mxu0 %v1341
    %v2303 = vpop.f32.mrb[0].mxu0
    %v2304 = vadd.f32 0.0, %v2303
    %v2305 = vpop.f32.mrb[0].mxu0
    %v2306 = vadd.f32 0.0, %v2305
    %v2307 = vpop.f32.mrb[0].mxu0
    %v2308 = vadd.f32 0.0, %v2307
    %v2309 = vpop.f32.mrb[0].mxu0
    %v2310 = vadd.f32 0.0, %v2309
    %2311 = vdwg.mxu0
    %2312 = vmatprep.subr.bf16.mxu0 %v1954
    %2313 = vmatpush1.bf16.msra.mxu0 %v1953
    %2314 = vmatprep.subr.bf16.mxu0 %v1963
    %2315 = vmatpush1.bf16.msra.mxu0 %v1962
    %2316 = vmatprep.subr.bf16.mxu0 %v1972
    %2317 = vmatpush1.bf16.msra.mxu0 %v1971
    %2318 = vmatprep.subr.bf16.mxu0 %v1981
    %2319 = vmatpush1.bf16.msra.mxu0 %v1980
    %2320 = vmatprep.subr.bf16.mxu0 %v1990
    %2321 = vmatpush1.bf16.msra.mxu0 %v1989
    %2322 = vmatprep.subr.bf16.mxu0 %v1999
    %2323 = vmatpush1.bf16.msra.mxu0 %v1998
    %2324 = vmatprep.subr.bf16.mxu0 %v2008
    %2325 = vmatpush1.bf16.msra.mxu0 %v2007
    %2326 = vmatprep.subr.bf16.mxu0 %v2017
    %2327 = vmatpush1.bf16.msra.mxu0 %v2016
    %2328 = vmatprep.subr.bf16.mxu0 %v2026
    %2329 = vmatpush1.bf16.msra.mxu0 %v2025
    %2330 = vmatprep.subr.bf16.mxu0 %v2035
    %2331 = vmatpush1.bf16.msra.mxu0 %v2034
    %2332 = vmatprep.subr.bf16.mxu0 %v2044
    %2333 = vmatpush1.bf16.msra.mxu0 %v2043
    %2334 = vmatprep.subr.bf16.mxu0 %v2053
    %2335 = vmatpush1.bf16.msra.mxu0 %v2052
    %2336 = vmatprep.subr.bf16.mxu0 %v2062
    %2337 = vmatpush1.bf16.msra.mxu0 %v2061
    %2338 = vmatprep.subr.bf16.mxu0 %v2071
    %2339 = vmatpush1.bf16.msra.mxu0 %v2070
    %2340 = vmatprep.subr.bf16.mxu0 %v2080
    %2341 = vmatpush1.bf16.msra.mxu0 %v2079
    %2342 = vmatprep.subr.bf16.mxu0 %v2089
    %2343 = vmatpush1.bf16.msra.mxu0 %v2088
    %2344 = vmatprep.mubr.bf16.mxu0 %v1336
    %2345 = vmatmul.mubr.bf16.gmra.mrb[0].mxu0 %v1335
    %v2346 = vpop.f32.mrb[0].mxu0
    %v2347 = vadd.f32 0.0, %v2346
    %v2348 = vpop.f32.mrb[0].mxu0
    %v2349 = vadd.f32 0.0, %v2348
    %v2350 = vpop.f32.mrb[0].mxu0
    %v2351 = vadd.f32 0.0, %v2350
    %v2352 = vpop.f32.mrb[0].mxu0
    %v2353 = vadd.f32 0.0, %v2352
    %2354 = vmatprep.mubr.bf16.mxu0 %v1338
    %2355 = vmatmul.mubr.bf16.gmra.mrb[0].mxu0 %v1337
    %v2356 = vpop.f32.mrb[0].mxu0
    %v2357 = vadd.f32 0.0, %v2356
    %v2358 = vpop.f32.mrb[0].mxu0
    %v2359 = vadd.f32 0.0, %v2358
    %v2360 = vpop.f32.mrb[0].mxu0
    %v2361 = vadd.f32 0.0, %v2360
    %v2362 = vpop.f32.mrb[0].mxu0
    %v2363 = vadd.f32 0.0, %v2362
    %2364 = vmatprep.mubr.bf16.mxu0 %v1340
    %2365 = vmatmul.mubr.bf16.gmra.mrb[0].mxu0 %v1339
    %v2366 = vpop.f32.mrb[0].mxu0
    %v2367 = vadd.f32 0.0, %v2366
    %v2368 = vpop.f32.mrb[0].mxu0
    %v2369 = vadd.f32 0.0, %v2368
    %v2370 = vpop.f32.mrb[0].mxu0
    %v2371 = vadd.f32 0.0, %v2370
    %v2372 = vpop.f32.mrb[0].mxu0
    %v2373 = vadd.f32 0.0, %v2372
    %2374 = vmatprep.mubr.bf16.mxu0 %v1342
    %2375 = vmatmul.mubr.bf16.gmra.mrb[0].mxu0 %v1341
    %v2376 = vpop.f32.mrb[0].mxu0
    %v2377 = vadd.f32 0.0, %v2376
    %v2378 = vpop.f32.mrb[0].mxu0
    %v2379 = vadd.f32 0.0, %v2378
    %v2380 = vpop.f32.mrb[0].mxu0
    %v2381 = vadd.f32 0.0, %v2380
    %v2382 = vpop.f32.mrb[0].mxu0
    %v2383 = vadd.f32 0.0, %v2382
    %2384 = vdwg.mxu0
    %2385 = vmatprep.subr.bf16.mxu0 %v1956
    %2386 = vmatpush1.bf16.msra.mxu0 %v1955
    %2387 = vmatprep.subr.bf16.mxu0 %v1965
    %2388 = vmatpush1.bf16.msra.mxu0 %v1964
    %2389 = vmatprep.subr.bf16.mxu0 %v1974
    %2390 = vmatpush1.bf16.msra.mxu0 %v1973
    %2391 = vmatprep.subr.bf16.mxu0 %v1983
    %2392 = vmatpush1.bf16.msra.mxu0 %v1982
    %2393 = vmatprep.subr.bf16.mxu0 %v1992
    %2394 = vmatpush1.bf16.msra.mxu0 %v1991
    %2395 = vmatprep.subr.bf16.mxu0 %v2001
    %2396 = vmatpush1.bf16.msra.mxu0 %v2000
    %2397 = vmatprep.subr.bf16.mxu0 %v2010
    %2398 = vmatpush1.bf16.msra.mxu0 %v2009
    %2399 = vmatprep.subr.bf16.mxu0 %v2019
    %2400 = vmatpush1.bf16.msra.mxu0 %v2018
    %2401 = vmatprep.subr.bf16.mxu0 %v2028
    %2402 = vmatpush1.bf16.msra.mxu0 %v2027
    %2403 = vmatprep.subr.bf16.mxu0 %v2037
    %2404 = vmatpush1.bf16.msra.mxu0 %v2036
    %2405 = vmatprep.subr.bf16.mxu0 %v2046
    %2406 = vmatpush1.bf16.msra.mxu0 %v2045
    %2407 = vmatprep.subr.bf16.mxu0 %v2055
    %2408 = vmatpush1.bf16.msra.mxu0 %v2054
    %2409 = vmatprep.subr.bf16.mxu0 %v2064
    %2410 = vmatpush1.bf16.msra.mxu0 %v2063
    %2411 = vmatprep.subr.bf16.mxu0 %v2073
    %2412 = vmatpush1.bf16.msra.mxu0 %v2072
    %2413 = vmatprep.subr.bf16.mxu0 %v2082
    %2414 = vmatpush1.bf16.msra.mxu0 %v2081
    %2415 = vmatprep.subr.bf16.mxu0 %v2091
    %2416 = vmatpush1.bf16.msra.mxu0 %v2090
    %2417 = vmatprep.mubr.bf16.mxu0 %v1336
    %2418 = vmatmul.mubr.bf16.gmra.mrb[0].mxu0 %v1335
    %v2419 = vpop.f32.mrb[0].mxu0
    %v2420 = vadd.f32 0.0, %v2419
    %v2421 = vpop.f32.mrb[0].mxu0
    %v2422 = vadd.f32 0.0, %v2421
    %v2423 = vpop.f32.mrb[0].mxu0
    %v2424 = vadd.f32 0.0, %v2423
    %v2425 = vpop.f32.mrb[0].mxu0
    %v2426 = vadd.f32 0.0, %v2425
    %2427 = vmatprep.mubr.bf16.mxu0 %v1338
    %2428 = vmatmul.mubr.bf16.gmra.mrb[0].mxu0 %v1337
    %v2429 = vpop.f32.mrb[0].mxu0
    %v2430 = vadd.f32 0.0, %v2429
    %v2431 = vpop.f32.mrb[0].mxu0
    %v2432 = vadd.f32 0.0, %v2431
    %v2433 = vpop.f32.mrb[0].mxu0
    %v2434 = vadd.f32 0.0, %v2433
    %v2435 = vpop.f32.mrb[0].mxu0
    %v2436 = vadd.f32 0.0, %v2435
    %2437 = vmatprep.mubr.bf16.mxu0 %v1340
    %2438 = vmatmul.mubr.bf16.gmra.mrb[0].mxu0 %v1339
    %v2439 = vpop.f32.mrb[0].mxu0
    %v2440 = vadd.f32 0.0, %v2439
    %v2441 = vpop.f32.mrb[0].mxu0
    %v2442 = vadd.f32 0.0, %v2441
    %v2443 = vpop.f32.mrb[0].mxu0
    %v2444 = vadd.f32 0.0, %v2443
    %v2445 = vpop.f32.mrb[0].mxu0
    %v2446 = vadd.f32 0.0, %v2445
    %2447 = vmatprep.mubr.bf16.mxu0 %v1342
    %2448 = vmatmul.mubr.bf16.gmra.mrb[0].mxu0 %v1341
    %v2449 = vpop.f32.mrb[0].mxu0
    %v2450 = vadd.f32 0.0, %v2449
    %v2451 = vpop.f32.mrb[0].mxu0
    %v2452 = vadd.f32 0.0, %v2451
    %v2453 = vpop.f32.mrb[0].mxu0
    %v2454 = vadd.f32 0.0, %v2453
    %v2455 = vpop.f32.mrb[0].mxu0
    %v2456 = vadd.f32 0.0, %v2455
    %2457 = vdwg.mxu0
    %2458 = vmatprep.subr.bf16.mxu0 %v1958
    %2459 = vmatpush1.bf16.msra.mxu0 %v1957
    %2460 = vmatprep.subr.bf16.mxu0 %v1967
    %2461 = vmatpush1.bf16.msra.mxu0 %v1966
    %2462 = vmatprep.subr.bf16.mxu0 %v1976
    %2463 = vmatpush1.bf16.msra.mxu0 %v1975
    %2464 = vmatprep.subr.bf16.mxu0 %v1985
    %2465 = vmatpush1.bf16.msra.mxu0 %v1984
    %2466 = vmatprep.subr.bf16.mxu0 %v1994
    %2467 = vmatpush1.bf16.msra.mxu0 %v1993
    %2468 = vmatprep.subr.bf16.mxu0 %v2003
    %2469 = vmatpush1.bf16.msra.mxu0 %v2002
    %2470 = vmatprep.subr.bf16.mxu0 %v2012
    %2471 = vmatpush1.bf16.msra.mxu0 %v2011
    %2472 = vmatprep.subr.bf16.mxu0 %v2021
    %2473 = vmatpush1.bf16.msra.mxu0 %v2020
    %2474 = vmatprep.subr.bf16.mxu0 %v2030
    %2475 = vmatpush1.bf16.msra.mxu0 %v2029
    %2476 = vmatprep.subr.bf16.mxu0 %v2039
    %2477 = vmatpush1.bf16.msra.mxu0 %v2038
    %2478 = vmatprep.subr.bf16.mxu0 %v2048
    %2479 = vmatpush1.bf16.msra.mxu0 %v2047
    %2480 = vmatprep.subr.bf16.mxu0 %v2057
    %2481 = vmatpush1.bf16.msra.mxu0 %v2056
    %2482 = vmatprep.subr.bf16.mxu0 %v2066
    %2483 = vmatpush1.bf16.msra.mxu0 %v2065
    %2484 = vmatprep.subr.bf16.mxu0 %v2075
    %2485 = vmatpush1.bf16.msra.mxu0 %v2074
    %2486 = vmatprep.subr.bf16.mxu0 %v2084
    %2487 = vmatpush1.bf16.msra.mxu0 %v2083
    %2488 = vmatprep.subr.bf16.mxu0 %v2093
    %2489 = vmatpush1.bf16.msra.mxu0 %v2092
    %2490 = vmatprep.mubr.bf16.mxu0 %v1336
    %2491 = vmatmul.mubr.bf16.gmra.mrb[0].mxu0 %v1335
    %v2492 = vpop.f32.mrb[0].mxu0
    %v2493 = vadd.f32 0.0, %v2492
    %v2494 = vpop.f32.mrb[0].mxu0
    %v2495 = vadd.f32 0.0, %v2494
    %v2496 = vpop.f32.mrb[0].mxu0
    %v2497 = vadd.f32 0.0, %v2496
    %v2498 = vpop.f32.mrb[0].mxu0
    %v2499 = vadd.f32 0.0, %v2498
    %2500 = vmatprep.mubr.bf16.mxu0 %v1338
    %2501 = vmatmul.mubr.bf16.gmra.mrb[0].mxu0 %v1337
    %v2502 = vpop.f32.mrb[0].mxu0
    %v2503 = vadd.f32 0.0, %v2502
    %v2504 = vpop.f32.mrb[0].mxu0
    %v2505 = vadd.f32 0.0, %v2504
    %v2506 = vpop.f32.mrb[0].mxu0
    %v2507 = vadd.f32 0.0, %v2506
    %v2508 = vpop.f32.mrb[0].mxu0
    %v2509 = vadd.f32 0.0, %v2508
    %2510 = vmatprep.mubr.bf16.mxu0 %v1340
    %2511 = vmatmul.mubr.bf16.gmra.mrb[0].mxu0 %v1339
    %v2512 = vpop.f32.mrb[0].mxu0
    %v2513 = vadd.f32 0.0, %v2512
    %v2514 = vpop.f32.mrb[0].mxu0
    %v2515 = vadd.f32 0.0, %v2514
    %v2516 = vpop.f32.mrb[0].mxu0
    %v2517 = vadd.f32 0.0, %v2516
    %v2518 = vpop.f32.mrb[0].mxu0
    %v2519 = vadd.f32 0.0, %v2518
    %2520 = vmatprep.mubr.bf16.mxu0 %v1342
    %2521 = vmatmul.mubr.bf16.gmra.mrb[0].mxu0 %v1341
    %v2522 = vpop.f32.mrb[0].mxu0
    %v2523 = vadd.f32 0.0, %v2522
    %v2524 = vpop.f32.mrb[0].mxu0
    %v2525 = vadd.f32 0.0, %v2524
    %v2526 = vpop.f32.mrb[0].mxu0
    %v2527 = vadd.f32 0.0, %v2526
    %v2528 = vpop.f32.mrb[0].mxu0
    %v2529 = vadd.f32 0.0, %v2528
    %2530 = vdwg.mxu0
    %2531 = vmatprep.subr.bf16.mxu0 0
    %2532 = vmatpush1.bf16.msra.mxu0 %v1959
    %2533 = vmatprep.subr.bf16.mxu0 0
    %2534 = vmatpush1.bf16.msra.mxu0 %v1968
    %2535 = vmatprep.subr.bf16.mxu0 0
    %2536 = vmatpush1.bf16.msra.mxu0 %v1977
    %2537 = vmatprep.subr.bf16.mxu0 0
    %2538 = vmatpush1.bf16.msra.mxu0 %v1986
    %2539 = vmatprep.subr.bf16.mxu0 0
    %2540 = vmatpush1.bf16.msra.mxu0 %v1995
    %2541 = vmatprep.subr.bf16.mxu0 0
    %2542 = vmatpush1.bf16.msra.mxu0 %v2004
    %2543 = vmatprep.subr.bf16.mxu0 0
    %2544 = vmatpush1.bf16.msra.mxu0 %v2013
    %2545 = vmatprep.subr.bf16.mxu0 0
    %2546 = vmatpush1.bf16.msra.mxu0 %v2022
    %2547 = vmatprep.subr.bf16.mxu0 0
    %2548 = vmatpush1.bf16.msra.mxu0 %v2031
    %2549 = vmatprep.subr.bf16.mxu0 0
    %2550 = vmatpush1.bf16.msra.mxu0 %v2040
    %2551 = vmatprep.subr.bf16.mxu0 0
    %2552 = vmatpush1.bf16.msra.mxu0 %v2049
    %2553 = vmatprep.subr.bf16.mxu0 0
    %2554 = vmatpush1.bf16.msra.mxu0 %v2058
    %2555 = vmatprep.subr.bf16.mxu0 0
    %2556 = vmatpush1.bf16.msra.mxu0 %v2067
    %2557 = vmatprep.subr.bf16.mxu0 0
    %2558 = vmatpush1.bf16.msra.mxu0 %v2076
    %2559 = vmatprep.subr.bf16.mxu0 0
    %2560 = vmatpush1.bf16.msra.mxu0 %v2085
    %2561 = vmatprep.subr.bf16.mxu0 0
    %2562 = vmatpush1.bf16.msra.mxu0 %v2094
    %2563 = vmatprep.mubr.bf16.mxu0 %v1336
    %2564 = vmatmul.mubr.bf16.gmra.mrb[0].mxu0 %v1335
    %v2565 = vpop.f32.mrb[0].mxu0
    %v2566 = vadd.f32 0.0, %v2565
    %v2567 = vpop.f32.mrb[0].mxu0
    %v2568 = vpop.f32.mrb[0].mxu0
    %v2569 = vadd.f32 0.0, %v2568
    %v2570 = vpop.f32.mrb[0].mxu0
    %2571 = vmatprep.mubr.bf16.mxu0 %v1338
    %2572 = vmatmul.mubr.bf16.gmra.mrb[0].mxu0 %v1337
    %v2573 = vpop.f32.mrb[0].mxu0
    %v2574 = vadd.f32 0.0, %v2573
    %v2575 = vpop.f32.mrb[0].mxu0
    %v2576 = vpop.f32.mrb[0].mxu0
    %v2577 = vadd.f32 0.0, %v2576
    %v2578 = vpop.f32.mrb[0].mxu0
    %2579 = vmatprep.mubr.bf16.mxu0 %v1340
    %2580 = vmatmul.mubr.bf16.gmra.mrb[0].mxu0 %v1339
    %v2581 = vpop.f32.mrb[0].mxu0
    %v2582 = vadd.f32 0.0, %v2581
    %v2583 = vpop.f32.mrb[0].mxu0
    %v2584 = vpop.f32.mrb[0].mxu0
    %v2585 = vadd.f32 0.0, %v2584
    %v2586 = vpop.f32.mrb[0].mxu0
    %2587 = vmatprep.mubr.bf16.mxu0 %v1342
    %2588 = vmatmul.mubr.bf16.gmra.mrb[0].mxu0 %v1341
    %v2589 = vpop.f32.mrb[0].mxu0
    %v2590 = vadd.f32 0.0, %v2589
    %v2591 = vpop.f32.mrb[0].mxu0
    %v2592 = vpop.f32.mrb[0].mxu0
    %v2593 = vadd.f32 0.0, %v2592
    %v2594 = vpop.f32.mrb[0].mxu0
    %2595 = vdwg.mxu0
    %v2596 = vpack.c.bf16 %v2278, %v2274
    %v2597 = vpack.c.bf16 %v2280, %v2276
    %v2598 = vpack.c.bf16 %v2351, %v2347
    %v2599 = vpack.c.bf16 %v2353, %v2349
    %v2600 = vpack.c.bf16 %v2424, %v2420
    %v2601 = vpack.c.bf16 %v2426, %v2422
    %v2602 = vpack.c.bf16 %v2497, %v2493
    %v2603 = vpack.c.bf16 %v2499, %v2495
    %v2604 = vpack.c.bf16 %v2569, %v2566
    %v2605 = vpack.c.bf16 %v2288, %v2284
    %v2606 = vpack.c.bf16 %v2290, %v2286
    %v2607 = vpack.c.bf16 %v2361, %v2357
    %v2608 = vpack.c.bf16 %v2363, %v2359
    %v2609 = vpack.c.bf16 %v2434, %v2430
    %v2610 = vpack.c.bf16 %v2436, %v2432
    %v2611 = vpack.c.bf16 %v2507, %v2503
    %v2612 = vpack.c.bf16 %v2509, %v2505
    %v2613 = vpack.c.bf16 %v2577, %v2574
    %v2614 = vpack.c.bf16 %v2298, %v2294
    %v2615 = vpack.c.bf16 %v2300, %v2296
    %v2616 = vpack.c.bf16 %v2371, %v2367
    %v2617 = vpack.c.bf16 %v2373, %v2369
    %v2618 = vpack.c.bf16 %v2444, %v2440
    %v2619 = vpack.c.bf16 %v2446, %v2442
    %v2620 = vpack.c.bf16 %v2517, %v2513
    %v2621 = vpack.c.bf16 %v2519, %v2515
    %v2622 = vpack.c.bf16 %v2585, %v2582
    %v2623 = vpack.c.bf16 %v2308, %v2304
    %v2624 = vpack.c.bf16 %v2310, %v2306
    %v2625 = vpack.c.bf16 %v2381, %v2377
    %v2626 = vpack.c.bf16 %v2383, %v2379
    %v2627 = vpack.c.bf16 %v2454, %v2450
    %v2628 = vpack.c.bf16 %v2456, %v2452
    %v2629 = vpack.c.bf16 %v2527, %v2523
    %v2630 = vpack.c.bf16 %v2529, %v2525
    %v2631 = vpack.c.bf16 %v2593, %v2590
    %v2632 = vld [vmem:[%s6] sm:$0xf]
    %v2633 = vld [vmem:[%s6 + $0x4] sm:$0xf]
    %v2634 = vld [vmem:[%s6 + $0x8] sm:$0xf]
    %v2635 = vld [vmem:[%s6 + $0xc] sm:$0xf]
    %v2636 = vld [vmem:[%s6 + $0x10] sm:$0xf]
    %v2637 = vld [vmem:[%s6 + $0x14] sm:$0xf]
    %v2638 = vld [vmem:[%s6 + $0x18] sm:$0xf]
    %v2639 = vld [vmem:[%s6 + $0x1c] sm:$0xf]
    %s2640 = scalar_lea.vmem %s6, 32
    %v2641 = vld [vmem:[%s2640] sm:$0xf]
    %v2642 = vld [vmem:[%s2640 + $0x4] sm:$0xf]
    %v2643 = vld [vmem:[%s2640 + $0x8] sm:$0xf]
    %v2644 = vld [vmem:[%s2640 + $0xc] sm:$0xf]
    %v2645 = vld [vmem:[%s2640 + $0x10] sm:$0xf]
    %v2646 = vld [vmem:[%s2640 + $0x14] sm:$0xf]
    %v2647 = vld [vmem:[%s2640 + $0x18] sm:$0xf]
    %v2648 = vld [vmem:[%s2640 + $0x1c] sm:$0xf]
    %v2657 = vunpack.c.l.b16 %v2641
    %v2658 = vunpack.c.l.b16 %v2642
    %v2659 = vunpack.c.l.b16 %v2643
    %v2660 = vunpack.c.l.b16 %v2644
    %v2661 = vunpack.c.l.b16 %v2645
    %v2662 = vunpack.c.l.b16 %v2646
    %v2663 = vunpack.c.l.b16 %v2647
    %v2664 = vunpack.c.l.b16 %v2648
    %v2665 = vpack.c.b16 %v2658, %v2657
    %v2666 = vpack.c.b16 %v2660, %v2659
    %v2667 = vpack.c.b16 %v2662, %v2661
    %v2668 = vpack.c.b16 %v2664, %v2663
    %v2670 = vsel %vm260, %v2665, 0
    %v2673 = vsel %vm260, %v2666, 0
    %v2676 = vsel %vm260, %v2667, 0
    %v2679 = vsel %vm260, %v2668, 0
    %2681 = vmatprep.subr.bf16.mxu0 0
    %2682 = vmatpush1.bf16.msra.mxu0 %v2597
    %2683 = vmatprep.subr.bf16.mxu0 0
    %2684 = vmatpush1.bf16.msra.mxu0 %v2606
    %2685 = vmatprep.subr.bf16.mxu0 0
    %2686 = vmatpush1.bf16.msra.mxu0 %v2615
    %2687 = vmatprep.subr.bf16.mxu0 0
    %2688 = vmatpush1.bf16.msra.mxu0 %v2624
    %2689 = vmatprep.subr.bf16.mxu0 0
    %2690 = vmatpush1.bf16.msra.mxu0 0
    %2691 = vmatprep.subr.bf16.mxu0 0
    %2692 = vmatpush1.bf16.msra.mxu0 0
    %2693 = vmatprep.subr.bf16.mxu0 0
    %2694 = vmatpush1.bf16.msra.mxu0 0
    %2695 = vmatprep.subr.bf16.mxu0 0
    %2696 = vmatpush1.bf16.msra.mxu0 0
    %2697 = vmatprep.subr.bf16.mxu0 0
    %2698 = vmatpush1.bf16.msra.mxu0 0
    %2699 = vmatprep.subr.bf16.mxu0 0
    %2700 = vmatpush1.bf16.msra.mxu0 0
    %2701 = vmatprep.subr.bf16.mxu0 0
    %2702 = vmatpush1.bf16.msra.mxu0 0
    %2703 = vmatprep.subr.bf16.mxu0 0
    %2704 = vmatpush1.bf16.msra.mxu0 0
    %2705 = vmatprep.subr.bf16.mxu0 0
    %2706 = vmatpush1.bf16.msra.mxu0 0
    %2707 = vmatprep.subr.bf16.mxu0 0
    %2708 = vmatpush1.bf16.msra.mxu0 0
    %2709 = vmatprep.subr.bf16.mxu0 0
    %2710 = vmatpush1.bf16.msra.mxu0 0
    %2711 = vmatprep.subr.bf16.mxu0 0
    %2712 = vmatpush1.bf16.msra.mxu0 0
    %2713 = vmatprep.mubr.bf16.mxu0 0
    %2714 = vmatmul.mubr.bf16.gmra.mrb[0].mxu0 %v2670
    %v2715 = vpop.f32.mrb[0].mxu0
    %v2716 = vadd.f32 0.0, %v2715
    %v2717 = vpop.f32.mrb[0].mxu0
    %v2718 = vpop.f32.mrb[0].mxu0
    %v2719 = vadd.f32 0.0, %v2718
    %v2720 = vpop.f32.mrb[0].mxu0
    %2721 = vmatprep.mubr.bf16.mxu0 0
    %2722 = vmatmul.mubr.bf16.gmra.mrb[0].mxu0 %v2673
    %v2723 = vpop.f32.mrb[0].mxu0
    %v2724 = vadd.f32 0.0, %v2723
    %v2725 = vpop.f32.mrb[0].mxu0
    %v2726 = vpop.f32.mrb[0].mxu0
    %v2727 = vadd.f32 0.0, %v2726
    %v2728 = vpop.f32.mrb[0].mxu0
    %2729 = vmatprep.mubr.bf16.mxu0 0
    %2730 = vmatmul.mubr.bf16.gmra.mrb[0].mxu0 %v2676
    %v2731 = vpop.f32.mrb[0].mxu0
    %v2732 = vadd.f32 0.0, %v2731
    %v2733 = vpop.f32.mrb[0].mxu0
    %v2734 = vpop.f32.mrb[0].mxu0
    %v2735 = vadd.f32 0.0, %v2734
    %v2736 = vpop.f32.mrb[0].mxu0
    %2737 = vmatprep.mubr.bf16.mxu0 0
    %2738 = vmatmul.mubr.bf16.gmra.mrb[0].mxu0 %v2679
    %v2739 = vpop.f32.mrb[0].mxu0
    %v2740 = vadd.f32 0.0, %v2739
    %v2741 = vpop.f32.mrb[0].mxu0
    %v2742 = vpop.f32.mrb[0].mxu0
    %v2743 = vadd.f32 0.0, %v2742
    %v2744 = vpop.f32.mrb[0].mxu0
    %2745 = vdwg.mxu0
    %v2754 = vunpack.c.l.b16 %v2632
    %v2755 = vunpack.c.l.b16 %v2633
    %v2756 = vunpack.c.l.b16 %v2634
    %v2757 = vunpack.c.l.b16 %v2635
    %v2758 = vunpack.c.l.b16 %v2636
    %v2759 = vunpack.c.l.b16 %v2637
    %v2760 = vunpack.c.l.b16 %v2638
    %v2761 = vunpack.c.l.b16 %v2639
    %v2762 = vpack.c.b16 %v2755, %v2754
    %v2763 = vpack.c.b16 %v2757, %v2756
    %v2764 = vpack.c.b16 %v2759, %v2758
    %v2765 = vpack.c.b16 %v2761, %v2760
    %v2767 = vsel %vm260, %v2762, 0
    %v2770 = vsel %vm260, %v2763, 0
    %v2773 = vsel %vm260, %v2764, 0
    %v2776 = vsel %vm260, %v2765, 0
    %2778 = vmatprep.subr.bf16.mxu0 0
    %2779 = vmatpush1.bf16.msra.mxu0 %v2596
    %2780 = vmatprep.subr.bf16.mxu0 0
    %2781 = vmatpush1.bf16.msra.mxu0 %v2605
    %2782 = vmatprep.subr.bf16.mxu0 0
    %2783 = vmatpush1.bf16.msra.mxu0 %v2614
    %2784 = vmatprep.subr.bf16.mxu0 0
    %2785 = vmatpush1.bf16.msra.mxu0 %v2623
    %2786 = vmatprep.subr.bf16.mxu0 0
    %2787 = vmatpush1.bf16.msra.mxu0 0
    %2788 = vmatprep.subr.bf16.mxu0 0
    %2789 = vmatpush1.bf16.msra.mxu0 0
    %2790 = vmatprep.subr.bf16.mxu0 0
    %2791 = vmatpush1.bf16.msra.mxu0 0
    %2792 = vmatprep.subr.bf16.mxu0 0
    %2793 = vmatpush1.bf16.msra.mxu0 0
    %2794 = vmatprep.subr.bf16.mxu0 0
    %2795 = vmatpush1.bf16.msra.mxu0 0
    %2796 = vmatprep.subr.bf16.mxu0 0
    %2797 = vmatpush1.bf16.msra.mxu0 0
    %2798 = vmatprep.subr.bf16.mxu0 0
    %2799 = vmatpush1.bf16.msra.mxu0 0
    %2800 = vmatprep.subr.bf16.mxu0 0
    %2801 = vmatpush1.bf16.msra.mxu0 0
    %2802 = vmatprep.subr.bf16.mxu0 0
    %2803 = vmatpush1.bf16.msra.mxu0 0
    %2804 = vmatprep.subr.bf16.mxu0 0
    %2805 = vmatpush1.bf16.msra.mxu0 0
    %2806 = vmatprep.subr.bf16.mxu0 0
    %2807 = vmatpush1.bf16.msra.mxu0 0
    %2808 = vmatprep.subr.bf16.mxu0 0
    %2809 = vmatpush1.bf16.msra.mxu0 0
    %2810 = vmatprep.mubr.bf16.mxu0 0
    %2811 = vmatmul.mubr.bf16.gmra.mrb[0].mxu0 %v2767
    %v2812 = vpop.f32.mrb[0].mxu0
    %v2813 = vadd.f32 %v2716, %v2812
    %v2814 = vpop.f32.mrb[0].mxu0
    %v2815 = vpop.f32.mrb[0].mxu0
    %v2816 = vadd.f32 %v2719, %v2815
    %v2817 = vpop.f32.mrb[0].mxu0
    %2818 = vmatprep.mubr.bf16.mxu0 0
    %2819 = vmatmul.mubr.bf16.gmra.mrb[0].mxu0 %v2770
    %v2820 = vpop.f32.mrb[0].mxu0
    %v2821 = vadd.f32 %v2724, %v2820
    %v2822 = vpop.f32.mrb[0].mxu0
    %v2823 = vpop.f32.mrb[0].mxu0
    %v2824 = vadd.f32 %v2727, %v2823
    %v2825 = vpop.f32.mrb[0].mxu0
    %2826 = vmatprep.mubr.bf16.mxu0 0
    %2827 = vmatmul.mubr.bf16.gmra.mrb[0].mxu0 %v2773
    %v2828 = vpop.f32.mrb[0].mxu0
    %v2829 = vadd.f32 %v2732, %v2828
    %v2830 = vpop.f32.mrb[0].mxu0
    %v2831 = vpop.f32.mrb[0].mxu0
    %v2832 = vadd.f32 %v2735, %v2831
    %v2833 = vpop.f32.mrb[0].mxu0
    %2834 = vmatprep.mubr.bf16.mxu0 0
    %2835 = vmatmul.mubr.bf16.gmra.mrb[0].mxu0 %v2776
    %v2836 = vpop.f32.mrb[0].mxu0
    %v2837 = vadd.f32 %v2740, %v2836
    %v2838 = vpop.f32.mrb[0].mxu0
    %v2839 = vpop.f32.mrb[0].mxu0
    %v2840 = vadd.f32 %v2743, %v2839
    %v2841 = vpop.f32.mrb[0].mxu0
    %2842 = vdwg.mxu0
    %s2843 = scalar_lea.vmem %s6, 64
    %v2844 = vld [vmem:[%s2843] sm:$0xf]
    %v2845 = vld [vmem:[%s2843 + $0x4] sm:$0xf]
    %v2846 = vld [vmem:[%s2843 + $0x8] sm:$0xf]
    %v2847 = vld [vmem:[%s2843 + $0xc] sm:$0xf]
    %v2848 = vld [vmem:[%s2843 + $0x10] sm:$0xf]
    %v2849 = vld [vmem:[%s2843 + $0x14] sm:$0xf]
    %v2850 = vld [vmem:[%s2843 + $0x18] sm:$0xf]
    %v2851 = vld [vmem:[%s2843 + $0x1c] sm:$0xf]
    %v2860 = vunpack.c.l.b16 %v2844
    %v2861 = vunpack.c.l.b16 %v2845
    %v2862 = vunpack.c.l.b16 %v2846
    %v2863 = vunpack.c.l.b16 %v2847
    %v2864 = vunpack.c.l.b16 %v2848
    %v2865 = vunpack.c.l.b16 %v2849
    %v2866 = vunpack.c.l.b16 %v2850
    %v2867 = vunpack.c.l.b16 %v2851
    %v2868 = vpack.c.b16 %v2861, %v2860
    %v2869 = vpack.c.b16 %v2863, %v2862
    %v2870 = vpack.c.b16 %v2865, %v2864
    %v2871 = vpack.c.b16 %v2867, %v2866
    %v2873 = vsel %vm260, %v2868, 0
    %v2876 = vsel %vm260, %v2869, 0
    %v2879 = vsel %vm260, %v2870, 0
    %v2882 = vsel %vm260, %v2871, 0
    %2884 = vmatprep.subr.bf16.mxu0 0
    %2885 = vmatpush1.bf16.msra.mxu0 %v2598
    %2886 = vmatprep.subr.bf16.mxu0 0
    %2887 = vmatpush1.bf16.msra.mxu0 %v2607
    %2888 = vmatprep.subr.bf16.mxu0 0
    %2889 = vmatpush1.bf16.msra.mxu0 %v2616
    %2890 = vmatprep.subr.bf16.mxu0 0
    %2891 = vmatpush1.bf16.msra.mxu0 %v2625
    %2892 = vmatprep.subr.bf16.mxu0 0
    %2893 = vmatpush1.bf16.msra.mxu0 0
    %2894 = vmatprep.subr.bf16.mxu0 0
    %2895 = vmatpush1.bf16.msra.mxu0 0
    %2896 = vmatprep.subr.bf16.mxu0 0
    %2897 = vmatpush1.bf16.msra.mxu0 0
    %2898 = vmatprep.subr.bf16.mxu0 0
    %2899 = vmatpush1.bf16.msra.mxu0 0
    %2900 = vmatprep.subr.bf16.mxu0 0
    %2901 = vmatpush1.bf16.msra.mxu0 0
    %2902 = vmatprep.subr.bf16.mxu0 0
    %2903 = vmatpush1.bf16.msra.mxu0 0
    %2904 = vmatprep.subr.bf16.mxu0 0
    %2905 = vmatpush1.bf16.msra.mxu0 0
    %2906 = vmatprep.subr.bf16.mxu0 0
    %2907 = vmatpush1.bf16.msra.mxu0 0
    %2908 = vmatprep.subr.bf16.mxu0 0
    %2909 = vmatpush1.bf16.msra.mxu0 0
    %2910 = vmatprep.subr.bf16.mxu0 0
    %2911 = vmatpush1.bf16.msra.mxu0 0
    %2912 = vmatprep.subr.bf16.mxu0 0
    %2913 = vmatpush1.bf16.msra.mxu0 0
    %2914 = vmatprep.subr.bf16.mxu0 0
    %2915 = vmatpush1.bf16.msra.mxu0 0
    %2916 = vmatprep.mubr.bf16.mxu0 0
    %2917 = vmatmul.mubr.bf16.gmra.mrb[0].mxu0 %v2873
    %v2918 = vpop.f32.mrb[0].mxu0
    %v2919 = vadd.f32 0.0, %v2918
    %v2920 = vpop.f32.mrb[0].mxu0
    %v2921 = vpop.f32.mrb[0].mxu0
    %v2922 = vadd.f32 0.0, %v2921
    %v2923 = vpop.f32.mrb[0].mxu0
    %2924 = vmatprep.mubr.bf16.mxu0 0
    %2925 = vmatmul.mubr.bf16.gmra.mrb[0].mxu0 %v2876
    %v2926 = vpop.f32.mrb[0].mxu0
    %v2927 = vadd.f32 0.0, %v2926
    %v2928 = vpop.f32.mrb[0].mxu0
    %v2929 = vpop.f32.mrb[0].mxu0
    %v2930 = vadd.f32 0.0, %v2929
    %v2931 = vpop.f32.mrb[0].mxu0
    %2932 = vmatprep.mubr.bf16.mxu0 0
    %2933 = vmatmul.mubr.bf16.gmra.mrb[0].mxu0 %v2879
    %v2934 = vpop.f32.mrb[0].mxu0
    %v2935 = vadd.f32 0.0, %v2934
    %v2936 = vpop.f32.mrb[0].mxu0
    %v2937 = vpop.f32.mrb[0].mxu0
    %v2938 = vadd.f32 0.0, %v2937
    %v2939 = vpop.f32.mrb[0].mxu0
    %2940 = vmatprep.mubr.bf16.mxu0 0
    %2941 = vmatmul.mubr.bf16.gmra.mrb[0].mxu0 %v2882
    %v2942 = vpop.f32.mrb[0].mxu0
    %v2943 = vadd.f32 0.0, %v2942
    %v2944 = vpop.f32.mrb[0].mxu0
    %v2945 = vpop.f32.mrb[0].mxu0
    %v2946 = vadd.f32 0.0, %v2945
    %v2947 = vpop.f32.mrb[0].mxu0
    %2948 = vdwg.mxu0
    %v2949 = vadd.f32 %v2813, %v2919
    %v2950 = vadd.f32 %v2816, %v2922
    %v2951 = vadd.f32 %v2821, %v2927
    %v2952 = vadd.f32 %v2824, %v2930
    %v2953 = vadd.f32 %v2829, %v2935
    %v2954 = vadd.f32 %v2832, %v2938
    %v2955 = vadd.f32 %v2837, %v2943
    %v2956 = vadd.f32 %v2840, %v2946
    %s2957 = scalar_lea.vmem %s6, 96
    %v2958 = vld [vmem:[%s2957] sm:$0xf]
    %v2959 = vld [vmem:[%s2957 + $0x4] sm:$0xf]
    %v2960 = vld [vmem:[%s2957 + $0x8] sm:$0xf]
    %v2961 = vld [vmem:[%s2957 + $0xc] sm:$0xf]
    %v2962 = vld [vmem:[%s2957 + $0x10] sm:$0xf]
    %v2963 = vld [vmem:[%s2957 + $0x14] sm:$0xf]
    %v2964 = vld [vmem:[%s2957 + $0x18] sm:$0xf]
    %v2965 = vld [vmem:[%s2957 + $0x1c] sm:$0xf]
    %v2974 = vunpack.c.l.b16 %v2958
    %v2975 = vunpack.c.l.b16 %v2959
    %v2976 = vunpack.c.l.b16 %v2960
    %v2977 = vunpack.c.l.b16 %v2961
    %v2978 = vunpack.c.l.b16 %v2962
    %v2979 = vunpack.c.l.b16 %v2963
    %v2980 = vunpack.c.l.b16 %v2964
    %v2981 = vunpack.c.l.b16 %v2965
    %v2982 = vpack.c.b16 %v2975, %v2974
    %v2983 = vpack.c.b16 %v2977, %v2976
    %v2984 = vpack.c.b16 %v2979, %v2978
    %v2985 = vpack.c.b16 %v2981, %v2980
    %v2987 = vsel %vm260, %v2982, 0
    %v2990 = vsel %vm260, %v2983, 0
    %v2993 = vsel %vm260, %v2984, 0
    %v2996 = vsel %vm260, %v2985, 0
    %2998 = vmatprep.subr.bf16.mxu0 0
    %2999 = vmatpush1.bf16.msra.mxu0 %v2599
    %3000 = vmatprep.subr.bf16.mxu0 0
    %3001 = vmatpush1.bf16.msra.mxu0 %v2608
    %3002 = vmatprep.subr.bf16.mxu0 0
    %3003 = vmatpush1.bf16.msra.mxu0 %v2617
    %3004 = vmatprep.subr.bf16.mxu0 0
    %3005 = vmatpush1.bf16.msra.mxu0 %v2626
    %3006 = vmatprep.subr.bf16.mxu0 0
    %3007 = vmatpush1.bf16.msra.mxu0 0
    %3008 = vmatprep.subr.bf16.mxu0 0
    %3009 = vmatpush1.bf16.msra.mxu0 0
    %3010 = vmatprep.subr.bf16.mxu0 0
    %3011 = vmatpush1.bf16.msra.mxu0 0
    %3012 = vmatprep.subr.bf16.mxu0 0
    %3013 = vmatpush1.bf16.msra.mxu0 0
    %3014 = vmatprep.subr.bf16.mxu0 0
    %3015 = vmatpush1.bf16.msra.mxu0 0
    %3016 = vmatprep.subr.bf16.mxu0 0
    %3017 = vmatpush1.bf16.msra.mxu0 0
    %3018 = vmatprep.subr.bf16.mxu0 0
    %3019 = vmatpush1.bf16.msra.mxu0 0
    %3020 = vmatprep.subr.bf16.mxu0 0
    %3021 = vmatpush1.bf16.msra.mxu0 0
    %3022 = vmatprep.subr.bf16.mxu0 0
    %3023 = vmatpush1.bf16.msra.mxu0 0
    %3024 = vmatprep.subr.bf16.mxu0 0
    %3025 = vmatpush1.bf16.msra.mxu0 0
    %3026 = vmatprep.subr.bf16.mxu0 0
    %3027 = vmatpush1.bf16.msra.mxu0 0
    %3028 = vmatprep.subr.bf16.mxu0 0
    %3029 = vmatpush1.bf16.msra.mxu0 0
    %3030 = vmatprep.mubr.bf16.mxu0 0
    %3031 = vmatmul.mubr.bf16.gmra.mrb[0].mxu0 %v2987
    %v3032 = vpop.f32.mrb[0].mxu0
    %v3033 = vadd.f32 0.0, %v3032
    %v3034 = vpop.f32.mrb[0].mxu0
    %v3035 = vpop.f32.mrb[0].mxu0
    %v3036 = vadd.f32 0.0, %v3035
    %v3037 = vpop.f32.mrb[0].mxu0
    %3038 = vmatprep.mubr.bf16.mxu0 0
    %3039 = vmatmul.mubr.bf16.gmra.mrb[0].mxu0 %v2990
    %v3040 = vpop.f32.mrb[0].mxu0
    %v3041 = vadd.f32 0.0, %v3040
    %v3042 = vpop.f32.mrb[0].mxu0
    %v3043 = vpop.f32.mrb[0].mxu0
    %v3044 = vadd.f32 0.0, %v3043
    %v3045 = vpop.f32.mrb[0].mxu0
    %3046 = vmatprep.mubr.bf16.mxu0 0
    %3047 = vmatmul.mubr.bf16.gmra.mrb[0].mxu0 %v2993
    %v3048 = vpop.f32.mrb[0].mxu0
    %v3049 = vadd.f32 0.0, %v3048
    %v3050 = vpop.f32.mrb[0].mxu0
    %v3051 = vpop.f32.mrb[0].mxu0
    %v3052 = vadd.f32 0.0, %v3051
    %v3053 = vpop.f32.mrb[0].mxu0
    %3054 = vmatprep.mubr.bf16.mxu0 0
    %3055 = vmatmul.mubr.bf16.gmra.mrb[0].mxu0 %v2996
    %v3056 = vpop.f32.mrb[0].mxu0
    %v3057 = vadd.f32 0.0, %v3056
    %v3058 = vpop.f32.mrb[0].mxu0
    %v3059 = vpop.f32.mrb[0].mxu0
    %v3060 = vadd.f32 0.0, %v3059
    %v3061 = vpop.f32.mrb[0].mxu0
    %3062 = vdwg.mxu0
    %v3063 = vadd.f32 %v2949, %v3033
    %v3064 = vadd.f32 %v2950, %v3036
    %v3065 = vadd.f32 %v2951, %v3041
    %v3066 = vadd.f32 %v2952, %v3044
    %v3067 = vadd.f32 %v2953, %v3049
    %v3068 = vadd.f32 %v2954, %v3052
    %v3069 = vadd.f32 %v2955, %v3057
    %v3070 = vadd.f32 %v2956, %v3060
    %s3071 = scalar_lea.vmem %s6, 128
    %v3072 = vld [vmem:[%s3071] sm:$0xf]
    %v3073 = vld [vmem:[%s3071 + $0x4] sm:$0xf]
    %v3074 = vld [vmem:[%s3071 + $0x8] sm:$0xf]
    %v3075 = vld [vmem:[%s3071 + $0xc] sm:$0xf]
    %v3076 = vld [vmem:[%s3071 + $0x10] sm:$0xf]
    %v3077 = vld [vmem:[%s3071 + $0x14] sm:$0xf]
    %v3078 = vld [vmem:[%s3071 + $0x18] sm:$0xf]
    %v3079 = vld [vmem:[%s3071 + $0x1c] sm:$0xf]
    %v3088 = vunpack.c.l.b16 %v3072
    %v3089 = vunpack.c.l.b16 %v3073
    %v3090 = vunpack.c.l.b16 %v3074
    %v3091 = vunpack.c.l.b16 %v3075
    %v3092 = vunpack.c.l.b16 %v3076
    %v3093 = vunpack.c.l.b16 %v3077
    %v3094 = vunpack.c.l.b16 %v3078
    %v3095 = vunpack.c.l.b16 %v3079
    %v3096 = vpack.c.b16 %v3089, %v3088
    %v3097 = vpack.c.b16 %v3091, %v3090
    %v3098 = vpack.c.b16 %v3093, %v3092
    %v3099 = vpack.c.b16 %v3095, %v3094
    %v3101 = vsel %vm260, %v3096, 0
    %v3104 = vsel %vm260, %v3097, 0
    %v3107 = vsel %vm260, %v3098, 0
    %v3110 = vsel %vm260, %v3099, 0
    %3112 = vmatprep.subr.bf16.mxu0 0
    %3113 = vmatpush1.bf16.msra.mxu0 %v2600
    %3114 = vmatprep.subr.bf16.mxu0 0
    %3115 = vmatpush1.bf16.msra.mxu0 %v2609
    %3116 = vmatprep.subr.bf16.mxu0 0
    %3117 = vmatpush1.bf16.msra.mxu0 %v2618
    %3118 = vmatprep.subr.bf16.mxu0 0
    %3119 = vmatpush1.bf16.msra.mxu0 %v2627
    %3120 = vmatprep.subr.bf16.mxu0 0
    %3121 = vmatpush1.bf16.msra.mxu0 0
    %3122 = vmatprep.subr.bf16.mxu0 0
    %3123 = vmatpush1.bf16.msra.mxu0 0
    %3124 = vmatprep.subr.bf16.mxu0 0
    %3125 = vmatpush1.bf16.msra.mxu0 0
    %3126 = vmatprep.subr.bf16.mxu0 0
    %3127 = vmatpush1.bf16.msra.mxu0 0
    %3128 = vmatprep.subr.bf16.mxu0 0
    %3129 = vmatpush1.bf16.msra.mxu0 0
    %3130 = vmatprep.subr.bf16.mxu0 0
    %3131 = vmatpush1.bf16.msra.mxu0 0
    %3132 = vmatprep.subr.bf16.mxu0 0
    %3133 = vmatpush1.bf16.msra.mxu0 0
    %3134 = vmatprep.subr.bf16.mxu0 0
    %3135 = vmatpush1.bf16.msra.mxu0 0
    %3136 = vmatprep.subr.bf16.mxu0 0
    %3137 = vmatpush1.bf16.msra.mxu0 0
    %3138 = vmatprep.subr.bf16.mxu0 0
    %3139 = vmatpush1.bf16.msra.mxu0 0
    %3140 = vmatprep.subr.bf16.mxu0 0
    %3141 = vmatpush1.bf16.msra.mxu0 0
    %3142 = vmatprep.subr.bf16.mxu0 0
    %3143 = vmatpush1.bf16.msra.mxu0 0
    %3144 = vmatprep.mubr.bf16.mxu0 0
    %3145 = vmatmul.mubr.bf16.gmra.mrb[0].mxu0 %v3101
    %v3146 = vpop.f32.mrb[0].mxu0
    %v3147 = vadd.f32 0.0, %v3146
    %v3148 = vpop.f32.mrb[0].mxu0
    %v3149 = vpop.f32.mrb[0].mxu0
    %v3150 = vadd.f32 0.0, %v3149
    %v3151 = vpop.f32.mrb[0].mxu0
    %3152 = vmatprep.mubr.bf16.mxu0 0
    %3153 = vmatmul.mubr.bf16.gmra.mrb[0].mxu0 %v3104
    %v3154 = vpop.f32.mrb[0].mxu0
    %v3155 = vadd.f32 0.0, %v3154
    %v3156 = vpop.f32.mrb[0].mxu0
    %v3157 = vpop.f32.mrb[0].mxu0
    %v3158 = vadd.f32 0.0, %v3157
    %v3159 = vpop.f32.mrb[0].mxu0
    %3160 = vmatprep.mubr.bf16.mxu0 0
    %3161 = vmatmul.mubr.bf16.gmra.mrb[0].mxu0 %v3107
    %v3162 = vpop.f32.mrb[0].mxu0
    %v3163 = vadd.f32 0.0, %v3162
    %v3164 = vpop.f32.mrb[0].mxu0
    %v3165 = vpop.f32.mrb[0].mxu0
    %v3166 = vadd.f32 0.0, %v3165
    %v3167 = vpop.f32.mrb[0].mxu0
    %3168 = vmatprep.mubr.bf16.mxu0 0
    %3169 = vmatmul.mubr.bf16.gmra.mrb[0].mxu0 %v3110
    %v3170 = vpop.f32.mrb[0].mxu0
    %v3171 = vadd.f32 0.0, %v3170
    %v3172 = vpop.f32.mrb[0].mxu0
    %v3173 = vpop.f32.mrb[0].mxu0
    %v3174 = vadd.f32 0.0, %v3173
    %v3175 = vpop.f32.mrb[0].mxu0
    %3176 = vdwg.mxu0
    %v3177 = vadd.f32 %v3063, %v3147
    %v3178 = vadd.f32 %v3064, %v3150
    %v3179 = vadd.f32 %v3065, %v3155
    %v3180 = vadd.f32 %v3066, %v3158
    %v3181 = vadd.f32 %v3067, %v3163
    %v3182 = vadd.f32 %v3068, %v3166
    %v3183 = vadd.f32 %v3069, %v3171
    %v3184 = vadd.f32 %v3070, %v3174
    %s3185 = scalar_lea.vmem %s6, 160
    %v3186 = vld [vmem:[%s3185] sm:$0xf]
    %v3187 = vld [vmem:[%s3185 + $0x4] sm:$0xf]
    %v3188 = vld [vmem:[%s3185 + $0x8] sm:$0xf]
    %v3189 = vld [vmem:[%s3185 + $0xc] sm:$0xf]
    %v3190 = vld [vmem:[%s3185 + $0x10] sm:$0xf]
    %v3191 = vld [vmem:[%s3185 + $0x14] sm:$0xf]
    %v3192 = vld [vmem:[%s3185 + $0x18] sm:$0xf]
    %v3193 = vld [vmem:[%s3185 + $0x1c] sm:$0xf]
    %v3202 = vunpack.c.l.b16 %v3186
    %v3203 = vunpack.c.l.b16 %v3187
    %v3204 = vunpack.c.l.b16 %v3188
    %v3205 = vunpack.c.l.b16 %v3189
    %v3206 = vunpack.c.l.b16 %v3190
    %v3207 = vunpack.c.l.b16 %v3191
    %v3208 = vunpack.c.l.b16 %v3192
    %v3209 = vunpack.c.l.b16 %v3193
    %v3210 = vpack.c.b16 %v3203, %v3202
    %v3211 = vpack.c.b16 %v3205, %v3204
    %v3212 = vpack.c.b16 %v3207, %v3206
    %v3213 = vpack.c.b16 %v3209, %v3208
    %v3215 = vsel %vm260, %v3210, 0
    %v3218 = vsel %vm260, %v3211, 0
    %v3221 = vsel %vm260, %v3212, 0
    %v3224 = vsel %vm260, %v3213, 0
    %3226 = vmatprep.subr.bf16.mxu0 0
    %3227 = vmatpush1.bf16.msra.mxu0 %v2601
    %3228 = vmatprep.subr.bf16.mxu0 0
    %3229 = vmatpush1.bf16.msra.mxu0 %v2610
    %3230 = vmatprep.subr.bf16.mxu0 0
    %3231 = vmatpush1.bf16.msra.mxu0 %v2619
    %3232 = vmatprep.subr.bf16.mxu0 0
    %3233 = vmatpush1.bf16.msra.mxu0 %v2628
    %3234 = vmatprep.subr.bf16.mxu0 0
    %3235 = vmatpush1.bf16.msra.mxu0 0
    %3236 = vmatprep.subr.bf16.mxu0 0
    %3237 = vmatpush1.bf16.msra.mxu0 0
    %3238 = vmatprep.subr.bf16.mxu0 0
    %3239 = vmatpush1.bf16.msra.mxu0 0
    %3240 = vmatprep.subr.bf16.mxu0 0
    %3241 = vmatpush1.bf16.msra.mxu0 0
    %3242 = vmatprep.subr.bf16.mxu0 0
    %3243 = vmatpush1.bf16.msra.mxu0 0
    %3244 = vmatprep.subr.bf16.mxu0 0
    %3245 = vmatpush1.bf16.msra.mxu0 0
    %3246 = vmatprep.subr.bf16.mxu0 0
    %3247 = vmatpush1.bf16.msra.mxu0 0
    %3248 = vmatprep.subr.bf16.mxu0 0
    %3249 = vmatpush1.bf16.msra.mxu0 0
    %3250 = vmatprep.subr.bf16.mxu0 0
    %3251 = vmatpush1.bf16.msra.mxu0 0
    %3252 = vmatprep.subr.bf16.mxu0 0
    %3253 = vmatpush1.bf16.msra.mxu0 0
    %3254 = vmatprep.subr.bf16.mxu0 0
    %3255 = vmatpush1.bf16.msra.mxu0 0
    %3256 = vmatprep.subr.bf16.mxu0 0
    %3257 = vmatpush1.bf16.msra.mxu0 0
    %3258 = vmatprep.mubr.bf16.mxu0 0
    %3259 = vmatmul.mubr.bf16.gmra.mrb[0].mxu0 %v3215
    %v3260 = vpop.f32.mrb[0].mxu0
    %v3261 = vadd.f32 0.0, %v3260
    %v3262 = vpop.f32.mrb[0].mxu0
    %v3263 = vpop.f32.mrb[0].mxu0
    %v3264 = vadd.f32 0.0, %v3263
    %v3265 = vpop.f32.mrb[0].mxu0
    %3266 = vmatprep.mubr.bf16.mxu0 0
    %3267 = vmatmul.mubr.bf16.gmra.mrb[0].mxu0 %v3218
    %v3268 = vpop.f32.mrb[0].mxu0
    %v3269 = vadd.f32 0.0, %v3268
    %v3270 = vpop.f32.mrb[0].mxu0
    %v3271 = vpop.f32.mrb[0].mxu0
    %v3272 = vadd.f32 0.0, %v3271
    %v3273 = vpop.f32.mrb[0].mxu0
    %3274 = vmatprep.mubr.bf16.mxu0 0
    %3275 = vmatmul.mubr.bf16.gmra.mrb[0].mxu0 %v3221
    %v3276 = vpop.f32.mrb[0].mxu0
    %v3277 = vadd.f32 0.0, %v3276
    %v3278 = vpop.f32.mrb[0].mxu0
    %v3279 = vpop.f32.mrb[0].mxu0
    %v3280 = vadd.f32 0.0, %v3279
    %v3281 = vpop.f32.mrb[0].mxu0
    %3282 = vmatprep.mubr.bf16.mxu0 0
    %3283 = vmatmul.mubr.bf16.gmra.mrb[0].mxu0 %v3224
    %v3284 = vpop.f32.mrb[0].mxu0
    %v3285 = vadd.f32 0.0, %v3284
    %v3286 = vpop.f32.mrb[0].mxu0
    %v3287 = vpop.f32.mrb[0].mxu0
    %v3288 = vadd.f32 0.0, %v3287
    %v3289 = vpop.f32.mrb[0].mxu0
    %3290 = vdwg.mxu0
    %v3291 = vadd.f32 %v3177, %v3261
    %v3292 = vadd.f32 %v3178, %v3264
    %v3293 = vadd.f32 %v3179, %v3269
    %v3294 = vadd.f32 %v3180, %v3272
    %v3295 = vadd.f32 %v3181, %v3277
    %v3296 = vadd.f32 %v3182, %v3280
    %v3297 = vadd.f32 %v3183, %v3285
    %v3298 = vadd.f32 %v3184, %v3288
    %s3299 = scalar_lea.vmem %s6, 192
    %v3300 = vld [vmem:[%s3299] sm:$0xf]
    %v3301 = vld [vmem:[%s3299 + $0x4] sm:$0xf]
    %v3302 = vld [vmem:[%s3299 + $0x8] sm:$0xf]
    %v3303 = vld [vmem:[%s3299 + $0xc] sm:$0xf]
    %v3304 = vld [vmem:[%s3299 + $0x10] sm:$0xf]
    %v3305 = vld [vmem:[%s3299 + $0x14] sm:$0xf]
    %v3306 = vld [vmem:[%s3299 + $0x18] sm:$0xf]
    %v3307 = vld [vmem:[%s3299 + $0x1c] sm:$0xf]
    %v3316 = vunpack.c.l.b16 %v3300
    %v3317 = vunpack.c.l.b16 %v3301
    %v3318 = vunpack.c.l.b16 %v3302
    %v3319 = vunpack.c.l.b16 %v3303
    %v3320 = vunpack.c.l.b16 %v3304
    %v3321 = vunpack.c.l.b16 %v3305
    %v3322 = vunpack.c.l.b16 %v3306
    %v3323 = vunpack.c.l.b16 %v3307
    %v3324 = vpack.c.b16 %v3317, %v3316
    %v3325 = vpack.c.b16 %v3319, %v3318
    %v3326 = vpack.c.b16 %v3321, %v3320
    %v3327 = vpack.c.b16 %v3323, %v3322
    %v3329 = vsel %vm260, %v3324, 0
    %v3332 = vsel %vm260, %v3325, 0
    %v3335 = vsel %vm260, %v3326, 0
    %v3338 = vsel %vm260, %v3327, 0
    %3340 = vmatprep.subr.bf16.mxu0 0
    %3341 = vmatpush1.bf16.msra.mxu0 %v2602
    %3342 = vmatprep.subr.bf16.mxu0 0
    %3343 = vmatpush1.bf16.msra.mxu0 %v2611
    %3344 = vmatprep.subr.bf16.mxu0 0
    %3345 = vmatpush1.bf16.msra.mxu0 %v2620
    %3346 = vmatprep.subr.bf16.mxu0 0
    %3347 = vmatpush1.bf16.msra.mxu0 %v2629
    %3348 = vmatprep.subr.bf16.mxu0 0
    %3349 = vmatpush1.bf16.msra.mxu0 0
    %3350 = vmatprep.subr.bf16.mxu0 0
    %3351 = vmatpush1.bf16.msra.mxu0 0
    %3352 = vmatprep.subr.bf16.mxu0 0
    %3353 = vmatpush1.bf16.msra.mxu0 0
    %3354 = vmatprep.subr.bf16.mxu0 0
    %3355 = vmatpush1.bf16.msra.mxu0 0
    %3356 = vmatprep.subr.bf16.mxu0 0
    %3357 = vmatpush1.bf16.msra.mxu0 0
    %3358 = vmatprep.subr.bf16.mxu0 0
    %3359 = vmatpush1.bf16.msra.mxu0 0
    %3360 = vmatprep.subr.bf16.mxu0 0
    %3361 = vmatpush1.bf16.msra.mxu0 0
    %3362 = vmatprep.subr.bf16.mxu0 0
    %3363 = vmatpush1.bf16.msra.mxu0 0
    %3364 = vmatprep.subr.bf16.mxu0 0
    %3365 = vmatpush1.bf16.msra.mxu0 0
    %3366 = vmatprep.subr.bf16.mxu0 0
    %3367 = vmatpush1.bf16.msra.mxu0 0
    %3368 = vmatprep.subr.bf16.mxu0 0
    %3369 = vmatpush1.bf16.msra.mxu0 0
    %3370 = vmatprep.subr.bf16.mxu0 0
    %3371 = vmatpush1.bf16.msra.mxu0 0
    %3372 = vmatprep.mubr.bf16.mxu0 0
    %3373 = vmatmul.mubr.bf16.gmra.mrb[0].mxu0 %v3329
    %v3374 = vpop.f32.mrb[0].mxu0
    %v3375 = vadd.f32 0.0, %v3374
    %v3376 = vpop.f32.mrb[0].mxu0
    %v3377 = vpop.f32.mrb[0].mxu0
    %v3378 = vadd.f32 0.0, %v3377
    %v3379 = vpop.f32.mrb[0].mxu0
    %3380 = vmatprep.mubr.bf16.mxu0 0
    %3381 = vmatmul.mubr.bf16.gmra.mrb[0].mxu0 %v3332
    %v3382 = vpop.f32.mrb[0].mxu0
    %v3383 = vadd.f32 0.0, %v3382
    %v3384 = vpop.f32.mrb[0].mxu0
    %v3385 = vpop.f32.mrb[0].mxu0
    %v3386 = vadd.f32 0.0, %v3385
    %v3387 = vpop.f32.mrb[0].mxu0
    %3388 = vmatprep.mubr.bf16.mxu0 0
    %3389 = vmatmul.mubr.bf16.gmra.mrb[0].mxu0 %v3335
    %v3390 = vpop.f32.mrb[0].mxu0
    %v3391 = vadd.f32 0.0, %v3390
    %v3392 = vpop.f32.mrb[0].mxu0
    %v3393 = vpop.f32.mrb[0].mxu0
    %v3394 = vadd.f32 0.0, %v3393
    %v3395 = vpop.f32.mrb[0].mxu0
    %3396 = vmatprep.mubr.bf16.mxu0 0
    %3397 = vmatmul.mubr.bf16.gmra.mrb[0].mxu0 %v3338
    %v3398 = vpop.f32.mrb[0].mxu0
    %v3399 = vadd.f32 0.0, %v3398
    %v3400 = vpop.f32.mrb[0].mxu0
    %v3401 = vpop.f32.mrb[0].mxu0
    %v3402 = vadd.f32 0.0, %v3401
    %v3403 = vpop.f32.mrb[0].mxu0
    %3404 = vdwg.mxu0
    %v3405 = vadd.f32 %v3291, %v3375
    %v3406 = vadd.f32 %v3292, %v3378
    %v3407 = vadd.f32 %v3293, %v3383
    %v3408 = vadd.f32 %v3294, %v3386
    %v3409 = vadd.f32 %v3295, %v3391
    %v3410 = vadd.f32 %v3296, %v3394
    %v3411 = vadd.f32 %v3297, %v3399
    %v3412 = vadd.f32 %v3298, %v3402
    %s3413 = scalar_lea.vmem %s6, 224
    %v3414 = vld [vmem:[%s3413] sm:$0xf]
    %v3415 = vld [vmem:[%s3413 + $0x4] sm:$0xf]
    %v3416 = vld [vmem:[%s3413 + $0x8] sm:$0xf]
    %v3417 = vld [vmem:[%s3413 + $0xc] sm:$0xf]
    %v3418 = vld [vmem:[%s3413 + $0x10] sm:$0xf]
    %v3419 = vld [vmem:[%s3413 + $0x14] sm:$0xf]
    %v3420 = vld [vmem:[%s3413 + $0x18] sm:$0xf]
    %v3421 = vld [vmem:[%s3413 + $0x1c] sm:$0xf]
    %v3430 = vunpack.c.l.b16 %v3414
    %v3431 = vunpack.c.l.b16 %v3415
    %v3432 = vunpack.c.l.b16 %v3416
    %v3433 = vunpack.c.l.b16 %v3417
    %v3434 = vunpack.c.l.b16 %v3418
    %v3435 = vunpack.c.l.b16 %v3419
    %v3436 = vunpack.c.l.b16 %v3420
    %v3437 = vunpack.c.l.b16 %v3421
    %v3438 = vpack.c.b16 %v3431, %v3430
    %v3439 = vpack.c.b16 %v3433, %v3432
    %v3440 = vpack.c.b16 %v3435, %v3434
    %v3441 = vpack.c.b16 %v3437, %v3436
    %v3443 = vsel %vm260, %v3438, 0
    %v3446 = vsel %vm260, %v3439, 0
    %v3449 = vsel %vm260, %v3440, 0
    %v3452 = vsel %vm260, %v3441, 0
    %3454 = vmatprep.subr.bf16.mxu0 0
    %3455 = vmatpush1.bf16.msra.mxu0 %v2603
    %3456 = vmatprep.subr.bf16.mxu0 0
    %3457 = vmatpush1.bf16.msra.mxu0 %v2612
    %3458 = vmatprep.subr.bf16.mxu0 0
    %3459 = vmatpush1.bf16.msra.mxu0 %v2621
    %3460 = vmatprep.subr.bf16.mxu0 0
    %3461 = vmatpush1.bf16.msra.mxu0 %v2630
    %3462 = vmatprep.subr.bf16.mxu0 0
    %3463 = vmatpush1.bf16.msra.mxu0 0
    %3464 = vmatprep.subr.bf16.mxu0 0
    %3465 = vmatpush1.bf16.msra.mxu0 0
    %3466 = vmatprep.subr.bf16.mxu0 0
    %3467 = vmatpush1.bf16.msra.mxu0 0
    %3468 = vmatprep.subr.bf16.mxu0 0
    %3469 = vmatpush1.bf16.msra.mxu0 0
    %3470 = vmatprep.subr.bf16.mxu0 0
    %3471 = vmatpush1.bf16.msra.mxu0 0
    %3472 = vmatprep.subr.bf16.mxu0 0
    %3473 = vmatpush1.bf16.msra.mxu0 0
    %3474 = vmatprep.subr.bf16.mxu0 0
    %3475 = vmatpush1.bf16.msra.mxu0 0
    %3476 = vmatprep.subr.bf16.mxu0 0
    %3477 = vmatpush1.bf16.msra.mxu0 0
    %3478 = vmatprep.subr.bf16.mxu0 0
    %3479 = vmatpush1.bf16.msra.mxu0 0
    %3480 = vmatprep.subr.bf16.mxu0 0
    %3481 = vmatpush1.bf16.msra.mxu0 0
    %3482 = vmatprep.subr.bf16.mxu0 0
    %3483 = vmatpush1.bf16.msra.mxu0 0
    %3484 = vmatprep.subr.bf16.mxu0 0
    %3485 = vmatpush1.bf16.msra.mxu0 0
    %3486 = vmatprep.mubr.bf16.mxu0 0
    %3487 = vmatmul.mubr.bf16.gmra.mrb[0].mxu0 %v3443
    %v3488 = vpop.f32.mrb[0].mxu0
    %v3489 = vadd.f32 0.0, %v3488
    %v3490 = vpop.f32.mrb[0].mxu0
    %v3491 = vpop.f32.mrb[0].mxu0
    %v3492 = vadd.f32 0.0, %v3491
    %v3493 = vpop.f32.mrb[0].mxu0
    %3494 = vmatprep.mubr.bf16.mxu0 0
    %3495 = vmatmul.mubr.bf16.gmra.mrb[0].mxu0 %v3446
    %v3496 = vpop.f32.mrb[0].mxu0
    %v3497 = vadd.f32 0.0, %v3496
    %v3498 = vpop.f32.mrb[0].mxu0
    %v3499 = vpop.f32.mrb[0].mxu0
    %v3500 = vadd.f32 0.0, %v3499
    %v3501 = vpop.f32.mrb[0].mxu0
    %3502 = vmatprep.mubr.bf16.mxu0 0
    %3503 = vmatmul.mubr.bf16.gmra.mrb[0].mxu0 %v3449
    %v3504 = vpop.f32.mrb[0].mxu0
    %v3505 = vadd.f32 0.0, %v3504
    %v3506 = vpop.f32.mrb[0].mxu0
    %v3507 = vpop.f32.mrb[0].mxu0
    %v3508 = vadd.f32 0.0, %v3507
    %v3509 = vpop.f32.mrb[0].mxu0
    %3510 = vmatprep.mubr.bf16.mxu0 0
    %3511 = vmatmul.mubr.bf16.gmra.mrb[0].mxu0 %v3452
    %v3512 = vpop.f32.mrb[0].mxu0
    %v3513 = vadd.f32 0.0, %v3512
    %v3514 = vpop.f32.mrb[0].mxu0
    %v3515 = vpop.f32.mrb[0].mxu0
    %v3516 = vadd.f32 0.0, %v3515
    %v3517 = vpop.f32.mrb[0].mxu0
    %3518 = vdwg.mxu0
    %v3519 = vadd.f32 %v3405, %v3489
    %v3520 = vadd.f32 %v3406, %v3492
    %v3521 = vadd.f32 %v3407, %v3497
    %v3522 = vadd.f32 %v3408, %v3500
    %v3523 = vadd.f32 %v3409, %v3505
    %v3524 = vadd.f32 %v3410, %v3508
    %v3525 = vadd.f32 %v3411, %v3513
    %v3526 = vadd.f32 %v3412, %v3516
    %s3527 = scalar_lea.vmem %s6, 256
    %v3528 = vld [vmem:[%s3527] sm:$0xf]
    %v3529 = vld [vmem:[%s3527 + $0x4] sm:$0xf]
    %v3530 = vld [vmem:[%s3527 + $0x8] sm:$0xf]
    %v3531 = vld [vmem:[%s3527 + $0xc] sm:$0xf]
    %v3532 = vld [vmem:[%s3527 + $0x10] sm:$0xf]
    %v3533 = vld [vmem:[%s3527 + $0x14] sm:$0xf]
    %v3534 = vld [vmem:[%s3527 + $0x18] sm:$0xf]
    %v3535 = vld [vmem:[%s3527 + $0x1c] sm:$0xf]
    %v3544 = vunpack.c.l.b16 %v3528
    %v3545 = vunpack.c.l.b16 %v3529
    %v3546 = vunpack.c.l.b16 %v3530
    %v3547 = vunpack.c.l.b16 %v3531
    %v3548 = vunpack.c.l.b16 %v3532
    %v3549 = vunpack.c.l.b16 %v3533
    %v3550 = vunpack.c.l.b16 %v3534
    %v3551 = vunpack.c.l.b16 %v3535
    %v3552 = vpack.c.b16 %v3545, %v3544
    %v3553 = vpack.c.b16 %v3547, %v3546
    %v3554 = vpack.c.b16 %v3549, %v3548
    %v3555 = vpack.c.b16 %v3551, %v3550
    %v3557 = vsel %vm260, %v3552, 0
    %v3560 = vsel %vm260, %v3553, 0
    %v3563 = vsel %vm260, %v3554, 0
    %v3566 = vsel %vm260, %v3555, 0
    %3568 = vmatprep.subr.bf16.mxu0 0
    %3569 = vmatpush1.bf16.msra.mxu0 %v2604
    %3570 = vmatprep.subr.bf16.mxu0 0
    %3571 = vmatpush1.bf16.msra.mxu0 %v2613
    %3572 = vmatprep.subr.bf16.mxu0 0
    %3573 = vmatpush1.bf16.msra.mxu0 %v2622
    %3574 = vmatprep.subr.bf16.mxu0 0
    %3575 = vmatpush1.bf16.msra.mxu0 %v2631
    %3576 = vmatprep.subr.bf16.mxu0 0
    %3577 = vmatpush1.bf16.msra.mxu0 0
    %3578 = vmatprep.subr.bf16.mxu0 0
    %3579 = vmatpush1.bf16.msra.mxu0 0
    %3580 = vmatprep.subr.bf16.mxu0 0
    %3581 = vmatpush1.bf16.msra.mxu0 0
    %3582 = vmatprep.subr.bf16.mxu0 0
    %3583 = vmatpush1.bf16.msra.mxu0 0
    %3584 = vmatprep.subr.bf16.mxu0 0
    %3585 = vmatpush1.bf16.msra.mxu0 0
    %3586 = vmatprep.subr.bf16.mxu0 0
    %3587 = vmatpush1.bf16.msra.mxu0 0
    %3588 = vmatprep.subr.bf16.mxu0 0
    %3589 = vmatpush1.bf16.msra.mxu0 0
    %3590 = vmatprep.subr.bf16.mxu0 0
    %3591 = vmatpush1.bf16.msra.mxu0 0
    %3592 = vmatprep.subr.bf16.mxu0 0
    %3593 = vmatpush1.bf16.msra.mxu0 0
    %3594 = vmatprep.subr.bf16.mxu0 0
    %3595 = vmatpush1.bf16.msra.mxu0 0
    %3596 = vmatprep.subr.bf16.mxu0 0
    %3597 = vmatpush1.bf16.msra.mxu0 0
    %3598 = vmatprep.subr.bf16.mxu0 0
    %3599 = vmatpush1.bf16.msra.mxu0 0
    %3600 = vmatprep.mubr.bf16.mxu0 0
    %3601 = vmatmul.mubr.bf16.gmra.mrb[0].mxu0 %v3557
    %v3602 = vpop.f32.mrb[0].mxu0
    %v3603 = vadd.f32 0.0, %v3602
    %v3604 = vpop.f32.mrb[0].mxu0
    %v3605 = vpop.f32.mrb[0].mxu0
    %v3606 = vadd.f32 0.0, %v3605
    %v3607 = vpop.f32.mrb[0].mxu0
    %3608 = vmatprep.mubr.bf16.mxu0 0
    %3609 = vmatmul.mubr.bf16.gmra.mrb[0].mxu0 %v3560
    %v3610 = vpop.f32.mrb[0].mxu0
    %v3611 = vadd.f32 0.0, %v3610
    %v3612 = vpop.f32.mrb[0].mxu0
    %v3613 = vpop.f32.mrb[0].mxu0
    %v3614 = vadd.f32 0.0, %v3613
    %v3615 = vpop.f32.mrb[0].mxu0
    %3616 = vmatprep.mubr.bf16.mxu0 0
    %3617 = vmatmul.mubr.bf16.gmra.mrb[0].mxu0 %v3563
    %v3618 = vpop.f32.mrb[0].mxu0
    %v3619 = vadd.f32 0.0, %v3618
    %v3620 = vpop.f32.mrb[0].mxu0
    %v3621 = vpop.f32.mrb[0].mxu0
    %v3622 = vadd.f32 0.0, %v3621
    %v3623 = vpop.f32.mrb[0].mxu0
    %3624 = vmatprep.mubr.bf16.mxu0 0
    %3625 = vmatmul.mubr.bf16.gmra.mrb[0].mxu0 %v3566
    %v3626 = vpop.f32.mrb[0].mxu0
    %v3627 = vadd.f32 0.0, %v3626
    %v3628 = vpop.f32.mrb[0].mxu0
    %v3629 = vpop.f32.mrb[0].mxu0
    %v3630 = vadd.f32 0.0, %v3629
    %v3631 = vpop.f32.mrb[0].mxu0
    %3632 = vdwg.mxu0
    %v3633 = vadd.f32 %v3519, %v3603
    %v3634 = vadd.f32 %v3520, %v3606
    %v3635 = vadd.f32 %v3521, %v3611
    %v3636 = vadd.f32 %v3522, %v3614
    %v3637 = vadd.f32 %v3523, %v3619
    %v3638 = vadd.f32 %v3524, %v3622
    %v3639 = vadd.f32 %v3525, %v3627
    %v3640 = vadd.f32 %v3526, %v3630
    %v3641 = vld [vmem:[%s7] sm:$0xff]
    %v3642 = vld [vmem:[%s7 + $0x8] sm:$0xff]
    %v3643 = vld [vmem:[%s7 + $0x10] sm:$0xff]
    %v3644 = vld [vmem:[%s7 + $0x18] sm:$0xff]
    %v3645 = vld [vmem:[%s7 + $0x20] sm:$0xff]
    %v3646 = vld [vmem:[%s7 + $0x28] sm:$0xff]
    %v3647 = vld [vmem:[%s7 + $0x30] sm:$0xff]
    %v3648 = vld [vmem:[%s7 + $0x38] sm:$0xff]
    %3650 = vset.pattern.permute.xlu0 0
    %3651 = vperm.xlu0 %3650, %v3641
    %v3652 = vpop.permute.xlu0 %3651
    %3655 = vset.pattern.permute.xlu0 0
    %3656 = vperm.xlu0 %3655, %v3642
    %v3657 = vpop.permute.xlu0 %3656
    %3660 = vset.pattern.permute.xlu0 0
    %3661 = vperm.xlu0 %3660, %v3643
    %v3662 = vpop.permute.xlu0 %3661
    %3665 = vset.pattern.permute.xlu0 0
    %3666 = vperm.xlu0 %3665, %v3644
    %v3667 = vpop.permute.xlu0 %3666
    %3670 = vset.pattern.permute.xlu0 0
    %3671 = vperm.xlu0 %3670, %v3645
    %v3672 = vpop.permute.xlu0 %3671
    %3675 = vset.pattern.permute.xlu0 0
    %3676 = vperm.xlu0 %3675, %v3646
    %v3677 = vpop.permute.xlu0 %3676
    %3680 = vset.pattern.permute.xlu0 0
    %3681 = vperm.xlu0 %3680, %v3647
    %v3682 = vpop.permute.xlu0 %3681
    %3685 = vset.pattern.permute.xlu0 0
    %3686 = vperm.xlu0 %3685, %v3648
    %v3687 = vpop.permute.xlu0 %3686
    %v3689 = vadd.f32 %v3633, %v3652
    %v3690 = vadd.f32 %v3634, %v3657
    %v3691 = vadd.f32 %v3635, %v3662
    %v3692 = vadd.f32 %v3636, %v3667
    %v3693 = vadd.f32 %v3637, %v3672
    %v3694 = vadd.f32 %v3638, %v3677
    %v3695 = vadd.f32 %v3639, %v3682
    %v3696 = vadd.f32 %v3640, %v3687
    %v3697 = vld [vmem:[%s8] sm:$0xf]
    %v3698 = vld [vmem:[%s8 + $0x4] sm:$0xf]
    %v3699 = vld [vmem:[%s8 + $0x8] sm:$0xf]
    %v3700 = vld [vmem:[%s8 + $0xc] sm:$0xf]
    %v3701 = vld [vmem:[%s8 + $0x10] sm:$0xf]
    %v3702 = vld [vmem:[%s8 + $0x14] sm:$0xf]
    %v3703 = vld [vmem:[%s8 + $0x18] sm:$0xf]
    %v3704 = vld [vmem:[%s8 + $0x1c] sm:$0xf]
    %v3705 = vld [vmem:[#allocation5] sm:$0xf]
    %v3706 = vld [vmem:[#allocation5 + $0x4] sm:$0xf]
    %v3707 = vld [vmem:[#allocation5 + $0x8] sm:$0xf]
    %v3708 = vld [vmem:[#allocation5 + $0xc] sm:$0xf]
    %v3709 = vld [vmem:[#allocation5 + $0x10] sm:$0xf]
    %v3710 = vld [vmem:[#allocation5 + $0x14] sm:$0xf]
    %v3711 = vld [vmem:[#allocation5 + $0x18] sm:$0xf]
    %v3712 = vld [vmem:[#allocation5 + $0x1c] sm:$0xf]
    %v3713 = vld [vmem:[%s9] sm:$0xff]
    %v3714 = vld [vmem:[%s9 + $0x8] sm:$0xff]
    %v3715 = vld [vmem:[%s9 + $0x10] sm:$0xff]
    %v3716 = vld [vmem:[%s9 + $0x18] sm:$0xff]
    %v3717 = vld [vmem:[%s9 + $0x20] sm:$0xff]
    %v3718 = vld [vmem:[%s9 + $0x28] sm:$0xff]
    %v3719 = vld [vmem:[%s9 + $0x30] sm:$0xff]
    %v3720 = vld [vmem:[%s9 + $0x38] sm:$0xff]
    %3722 = vset.pattern.permute.xlu0 0
    %3723 = vperm.xlu0 %3722, %v3713
    %v3724 = vpop.permute.xlu0 %3723
    %3727 = vset.pattern.permute.xlu0 0
    %3728 = vperm.xlu0 %3727, %v3714
    %v3729 = vpop.permute.xlu0 %3728
    %3732 = vset.pattern.permute.xlu0 0
    %3733 = vperm.xlu0 %3732, %v3715
    %v3734 = vpop.permute.xlu0 %3733
    %3737 = vset.pattern.permute.xlu0 0
    %3738 = vperm.xlu0 %3737, %v3716
    %v3739 = vpop.permute.xlu0 %3738
    %3742 = vset.pattern.permute.xlu0 0
    %3743 = vperm.xlu0 %3742, %v3717
    %v3744 = vpop.permute.xlu0 %3743
    %3747 = vset.pattern.permute.xlu0 0
    %3748 = vperm.xlu0 %3747, %v3718
    %v3749 = vpop.permute.xlu0 %3748
    %3752 = vset.pattern.permute.xlu0 0
    %3753 = vperm.xlu0 %3752, %v3719
    %v3754 = vpop.permute.xlu0 %3753
    %3757 = vset.pattern.permute.xlu0 0
    %3758 = vperm.xlu0 %3757, %v3720
    %v3759 = vpop.permute.xlu0 %3758
    %v3769 = vunpack.c.l.b16 %v3697
    %v3770 = vunpack.c.l.b16 %v3698
    %v3771 = vunpack.c.l.b16 %v3699
    %v3772 = vunpack.c.l.b16 %v3700
    %v3773 = vunpack.c.l.b16 %v3701
    %v3774 = vunpack.c.l.b16 %v3702
    %v3775 = vunpack.c.l.b16 %v3703
    %v3776 = vunpack.c.l.b16 %v3704
    %v3777 = vpack.c.b16 %v3770, %v3769
    %v3778 = vpack.c.b16 %v3772, %v3771
    %v3779 = vpack.c.b16 %v3774, %v3773
    %v3780 = vpack.c.b16 %v3776, %v3775
    %v3789 = vunpack.c.l.b16 %v3705
    %v3790 = vunpack.c.l.b16 %v3706
    %v3791 = vunpack.c.l.b16 %v3707
    %v3792 = vunpack.c.l.b16 %v3708
    %v3793 = vunpack.c.l.b16 %v3709
    %v3794 = vunpack.c.l.b16 %v3710
    %v3795 = vunpack.c.l.b16 %v3711
    %v3796 = vunpack.c.l.b16 %v3712
    %v3797 = vpack.c.b16 %v3790, %v3789
    %v3798 = vpack.c.b16 %v3792, %v3791
    %v3799 = vpack.c.b16 %v3794, %v3793
    %v3800 = vpack.c.b16 %v3796, %v3795
    %v3806 = vsel %vm260, %v3777, 0
    %v3809 = vsel %vm260, %v3778, 0
    %v3812 = vsel %vm260, %v3779, 0
    %v3815 = vsel %vm260, %v3780, 0
    %3817 = vmatprep.subr.bf16.mxu0 0
    %3818 = vmatpush1.bf16.msra.mxu0 %v3797
    %3819 = vmatprep.subr.bf16.mxu0 0
    %3820 = vmatpush1.bf16.msra.mxu0 %v3798
    %3821 = vmatprep.subr.bf16.mxu0 0
    %3822 = vmatpush1.bf16.msra.mxu0 %v3799
    %3823 = vmatprep.subr.bf16.mxu0 0
    %3824 = vmatpush1.bf16.msra.mxu0 %v3800
    %3825 = vmatprep.subr.bf16.mxu0 0
    %3826 = vmatpush1.bf16.msra.mxu0 0
    %3827 = vmatprep.subr.bf16.mxu0 0
    %3828 = vmatpush1.bf16.msra.mxu0 0
    %3829 = vmatprep.subr.bf16.mxu0 0
    %3830 = vmatpush1.bf16.msra.mxu0 0
    %3831 = vmatprep.subr.bf16.mxu0 0
    %3832 = vmatpush1.bf16.msra.mxu0 0
    %3833 = vmatprep.subr.bf16.mxu0 0
    %3834 = vmatpush1.bf16.msra.mxu0 0
    %3835 = vmatprep.subr.bf16.mxu0 0
    %3836 = vmatpush1.bf16.msra.mxu0 0
    %3837 = vmatprep.subr.bf16.mxu0 0
    %3838 = vmatpush1.bf16.msra.mxu0 0
    %3839 = vmatprep.subr.bf16.mxu0 0
    %3840 = vmatpush1.bf16.msra.mxu0 0
    %3841 = vmatprep.subr.bf16.mxu0 0
    %3842 = vmatpush1.bf16.msra.mxu0 0
    %3843 = vmatprep.subr.bf16.mxu0 0
    %3844 = vmatpush1.bf16.msra.mxu0 0
    %3845 = vmatprep.subr.bf16.mxu0 0
    %3846 = vmatpush1.bf16.msra.mxu0 0
    %3847 = vmatprep.subr.bf16.mxu0 0
    %3848 = vmatpush1.bf16.msra.mxu0 0
    %3849 = vmatprep.mubr.bf16.mxu0 0
    %3850 = vmatmul.mubr.bf16.gmra.mrb[0].mxu0 %v3806
    %v3851 = vpop.f32.mrb[0].mxu0
    %v3852 = vadd.f32 %v3724, %v3851
    %v3853 = vpop.f32.mrb[0].mxu0
    %v3854 = vpop.f32.mrb[0].mxu0
    %v3855 = vadd.f32 %v3729, %v3854
    %v3856 = vpop.f32.mrb[0].mxu0
    %3857 = vmatprep.mubr.bf16.mxu0 0
    %3858 = vmatmul.mubr.bf16.gmra.mrb[0].mxu0 %v3809
    %v3859 = vpop.f32.mrb[0].mxu0
    %v3860 = vadd.f32 %v3734, %v3859
    %v3861 = vpop.f32.mrb[0].mxu0
    %v3862 = vpop.f32.mrb[0].mxu0
    %v3863 = vadd.f32 %v3739, %v3862
    %v3864 = vpop.f32.mrb[0].mxu0
    %3865 = vmatprep.mubr.bf16.mxu0 0
    %3866 = vmatmul.mubr.bf16.gmra.mrb[0].mxu0 %v3812
    %v3867 = vpop.f32.mrb[0].mxu0
    %v3868 = vadd.f32 %v3744, %v3867
    %v3869 = vpop.f32.mrb[0].mxu0
    %v3870 = vpop.f32.mrb[0].mxu0
    %v3871 = vadd.f32 %v3749, %v3870
    %v3872 = vpop.f32.mrb[0].mxu0
    %3873 = vmatprep.mubr.bf16.mxu0 0
    %3874 = vmatmul.mubr.bf16.gmra.mrb[0].mxu0 %v3815
    %v3875 = vpop.f32.mrb[0].mxu0
    %v3876 = vadd.f32 %v3754, %v3875
    %v3877 = vpop.f32.mrb[0].mxu0
    %v3878 = vpop.f32.mrb[0].mxu0
    %v3879 = vadd.f32 %v3759, %v3878
    %v3880 = vpop.f32.mrb[0].mxu0
    %3881 = vdwg.mxu0
    %v3882 = vadd.f32 %v3689, %v3852
    %v3883 = vadd.f32 %v3690, %v3855
    %v3884 = vadd.f32 %v3691, %v3860
    %v3885 = vadd.f32 %v3692, %v3863
    %v3886 = vadd.f32 %v3693, %v3868
    %v3887 = vadd.f32 %v3694, %v3871
    %v3888 = vadd.f32 %v3695, %v3876
    %v3889 = vadd.f32 %v3696, %v3879
    %v3890 = vmax.f32 %v3882, 0.0
    %v3891 = vmax.f32 %v3883, 0.0
    %v3892 = vmax.f32 %v3884, 0.0
    %v3893 = vmax.f32 %v3885, 0.0
    %v3894 = vmax.f32 %v3886, 0.0
    %v3895 = vmax.f32 %v3887, 0.0
    %v3896 = vmax.f32 %v3888, 0.0
    %v3897 = vmax.f32 %v3889, 0.0
    %v3898 = vld [vmem:[%s10] sm:$0x3]
    %3899 = vmatprep.subr.mxu0 0.0
    %3900 = vmatpush1.xpose.msra.mxu0 %v3890
    %3901 = vmatprep.subr.mxu0 0.0
    %3902 = vmatpush1.xpose.msra.mxu0 %v3891
    %3903 = vmatprep.subr.mxu0 0.0
    %3904 = vmatpush1.xpose.msra.mxu0 %v3892
    %3905 = vmatprep.subr.mxu0 0.0
    %3906 = vmatpush1.xpose.msra.mxu0 %v3893
    %3907 = vmatprep.subr.mxu0 0.0
    %3908 = vmatpush1.xpose.msra.mxu0 %v3894
    %3909 = vmatprep.subr.mxu0 0.0
    %3910 = vmatpush1.xpose.msra.mxu0 %v3895
    %3911 = vmatprep.subr.mxu0 0.0
    %3912 = vmatpush1.xpose.msra.mxu0 %v3896
    %3913 = vmatprep.subr.mxu0 0.0
    %3914 = vmatpush1.xpose.msra.mxu0 %v3897
    %3915 = vmatprep.subr.mxu0 0.0
    %3916 = vmatpush1.xpose.msra.mxu0 0.0
    %3917 = vmatprep.subr.mxu0 0.0
    %3918 = vmatpush1.xpose.msra.mxu0 0.0
    %3919 = vmatprep.subr.mxu0 0.0
    %3920 = vmatpush1.xpose.msra.mxu0 0.0
    %3921 = vmatprep.subr.mxu0 0.0
    %3922 = vmatpush1.xpose.msra.mxu0 0.0
    %3923 = vmatprep.subr.mxu0 0.0
    %3924 = vmatpush1.xpose.msra.mxu0 0.0
    %3925 = vmatprep.subr.mxu0 0.0
    %3926 = vmatpush1.xpose.msra.mxu0 0.0
    %3927 = vmatprep.subr.mxu0 0.0
    %3928 = vmatpush1.xpose.msra.mxu0 0.0
    %3929 = vmatprep.subr.mxu0 0.0
    %3930 = vmatpush1.xpose.msra.mxu0 0.0
    %3931 = vmatprep.subr.mxu0 0.0
    %3932 = vmatpush1.xpose.msra.mxu0 0.0
    %3933 = vmatprep.subr.mxu0 0.0
    %3934 = vmatpush1.xpose.msra.mxu0 0.0
    %3935 = vmatprep.subr.mxu0 0.0
    %3936 = vmatpush1.xpose.msra.mxu0 0.0
    %3937 = vmatprep.subr.mxu0 0.0
    %3938 = vmatpush1.xpose.msra.mxu0 0.0
    %3939 = vmatprep.subr.mxu0 0.0
    %3940 = vmatpush1.xpose.msra.mxu0 0.0
    %3941 = vmatprep.subr.mxu0 0.0
    %3942 = vmatpush1.xpose.msra.mxu0 0.0
    %3943 = vmatprep.subr.mxu0 0.0
    %3944 = vmatpush1.xpose.msra.mxu0 0.0
    %3945 = vmatprep.subr.mxu0 0.0
    %3946 = vmatpush1.xpose.msra.mxu0 0.0
    %3947 = vmatprep.subr.mxu0 0.0
    %3948 = vmatpush1.xpose.msra.mxu0 0.0
    %3949 = vmatprep.subr.mxu0 0.0
    %3950 = vmatpush1.xpose.msra.mxu0 0.0
    %3951 = vmatprep.subr.mxu0 0.0
    %3952 = vmatpush1.xpose.msra.mxu0 0.0
    %3953 = vmatprep.subr.mxu0 0.0
    %3954 = vmatpush1.xpose.msra.mxu0 0.0
    %3955 = vmatprep.subr.mxu0 0.0
    %3956 = vmatpush1.xpose.msra.mxu0 0.0
    %3957 = vmatprep.subr.mxu0 0.0
    %3958 = vmatpush1.xpose.msra.mxu0 0.0
    %3959 = vmatprep.subr.mxu0 0.0
    %3960 = vmatpush1.xpose.msra.mxu0 0.0
    %3961 = vmatprep.subr.mxu0 0.0
    %3962 = vmatpush1.xpose.msra.mxu0 0.0
    %3963 = vmatprep.mubr.f32.mxu0 0.0
    %3964 = vmatmul.mubr.f32.gmra.mrb[0].mxu0 %v3898
    %v3965 = vpop.f32.mrb[0].mxu0
    %v3966 = vadd.f32 0.0, %v3965
    %v3967 = vpop.f32.mrb[0].mxu0
    %3968 = vdwg.mxu0
    %v3969 = vld [vmem:[#allocation11] sm:$0xff]
    %v3970 = vld [vmem:[#allocation11 + $0x8] sm:$0xff]
    %v3971 = vld [vmem:[#allocation11 + $0x10] sm:$0xff]
    %v3972 = vld [vmem:[#allocation11 + $0x18] sm:$0xff]
    %v3973 = vld [vmem:[#allocation11 + $0x20] sm:$0xff]
    %v3974 = vld [vmem:[#allocation11 + $0x28] sm:$0xff]
    %v3975 = vld [vmem:[#allocation11 + $0x30] sm:$0xff]
    %v3976 = vld [vmem:[#allocation11 + $0x38] sm:$0xff]
    %v3977 = vld [vmem:[%s12] sm:$0x1]
    %v3979 = vlaneseq
    %v3980 = vshrl.u32 %v3979, 7
    %v3981 = vsub.s32 0, %v3980
    %v3982 = vrot.slane %v3977, %v3981
    %v3985 = vsel %vm260, %v3966, 0
    %3987 = vmatprep.subr.mxu0 0.0
    %3988 = vmatpush1.msra.mxu0 %v3969
    %3989 = vmatprep.subr.mxu0 0.0
    %3990 = vmatpush1.msra.mxu0 %v3970
    %3991 = vmatprep.subr.mxu0 0.0
    %3992 = vmatpush1.msra.mxu0 %v3971
    %3993 = vmatprep.subr.mxu0 0.0
    %3994 = vmatpush1.msra.mxu0 %v3972
    %3995 = vmatprep.subr.mxu0 0.0
    %3996 = vmatpush1.msra.mxu0 %v3973
    %3997 = vmatprep.subr.mxu0 0.0
    %3998 = vmatpush1.msra.mxu0 %v3974
    %3999 = vmatprep.subr.mxu0 0.0
    %4000 = vmatpush1.msra.mxu0 %v3975
    %4001 = vmatprep.subr.mxu0 0.0
    %4002 = vmatpush1.msra.mxu0 %v3976
    %4003 = vmatprep.subr.mxu0 0.0
    %4004 = vmatpush1.msra.mxu0 0.0
    %4005 = vmatprep.subr.mxu0 0.0
    %4006 = vmatpush1.msra.mxu0 0.0
    %4007 = vmatprep.subr.mxu0 0.0
    %4008 = vmatpush1.msra.mxu0 0.0
    %4009 = vmatprep.subr.mxu0 0.0
    %4010 = vmatpush1.msra.mxu0 0.0
    %4011 = vmatprep.subr.mxu0 0.0
    %4012 = vmatpush1.msra.mxu0 0.0
    %4013 = vmatprep.subr.mxu0 0.0
    %4014 = vmatpush1.msra.mxu0 0.0
    %4015 = vmatprep.subr.mxu0 0.0
    %4016 = vmatpush1.msra.mxu0 0.0
    %4017 = vmatprep.subr.mxu0 0.0
    %4018 = vmatpush1.msra.mxu0 0.0
    %4019 = vmatprep.subr.mxu0 0.0
    %4020 = vmatpush1.msra.mxu0 0.0
    %4021 = vmatprep.subr.mxu0 0.0
    %4022 = vmatpush1.msra.mxu0 0.0
    %4023 = vmatprep.subr.mxu0 0.0
    %4024 = vmatpush1.msra.mxu0 0.0
    %4025 = vmatprep.subr.mxu0 0.0
    %4026 = vmatpush1.msra.mxu0 0.0
    %4027 = vmatprep.subr.mxu0 0.0
    %4028 = vmatpush1.msra.mxu0 0.0
    %4029 = vmatprep.subr.mxu0 0.0
    %4030 = vmatpush1.msra.mxu0 0.0
    %4031 = vmatprep.subr.mxu0 0.0
    %4032 = vmatpush1.msra.mxu0 0.0
    %4033 = vmatprep.subr.mxu0 0.0
    %4034 = vmatpush1.msra.mxu0 0.0
    %4035 = vmatprep.subr.mxu0 0.0
    %4036 = vmatpush1.msra.mxu0 0.0
    %4037 = vmatprep.subr.mxu0 0.0
    %4038 = vmatpush1.msra.mxu0 0.0
    %4039 = vmatprep.subr.mxu0 0.0
    %4040 = vmatpush1.msra.mxu0 0.0
    %4041 = vmatprep.subr.mxu0 0.0
    %4042 = vmatpush1.msra.mxu0 0.0
    %4043 = vmatprep.subr.mxu0 0.0
    %4044 = vmatpush1.msra.mxu0 0.0
    %4045 = vmatprep.subr.mxu0 0.0
    %4046 = vmatpush1.msra.mxu0 0.0
    %4047 = vmatprep.subr.mxu0 0.0
    %4048 = vmatpush1.msra.mxu0 0.0
    %4049 = vmatprep.subr.mxu0 0.0
    %4050 = vmatpush1.msra.mxu0 0.0
    %4051 = vmatprep.mubr.f32.mxu0 0.0
    %4052 = vmatmul.mubr.f32.gmra.mrb[0].mxu0 %v3985
    %v4053 = vpop.f32.mrb[0].mxu0
    %v4054 = vadd.f32 %v3982, %v4053
    %v4055 = vpop.f32.mrb[0].mxu0
    %4056 = vdwg.mxu0
    %4057 = vst [vmem:[#allocation13] sm:$0x3] %v4054
    // Predicated region
    $region78: #{tpu_custom_call.1} parent=1 // pred_check
      _
    $region79: #{tpu_custom_call.1} parent=1 // pred_check_branch
      %4059 = sbr.rel (0) target = $region81
    $region80: #{tpu_custom_call.1} parent=1 // pred_region
      %s4061 = ssub.s32 32, 32
      %4062 = vsyncadd [#allocation4], %s4061
      %s4064 = sshll.u32 [#allocation13], 4
      %s4065 = int_to_ptr.vmem [resolvable:$true] %s4064
      %4067 = dma.vmem_to_hbm [thread:$0]  %s4065, 32, %s13, [#allocation4]
    $region81: #{tpu_custom_call.1} parent=1 // pred_fallthru
      _
    // Predicated region
    $region82: #{tpu_custom_call.1} parent=1 // pred_check
      _
    $region83: #{tpu_custom_call.1} parent=1 // pred_check_branch
      %4069 = sbr.rel (0) target = $region85
    $region84: #{tpu_custom_call.1} parent=1 // pred_region
      %4070 = dma.done [#allocation4], 32
    $region85: #{tpu_custom_call.1} parent=1 // pred_fallthru
      _
    %4071 = vsyncpa [#allocation3], 1
    %4072 = vsyncpa [#allocation6], 1
    %4073 = vsyncpa [#allocation9], 1
    %4074 = vsyncpa [#allocation12], 1
    %4075 = vsyncpa [#allocation4], 1

</llo_original>
